<compile_context>
chip_gen: v6e
topology: v6e:2x2x1
jax: 0.10.0
libtpu: 0.0.40
codegen_flags: <defaults>
</compile_context>

<pallas_src>
import math
import numpy as np
import jax
import jax.numpy as jnp
from jax import lax
from jax.experimental import pallas as pl
from jax.experimental.pallas import tpu as pltpu

# ---------------- configuration (small shapes consistent with the module) ----------------
BATCH       = 2
SPECTRAL    = 8      # data.spectral_size
PATCH       = 5      # data.patch_size  -> seq length T = 25
NUM_CLASSES = 10     # data.num_classes
CONV_OUT    = 64     # hard-coded conv2d_out in SQSFormer
DIM         = 64     # net.dim (must equal conv2d_out for the pos-embedding add)
N_EMBD      = 128    # net.n_embd (tiny-attn qkv input dim = n_embd // 2 = 64 = DIM)
D_ATTN      = 64     # net.rwkv_tiny_attn
N_HEAD      = 2      # net.rwkv_tiny_head
HEAD_SIZE   = D_ATTN // N_HEAD
DEPTH       = 3      # net.depth
KERNEL      = 3      # net.kernal
PADDING     = 1      # net.padding
T           = PATCH * PATCH          # 25
TPAD        = 32                     # T padded to a multiple of 8 sublanes
CENTER      = T // 2                 # 12
KDIM        = SPECTRAL * KERNEL * KERNEL   # 72
KPAD        = 128                    # im2col feature dim padded to a full lane tile
LINEAR_DIM  = DIM * 3
BN_EPS      = 1e-5

F32 = jnp.float32


# ---------------------------------- fused Pallas kernel ----------------------------------
def _sqsformer_fused_kernel(
        patches_ref, convw_ref, convshift_ref, pos_ref,
        wqkv_ref, bqkv_ref, wout_ref, bout_ref, wadj_ref, badj_ref,
        cw_ref,
        w1_ref, b1_ref, bns_ref, bnb_ref, w2_ref, b2_ref,
        o_ref):
    # ---- conv2d (im2col matmul) + BatchNorm2d(eval) + ReLU + scaled relative pos emb ----
    x = jnp.dot(patches_ref[...], convw_ref[...], preferred_element_type=jnp.float32)
    x = jnp.maximum(x + convshift_ref[...], 0.0) + pos_ref[...]        # (B*TPAD, DIM)
    # Dropout(0.1) on x_pixel is eval-identity.

    # Additive bias that kills the padded key columns T..TPAD-1 in every softmax.
    col = lax.broadcasted_iota(jnp.int32, (1, TPAD), 1)
    key_bias = jnp.where(col >= T, jnp.float32(-1e30), jnp.float32(0.0))   # (1, TPAD)

    # Load shared weights once; they stay resident across the unrolled depth loop.
    wqkv = wqkv_ref[...]; bqkv = bqkv_ref[...]
    wout = wout_ref[...]; bout = bout_ref[...]
    wadj = wadj_ref[...]; badj = badj_ref[...]
    cw = cw_ref[...]                                                    # (DEPTH, DIM)

    logit = jnp.zeros((BATCH, DIM), jnp.float32)

    for d in range(DEPTH):                       # static unroll (DEPTH = 3)
        # Collect the pre-attention center token of every batch element.
        centers = jnp.concatenate(
            [x[b * TPAD + CENTER: b * TPAD + CENTER + 1, :] for b in range(BATCH)],
            axis=0)                                                     # (BATCH, DIM)
        logit = logit + cw[d:d + 1, :] * centers

        # ---- RWKV_TinyAttn (shared weights across depth, as in the module) ----
        # qkv projection batch-folded over all B*TPAD rows; softmax scale is folded
        # into the q columns of wqkv at init time.
        qkv = jnp.dot(x, wqkv, preferred_element_type=jnp.float32) + bqkv   # (B*TPAD, 192)

        hv_rows = []
        for b in range(BATCH):                   # Q@K^T / softmax / P@V stay per batch
            rows = slice(b * TPAD, (b + 1) * TPAD)
            q = qkv[rows, 0:D_ATTN]
            k = qkv[rows, D_ATTN:2 * D_ATTN]
            v = qkv[rows, 2 * D_ATTN:3 * D_ATTN]
            heads = []
            for h in range(N_HEAD):              # NOTE: HEAD_SIZE=32 < 128 lanes, so
                sl = slice(h * HEAD_SIZE, (h + 1) * HEAD_SIZE)   # offset-32 slices are unavoidable
                s = lax.dot_general(q[:, sl], k[:, sl], (((1,), (1,)), ((), ())),
                                    preferred_element_type=jnp.float32)     # (TPAD, TPAD)
                # real mask is torch.ones_like(...) -> no-op; only mask the padding keys
                s = s + key_bias
                e = jnp.exp(s - jnp.max(s, axis=-1, keepdims=True))
                pattn = e * pl.reciprocal(jnp.sum(e, axis=-1, keepdims=True), approx=True)
                heads.append(jnp.dot(pattn, v[:, sl], preferred_element_type=jnp.float32))
            hv_rows.append(jnp.concatenate(heads, axis=-1))             # (TPAD, D_ATTN)
        hv = jnp.concatenate(hv_rows, axis=0)                           # (B*TPAD, D_ATTN)

        out = jnp.dot(hv, wout, preferred_element_type=jnp.float32) + bout   # self.out
        x = jnp.dot(out, wadj, preferred_element_type=jnp.float32) + badj    # self.adjust_dim

    # ---- classifier_mlp: Linear -> BatchNorm1d(eval) -> Dropout(id) -> ReLU -> Linear ----
    h1 = jnp.dot(logit, w1_ref[...], preferred_element_type=jnp.float32) + b1_ref[...]
    h1 = jnp.maximum(h1 * bns_ref[...] + bnb_ref[...], 0.0)
    o_ref[...] = jnp.dot(h1, w2_ref[...], preferred_element_type=jnp.float32) + b2_ref[...]


# ---------------------------------- parameters ----------------------------------
def _linear(key, fan_in, fan_out):
    bound = 1.0 / math.sqrt(fan_in)
    kw, kb = jax.random.split(key)
    w = jax.random.uniform(kw, (fan_in, fan_out), F32, -bound, bound)
    b = jax.random.uniform(kb, (1, fan_out), F32, -bound, bound)
    return w, b


def init_params(key):
    ks = jax.random.split(key, 8)
    p = {}

    # conv2d_features: Conv2d(SPECTRAL->64, 3x3, pad=1) + BatchNorm2d(64) (eval running stats)
    bound = 1.0 / math.sqrt(KDIM)
    conv_w = jax.random.uniform(ks[0], (CONV_OUT, SPECTRAL, KERNEL, KERNEL), F32, -bound, bound)
    conv_b = jax.random.uniform(ks[1], (CONV_OUT,), F32, -bound, bound)
    bn_gamma, bn_beta = jnp.ones((CONV_OUT,), F32), jnp.zeros((CONV_OUT,), F32)
    bn_mean, bn_var = jnp.zeros((CONV_OUT,), F32), jnp.ones((CONV_OUT,), F32)
    bn_scale = bn_gamma / jnp.sqrt(bn_var + BN_EPS)
    w2 = conv_w.reshape(CONV_OUT, KDIM).T * bn_scale[None, :]            # (KDIM, 64)
    p["conv_w2"] = jnp.pad(w2, ((0, KPAD - KDIM), (0, 0)))               # zero-pad K -> 128
    p["conv_shift"] = ((conv_b - bn_mean) * bn_scale + bn_beta)[None, :]  # (1, 64)

    # positional embedding table + scale, center weights (per-depth scalar, broadcast to DIM)
    p["pos_table"] = jax.random.normal(ks[2], (T, DIM), F32)             # pixel_pos_embedding_relative
    p["pos_scale"] = jnp.ones((1,), F32) * 0.01                          # pixel_pos_scale
    p["center_weight"] = jnp.full((DEPTH, DIM), 0.01, F32)               # center_weight (depth,1,1) broadcast

    # RWKV_TinyAttn (shared across the `depth` loop iterations, as in the module).
    # Fold the 1/sqrt(head_size) softmax scale into the q columns (weights AND bias).
    wqkv, bqkv = _linear(ks[3], N_EMBD // 2, 3 * D_ATTN)
    scale = 1.0 / math.sqrt(HEAD_SIZE)
    p["wqkv"] = wqkv.at[:, :D_ATTN].multiply(scale)
    p["bqkv"] = bqkv.at[:, :D_ATTN].multiply(scale)
    p["wout"], p["bout"] = _linear(ks[4], D_ATTN, N_EMBD)
    p["wadj"], p["badj"] = _linear(ks[5], N_EMBD, DIM)

    # classifier_mlp (BatchNorm1d eval running stats: mean 0, var 1)
    p["cls_w1"], p["cls_b1"] = _linear(ks[6], DIM, LINEAR_DIM)
    p["cls_bns"] = (jnp.ones((LINEAR_DIM,), F32) / jnp.sqrt(jnp.ones((LINEAR_DIM,), F32) + BN_EPS))[None, :]
    p["cls_bnb"] = jnp.zeros((1, LINEAR_DIM), F32)
    p["cls_w2"], p["cls_b2"] = _linear(ks[7], LINEAR_DIM, NUM_CLASSES)
    return p


# ---------------------------------- forward (glue + fused kernel) ----------------------------------
def _position_index():
    # Faithfully reproduces get_position_embedding with center_index = (h // 1, w // 1),
    # i.e. the "center" is literally (H, W) = (PATCH, PATCH) as in the PyTorch code.
    # TODO(synk): this replicates the upstream code verbatim (not the geometric center (2,2)).
    center_h, center_w = PATCH, PATCH
    idx = np.empty((PATCH, PATCH), np.int32)
    for i in range(PATCH):
        for j in range(PATCH):
            idx[i, j] = max(abs(i - center_h), abs(j - center_w))
    return jnp.asarray(idx.reshape(-1))


def sqsformer_forward(x, params):
    # x: (B, SPECTRAL, H, W)  -- PyTorch NCHW convention
    b, s, hh, ww = x.shape
    assert b == BATCH and s == SPECTRAL and hh == PATCH and ww == PATCH
    t = hh * ww

    # im2col glue (tiny one-time XLA ops); feature order (s, ki, kj) matches
    # torch weight.reshape(out, s*k*k); spatial flatten matches 'b s w h -> b (w h) s'.
    xp = jnp.pad(x, ((0, 0), (0, 0), (PADDING, PADDING), (PADDING, PADDING)))
    cols = [xp[:, :, ki:ki + hh, kj:kj + ww] for ki in range(KERNEL) for kj in range(KERNEL)]
    patches = jnp.stack(cols, axis=2)                                    # (b, S, K*K, H, W)
    patches = patches.transpose(0, 3, 4, 1, 2).reshape(b, t, KDIM)
    # zero-pad rows T -> TPAD and features KDIM -> KPAD, fold batch into the M dimension
    patches = jnp.pad(patches, ((0, 0), (0, TPAD - t), (0, KPAD - KDIM)))
    patches = patches.reshape(b * TPAD, KPAD)

    pos_scaled = params["pos_table"][_position_index()] * params["pos_scale"][0]   # (T, DIM)
    pos_scaled = jnp.pad(pos_scaled, ((0, TPAD - t), (0, 0)))
    pos_bt = jnp.tile(pos_scaled, (b, 1))                                # (b*TPAD, DIM)

    n_rows = b * TPAD
    return pl.pallas_call(
        _sqsformer_fused_kernel,
        out_shape=jax.ShapeDtypeStruct((b, NUM_CLASSES), F32),
        grid=(1,),
        in_specs=[
            pl.BlockSpec((n_rows, KPAD), lambda i: (0, 0)),              # patches
            pl.BlockSpec((KPAD, CONV_OUT), lambda i: (0, 0)),            # conv weight (BN folded)
            pl.BlockSpec((1, CONV_OUT), lambda i: (0, 0)),               # conv bias + BN shift
            pl.BlockSpec((n_rows, DIM), lambda i: (0, 0)),               # scaled pos embedding
            pl.BlockSpec((DIM, 3 * D_ATTN), lambda i: (0, 0)),           # wqkv (scale folded in q)
            pl.BlockSpec((1, 3 * D_ATTN), lambda i: (0, 0)),             # bqkv
            pl.BlockSpec((D_ATTN, N_EMBD), lambda i: (0, 0)),            # wout
            pl.BlockSpec((1, N_EMBD), lambda i: (0, 0)),                 # bout
            pl.BlockSpec((N_EMBD, DIM), lambda i: (0, 0)),               # wadj
            pl.BlockSpec((1, DIM), lambda i: (0, 0)),                    # badj
            pl.BlockSpec((DEPTH, DIM), lambda i: (0, 0)),                # center_weight (broadcast)
            pl.BlockSpec((DIM, LINEAR_DIM), lambda i: (0, 0)),           # cls_w1
            pl.BlockSpec((1, LINEAR_DIM), lambda i: (0, 0)),             # cls_b1
            pl.BlockSpec((1, LINEAR_DIM), lambda i: (0, 0)),             # cls_bns
            pl.BlockSpec((1, LINEAR_DIM), lambda i: (0, 0)),             # cls_bnb
            pl.BlockSpec((LINEAR_DIM, NUM_CLASSES), lambda i: (0, 0)),   # cls_w2
            pl.BlockSpec((1, NUM_CLASSES), lambda i: (0, 0)),            # cls_b2
        ],
        out_specs=pl.BlockSpec((b, NUM_CLASSES), lambda i: (0, 0)),
    )(patches, params["conv_w2"], params["conv_shift"], pos_bt,
      params["wqkv"], params["bqkv"], params["wout"], params["bout"],
      params["wadj"], params["badj"], params["center_weight"],
      params["cls_w1"], params["cls_b1"], params["cls_bns"], params["cls_bnb"],
      params["cls_w2"], params["cls_b2"])


# ---------------------------------- main ----------------------------------
if __name__ == "__main__":
    key = jax.random.PRNGKey(0)
    k_in, k_par = jax.random.split(key)
    x = jax.random.normal(k_in, (BATCH, SPECTRAL, PATCH, PATCH), F32)
    params = init_params(k_par)

    fwd = jax.jit(sqsformer_forward)
    out = fwd(x, params)
    jax.block_until_ready(out)
    assert out.shape == (BATCH, NUM_CLASSES) and out.dtype == jnp.float32
    print("KERNEL_OK")
</pallas_src>

<mosaic_0001>
module attributes {stable_mosaic.version = 11 : i64} {
  func.func @_sqsformer_fused_kernel(%arg0: i32, %arg1: memref<64x128xf32, #tpu.memory_space<vmem>>, %arg2: memref<128x64xf32, #tpu.memory_space<vmem>>, %arg3: memref<1x64xf32, #tpu.memory_space<vmem>>, %arg4: memref<64x64xf32, #tpu.memory_space<vmem>>, %arg5: memref<64x192xf32, #tpu.memory_space<vmem>>, %arg6: memref<1x192xf32, #tpu.memory_space<vmem>>, %arg7: memref<64x128xf32, #tpu.memory_space<vmem>>, %arg8: memref<1x128xf32, #tpu.memory_space<vmem>>, %arg9: memref<128x64xf32, #tpu.memory_space<vmem>>, %arg10: memref<1x64xf32, #tpu.memory_space<vmem>>, %arg11: memref<3x64xf32, #tpu.memory_space<vmem>>, %arg12: memref<64x192xf32, #tpu.memory_space<vmem>>, %arg13: memref<1x192xf32, #tpu.memory_space<vmem>>, %arg14: memref<1x192xf32, #tpu.memory_space<vmem>>, %arg15: memref<1x192xf32, #tpu.memory_space<vmem>>, %arg16: memref<192x10xf32, #tpu.memory_space<vmem>>, %arg17: memref<1x10xf32, #tpu.memory_space<vmem>>, %arg18: memref<2x10xf32, #tpu.memory_space<vmem>>) attributes {dimension_semantics = [#tpu.dimension_semantics<arbitrary>], iteration_bounds = array<i64: 1>, scalar_prefetch = 0 : i64, scratch_operands = 0 : i64, tpu.core_type = #tpu.core_type<tc>, window_params = [{pipeline_mode = #tpu.pipeline_mode<synchronous>, transform_indices = @transform_0, window_bounds = array<i64: 64, 128>}, {pipeline_mode = #tpu.pipeline_mode<synchronous>, transform_indices = @transform_1, window_bounds = array<i64: 128, 64>}, {pipeline_mode = #tpu.pipeline_mode<synchronous>, transform_indices = @transform_2, window_bounds = array<i64: 1, 64>}, {pipeline_mode = #tpu.pipeline_mode<synchronous>, transform_indices = @transform_3, window_bounds = array<i64: 64, 64>}, {pipeline_mode = #tpu.pipeline_mode<synchronous>, transform_indices = @transform_4, window_bounds = array<i64: 64, 192>}, {pipeline_mode = #tpu.pipeline_mode<synchronous>, transform_indices = @transform_5, window_bounds = array<i64: 1, 192>}, {pipeline_mode = #tpu.pipeline_mode<synchronous>, transform_indices = @transform_6, window_bounds = array<i64: 64, 128>}, {pipeline_mode = #tpu.pipeline_mode<synchronous>, transform_indices = @transform_7, window_bounds = array<i64: 1, 128>}, {pipeline_mode = #tpu.pipeline_mode<synchronous>, transform_indices = @transform_8, window_bounds = array<i64: 128, 64>}, {pipeline_mode = #tpu.pipeline_mode<synchronous>, transform_indices = @transform_9, window_bounds = array<i64: 1, 64>}, {pipeline_mode = #tpu.pipeline_mode<synchronous>, transform_indices = @transform_10, window_bounds = array<i64: 3, 64>}, {pipeline_mode = #tpu.pipeline_mode<synchronous>, transform_indices = @transform_11, window_bounds = array<i64: 64, 192>}, {pipeline_mode = #tpu.pipeline_mode<synchronous>, transform_indices = @transform_12, window_bounds = array<i64: 1, 192>}, {pipeline_mode = #tpu.pipeline_mode<synchronous>, transform_indices = @transform_13, window_bounds = array<i64: 1, 192>}, {pipeline_mode = #tpu.pipeline_mode<synchronous>, transform_indices = @transform_14, window_bounds = array<i64: 1, 192>}, {pipeline_mode = #tpu.pipeline_mode<synchronous>, transform_indices = @transform_15, window_bounds = array<i64: 192, 10>}, {pipeline_mode = #tpu.pipeline_mode<synchronous>, transform_indices = @transform_16, window_bounds = array<i64: 1, 10>}, {pipeline_mode = #tpu.pipeline_mode<synchronous>, transform_indices = @transform_17, window_bounds = array<i64: 2, 10>}]} {
    %c0 = arith.constant 0 : index
    %c0_0 = arith.constant 0 : index
    %0 = vector.load %arg1[%c0, %c0_0] : memref<64x128xf32, #tpu.memory_space<vmem>>, vector<64x128xf32>
    %c0_1 = arith.constant 0 : index
    %c0_2 = arith.constant 0 : index
    %1 = vector.load %arg2[%c0_1, %c0_2] : memref<128x64xf32, #tpu.memory_space<vmem>>, vector<128x64xf32>
    %cst = arith.constant dense<0.000000e+00> : vector<64x64xf32>
    %2 = tpu.matmul %0, %1, %cst {dimension_numbers = #tpu.dot_dimension_numbers<[1], [0], [0], [1], [0, 0, 1, 1], [], []>} : vector<64x128xf32>, vector<128x64xf32>, vector<64x64xf32> -> vector<64x64xf32>
    %c0_3 = arith.constant 0 : index
    %c0_4 = arith.constant 0 : index
    %3 = vector.load %arg3[%c0_3, %c0_4] : memref<1x64xf32, #tpu.memory_space<vmem>>, vector<1x64xf32>
    %4 = vector.broadcast %3 : vector<1x64xf32> to vector<64x64xf32>
    %5 = arith.addf %2, %4 : vector<64x64xf32>
    %cst_5 = arith.constant 0.000000e+00 : f32
    %6 = vector.broadcast %cst_5 : f32 to vector<64x64xf32>
    %7 = arith.maximumf %5, %6 : vector<64x64xf32>
    %c0_6 = arith.constant 0 : index
    %c0_7 = arith.constant 0 : index
    %8 = vector.load %arg4[%c0_6, %c0_7] : memref<64x64xf32, #tpu.memory_space<vmem>>, vector<64x64xf32>
    %9 = arith.addf %7, %8 : vector<64x64xf32>
    %10 = tpu.iota {dimensions = array<i32: 1>} : vector<1x32xi32>
    %c25_i32 = arith.constant 25 : i32
    %11 = vector.broadcast %c25_i32 : i32 to vector<1x32xi32>
    %12 = arith.cmpi sge, %10, %11 : vector<1x32xi32>
    %cst_8 = arith.constant -1.000000e+30 : f32
    %cst_9 = arith.constant 0.000000e+00 : f32
    %13 = vector.broadcast %cst_8 : f32 to vector<1x32xf32>
    %14 = vector.broadcast %cst_9 : f32 to vector<1x32xf32>
    %15 = arith.select %12, %13, %14 : vector<1x32xi1>, vector<1x32xf32>
    %c0_10 = arith.constant 0 : index
    %c0_11 = arith.constant 0 : index
    %16 = vector.load %arg5[%c0_10, %c0_11] : memref<64x192xf32, #tpu.memory_space<vmem>>, vector<64x192xf32>
    %c0_12 = arith.constant 0 : index
    %c0_13 = arith.constant 0 : index
    %17 = vector.load %arg6[%c0_12, %c0_13] : memref<1x192xf32, #tpu.memory_space<vmem>>, vector<1x192xf32>
    %c0_14 = arith.constant 0 : index
    %c0_15 = arith.constant 0 : index
    %18 = vector.load %arg7[%c0_14, %c0_15] : memref<64x128xf32, #tpu.memory_space<vmem>>, vector<64x128xf32>
    %c0_16 = arith.constant 0 : index
    %c0_17 = arith.constant 0 : index
    %19 = vector.load %arg8[%c0_16, %c0_17] : memref<1x128xf32, #tpu.memory_space<vmem>>, vector<1x128xf32>
    %c0_18 = arith.constant 0 : index
    %c0_19 = arith.constant 0 : index
    %20 = vector.load %arg9[%c0_18, %c0_19] : memref<128x64xf32, #tpu.memory_space<vmem>>, vector<128x64xf32>
    %c0_20 = arith.constant 0 : index
    %c0_21 = arith.constant 0 : index
    %21 = vector.load %arg10[%c0_20, %c0_21] : memref<1x64xf32, #tpu.memory_space<vmem>>, vector<1x64xf32>
    %c0_22 = arith.constant 0 : index
    %c0_23 = arith.constant 0 : index
    %22 = vector.load %arg11[%c0_22, %c0_23] : memref<3x64xf32, #tpu.memory_space<vmem>>, vector<3x64xf32>
    %cst_24 = arith.constant 0.000000e+00 : f32
    %23 = vector.broadcast %cst_24 : f32 to vector<2x64xf32>
    %24 = vector.extract_strided_slice %9 {offsets = [12, 0], sizes = [1, 64], strides = [1, 1]} : vector<64x64xf32> to vector<1x64xf32>
    %25 = vector.extract_strided_slice %9 {offsets = [44, 0], sizes = [1, 64], strides = [1, 1]} : vector<64x64xf32> to vector<1x64xf32>
    %26 = tpu.concatenate %24, %25 in 0 : vector<1x64xf32>, vector<1x64xf32> -> vector<2x64xf32>
    %27 = vector.extract_strided_slice %22 {offsets = [0, 0], sizes = [1, 64], strides = [1, 1]} : vector<3x64xf32> to vector<1x64xf32>
    %28 = vector.broadcast %27 : vector<1x64xf32> to vector<2x64xf32>
    %29 = arith.mulf %28, %26 : vector<2x64xf32>
    %30 = arith.addf %23, %29 : vector<2x64xf32>
    %cst_25 = arith.constant dense<0.000000e+00> : vector<64x192xf32>
    %31 = tpu.matmul %9, %16, %cst_25 {dimension_numbers = #tpu.dot_dimension_numbers<[1], [0], [0], [1], [0, 0, 1, 1], [], []>} : vector<64x64xf32>, vector<64x192xf32>, vector<64x192xf32> -> vector<64x192xf32>
    %32 = vector.broadcast %17 : vector<1x192xf32> to vector<64x192xf32>
    %33 = arith.addf %31, %32 : vector<64x192xf32>
    %34 = vector.extract_strided_slice %33 {offsets = [0, 0], sizes = [32, 64], strides = [1, 1]} : vector<64x192xf32> to vector<32x64xf32>
    %35 = vector.extract_strided_slice %33 {offsets = [0, 64], sizes = [32, 64], strides = [1, 1]} : vector<64x192xf32> to vector<32x64xf32>
    %36 = vector.extract_strided_slice %33 {offsets = [0, 128], sizes = [32, 64], strides = [1, 1]} : vector<64x192xf32> to vector<32x64xf32>
    %37 = vector.extract_strided_slice %34 {offsets = [0, 0], sizes = [32, 32], strides = [1, 1]} : vector<32x64xf32> to vector<32x32xf32>
    %38 = vector.extract_strided_slice %35 {offsets = [0, 0], sizes = [32, 32], strides = [1, 1]} : vector<32x64xf32> to vector<32x32xf32>
    %cst_26 = arith.constant dense<0.000000e+00> : vector<32x32xf32>
    %39 = tpu.matmul %37, %38, %cst_26 {dimension_numbers = #tpu.dot_dimension_numbers<[1], [1], [0], [0], [0, 0, 1, 0], [], []>} : vector<32x32xf32>, vector<32x32xf32>, vector<32x32xf32> -> vector<32x32xf32>
    %40 = vector.broadcast %15 : vector<1x32xf32> to vector<32x32xf32>
    %41 = arith.addf %39, %40 : vector<32x32xf32>
    %cst_27 = arith.constant dense<0xFF800000> : vector<32xf32>
    %42 = vector.multi_reduction <maximumf>, %41, %cst_27 [1] : vector<32x32xf32> to vector<32xf32>
    %43 = vector.shape_cast %42 : vector<32xf32> to vector<32x1xf32>
    %44 = vector.broadcast %43 : vector<32x1xf32> to vector<32x32xf32>
    %45 = arith.subf %41, %44 : vector<32x32xf32>
    %46 = math.exp %45 : vector<32x32xf32>
    %cst_28 = arith.constant dense<0.000000e+00> : vector<32xf32>
    %47 = vector.multi_reduction <add>, %46, %cst_28 [1] : vector<32x32xf32> to vector<32xf32>
    %48 = vector.shape_cast %47 : vector<32xf32> to vector<32x1xf32>
    %49 = tpu.reciprocal %48 {approx = true} : vector<32x1xf32> -> vector<32x1xf32>
    %50 = vector.broadcast %49 : vector<32x1xf32> to vector<32x32xf32>
    %51 = arith.mulf %46, %50 : vector<32x32xf32>
    %52 = vector.extract_strided_slice %36 {offsets = [0, 0], sizes = [32, 32], strides = [1, 1]} : vector<32x64xf32> to vector<32x32xf32>
    %cst_29 = arith.constant dense<0.000000e+00> : vector<32x32xf32>
    %53 = tpu.matmul %51, %52, %cst_29 {dimension_numbers = #tpu.dot_dimension_numbers<[1], [0], [0], [1], [0, 0, 1, 1], [], []>} : vector<32x32xf32>, vector<32x32xf32>, vector<32x32xf32> -> vector<32x32xf32>
    %54 = vector.extract_strided_slice %34 {offsets = [0, 32], sizes = [32, 32], strides = [1, 1]} : vector<32x64xf32> to vector<32x32xf32>
    %55 = vector.extract_strided_slice %35 {offsets = [0, 32], sizes = [32, 32], strides = [1, 1]} : vector<32x64xf32> to vector<32x32xf32>
    %cst_30 = arith.constant dense<0.000000e+00> : vector<32x32xf32>
    %56 = tpu.matmul %54, %55, %cst_30 {dimension_numbers = #tpu.dot_dimension_numbers<[1], [1], [0], [0], [0, 0, 1, 0], [], []>} : vector<32x32xf32>, vector<32x32xf32>, vector<32x32xf32> -> vector<32x32xf32>
    %57 = vector.broadcast %15 : vector<1x32xf32> to vector<32x32xf32>
    %58 = arith.addf %56, %57 : vector<32x32xf32>
    %cst_31 = arith.constant dense<0xFF800000> : vector<32xf32>
    %59 = vector.multi_reduction <maximumf>, %58, %cst_31 [1] : vector<32x32xf32> to vector<32xf32>
    %60 = vector.shape_cast %59 : vector<32xf32> to vector<32x1xf32>
    %61 = vector.broadcast %60 : vector<32x1xf32> to vector<32x32xf32>
    %62 = arith.subf %58, %61 : vector<32x32xf32>
    %63 = math.exp %62 : vector<32x32xf32>
    %cst_32 = arith.constant dense<0.000000e+00> : vector<32xf32>
    %64 = vector.multi_reduction <add>, %63, %cst_32 [1] : vector<32x32xf32> to vector<32xf32>
    %65 = vector.shape_cast %64 : vector<32xf32> to vector<32x1xf32>
    %66 = tpu.reciprocal %65 {approx = true} : vector<32x1xf32> -> vector<32x1xf32>
    %67 = vector.broadcast %66 : vector<32x1xf32> to vector<32x32xf32>
    %68 = arith.mulf %63, %67 : vector<32x32xf32>
    %69 = vector.extract_strided_slice %36 {offsets = [0, 32], sizes = [32, 32], strides = [1, 1]} : vector<32x64xf32> to vector<32x32xf32>
    %cst_33 = arith.constant dense<0.000000e+00> : vector<32x32xf32>
    %70 = tpu.matmul %68, %69, %cst_33 {dimension_numbers = #tpu.dot_dimension_numbers<[1], [0], [0], [1], [0, 0, 1, 1], [], []>} : vector<32x32xf32>, vector<32x32xf32>, vector<32x32xf32> -> vector<32x32xf32>
    %71 = tpu.concatenate %53, %70 in 1 : vector<32x32xf32>, vector<32x32xf32> -> vector<32x64xf32>
    %72 = vector.extract_strided_slice %33 {offsets = [32, 0], sizes = [32, 64], strides = [1, 1]} : vector<64x192xf32> to vector<32x64xf32>
    %73 = vector.extract_strided_slice %33 {offsets = [32, 64], sizes = [32, 64], strides = [1, 1]} : vector<64x192xf32> to vector<32x64xf32>
    %74 = vector.extract_strided_slice %33 {offsets = [32, 128], sizes = [32, 64], strides = [1, 1]} : vector<64x192xf32> to vector<32x64xf32>
    %75 = vector.extract_strided_slice %72 {offsets = [0, 0], sizes = [32, 32], strides = [1, 1]} : vector<32x64xf32> to vector<32x32xf32>
    %76 = vector.extract_strided_slice %73 {offsets = [0, 0], sizes = [32, 32], strides = [1, 1]} : vector<32x64xf32> to vector<32x32xf32>
    %cst_34 = arith.constant dense<0.000000e+00> : vector<32x32xf32>
    %77 = tpu.matmul %75, %76, %cst_34 {dimension_numbers = #tpu.dot_dimension_numbers<[1], [1], [0], [0], [0, 0, 1, 0], [], []>} : vector<32x32xf32>, vector<32x32xf32>, vector<32x32xf32> -> vector<32x32xf32>
    %78 = vector.broadcast %15 : vector<1x32xf32> to vector<32x32xf32>
    %79 = arith.addf %77, %78 : vector<32x32xf32>
    %cst_35 = arith.constant dense<0xFF800000> : vector<32xf32>
    %80 = vector.multi_reduction <maximumf>, %79, %cst_35 [1] : vector<32x32xf32> to vector<32xf32>
    %81 = vector.shape_cast %80 : vector<32xf32> to vector<32x1xf32>
    %82 = vector.broadcast %81 : vector<32x1xf32> to vector<32x32xf32>
    %83 = arith.subf %79, %82 : vector<32x32xf32>
    %84 = math.exp %83 : vector<32x32xf32>
    %cst_36 = arith.constant dense<0.000000e+00> : vector<32xf32>
    %85 = vector.multi_reduction <add>, %84, %cst_36 [1] : vector<32x32xf32> to vector<32xf32>
    %86 = vector.shape_cast %85 : vector<32xf32> to vector<32x1xf32>
    %87 = tpu.reciprocal %86 {approx = true} : vector<32x1xf32> -> vector<32x1xf32>
    %88 = vector.broadcast %87 : vector<32x1xf32> to vector<32x32xf32>
    %89 = arith.mulf %84, %88 : vector<32x32xf32>
    %90 = vector.extract_strided_slice %74 {offsets = [0, 0], sizes = [32, 32], strides = [1, 1]} : vector<32x64xf32> to vector<32x32xf32>
    %cst_37 = arith.constant dense<0.000000e+00> : vector<32x32xf32>
    %91 = tpu.matmul %89, %90, %cst_37 {dimension_numbers = #tpu.dot_dimension_numbers<[1], [0], [0], [1], [0, 0, 1, 1], [], []>} : vector<32x32xf32>, vector<32x32xf32>, vector<32x32xf32> -> vector<32x32xf32>
    %92 = vector.extract_strided_slice %72 {offsets = [0, 32], sizes = [32, 32], strides = [1, 1]} : vector<32x64xf32> to vector<32x32xf32>
    %93 = vector.extract_strided_slice %73 {offsets = [0, 32], sizes = [32, 32], strides = [1, 1]} : vector<32x64xf32> to vector<32x32xf32>
    %cst_38 = arith.constant dense<0.000000e+00> : vector<32x32xf32>
    %94 = tpu.matmul %92, %93, %cst_38 {dimension_numbers = #tpu.dot_dimension_numbers<[1], [1], [0], [0], [0, 0, 1, 0], [], []>} : vector<32x32xf32>, vector<32x32xf32>, vector<32x32xf32> -> vector<32x32xf32>
    %95 = vector.broadcast %15 : vector<1x32xf32> to vector<32x32xf32>
    %96 = arith.addf %94, %95 : vector<32x32xf32>
    %cst_39 = arith.constant dense<0xFF800000> : vector<32xf32>
    %97 = vector.multi_reduction <maximumf>, %96, %cst_39 [1] : vector<32x32xf32> to vector<32xf32>
    %98 = vector.shape_cast %97 : vector<32xf32> to vector<32x1xf32>
    %99 = vector.broadcast %98 : vector<32x1xf32> to vector<32x32xf32>
    %100 = arith.subf %96, %99 : vector<32x32xf32>
    %101 = math.exp %100 : vector<32x32xf32>
    %cst_40 = arith.constant dense<0.000000e+00> : vector<32xf32>
    %102 = vector.multi_reduction <add>, %101, %cst_40 [1] : vector<32x32xf32> to vector<32xf32>
    %103 = vector.shape_cast %102 : vector<32xf32> to vector<32x1xf32>
    %104 = tpu.reciprocal %103 {approx = true} : vector<32x1xf32> -> vector<32x1xf32>
    %105 = vector.broadcast %104 : vector<32x1xf32> to vector<32x32xf32>
    %106 = arith.mulf %101, %105 : vector<32x32xf32>
    %107 = vector.extract_strided_slice %74 {offsets = [0, 32], sizes = [32, 32], strides = [1, 1]} : vector<32x64xf32> to vector<32x32xf32>
    %cst_41 = arith.constant dense<0.000000e+00> : vector<32x32xf32>
    %108 = tpu.matmul %106, %107, %cst_41 {dimension_numbers = #tpu.dot_dimension_numbers<[1], [0], [0], [1], [0, 0, 1, 1], [], []>} : vector<32x32xf32>, vector<32x32xf32>, vector<32x32xf32> -> vector<32x32xf32>
    %109 = tpu.concatenate %91, %108 in 1 : vector<32x32xf32>, vector<32x32xf32> -> vector<32x64xf32>
    %110 = tpu.concatenate %71, %109 in 0 : vector<32x64xf32>, vector<32x64xf32> -> vector<64x64xf32>
    %cst_42 = arith.constant dense<0.000000e+00> : vector<64x128xf32>
    %111 = tpu.matmul %110, %18, %cst_42 {dimension_numbers = #tpu.dot_dimension_numbers<[1], [0], [0], [1], [0, 0, 1, 1], [], []>} : vector<64x64xf32>, vector<64x128xf32>, vector<64x128xf32> -> vector<64x128xf32>
    %112 = vector.broadcast %19 : vector<1x128xf32> to vector<64x128xf32>
    %113 = arith.addf %111, %112 : vector<64x128xf32>
    %cst_43 = arith.constant dense<0.000000e+00> : vector<64x64xf32>
    %114 = tpu.matmul %113, %20, %cst_43 {dimension_numbers = #tpu.dot_dimension_numbers<[1], [0], [0], [1], [0, 0, 1, 1], [], []>} : vector<64x128xf32>, vector<128x64xf32>, vector<64x64xf32> -> vector<64x64xf32>
    %115 = vector.broadcast %21 : vector<1x64xf32> to vector<64x64xf32>
    %116 = arith.addf %114, %115 : vector<64x64xf32>
    %117 = vector.extract_strided_slice %116 {offsets = [12, 0], sizes = [1, 64], strides = [1, 1]} : vector<64x64xf32> to vector<1x64xf32>
    %118 = vector.extract_strided_slice %116 {offsets = [44, 0], sizes = [1, 64], strides = [1, 1]} : vector<64x64xf32> to vector<1x64xf32>
    %119 = tpu.concatenate %117, %118 in 0 : vector<1x64xf32>, vector<1x64xf32> -> vector<2x64xf32>
    %120 = vector.extract_strided_slice %22 {offsets = [1, 0], sizes = [1, 64], strides = [1, 1]} : vector<3x64xf32> to vector<1x64xf32>
    %121 = vector.broadcast %120 : vector<1x64xf32> to vector<2x64xf32>
    %122 = arith.mulf %121, %119 : vector<2x64xf32>
    %123 = arith.addf %30, %122 : vector<2x64xf32>
    %cst_44 = arith.constant dense<0.000000e+00> : vector<64x192xf32>
    %124 = tpu.matmul %116, %16, %cst_44 {dimension_numbers = #tpu.dot_dimension_numbers<[1], [0], [0], [1], [0, 0, 1, 1], [], []>} : vector<64x64xf32>, vector<64x192xf32>, vector<64x192xf32> -> vector<64x192xf32>
    %125 = vector.broadcast %17 : vector<1x192xf32> to vector<64x192xf32>
    %126 = arith.addf %124, %125 : vector<64x192xf32>
    %127 = vector.extract_strided_slice %126 {offsets = [0, 0], sizes = [32, 64], strides = [1, 1]} : vector<64x192xf32> to vector<32x64xf32>
    %128 = vector.extract_strided_slice %126 {offsets = [0, 64], sizes = [32, 64], strides = [1, 1]} : vector<64x192xf32> to vector<32x64xf32>
    %129 = vector.extract_strided_slice %126 {offsets = [0, 128], sizes = [32, 64], strides = [1, 1]} : vector<64x192xf32> to vector<32x64xf32>
    %130 = vector.extract_strided_slice %127 {offsets = [0, 0], sizes = [32, 32], strides = [1, 1]} : vector<32x64xf32> to vector<32x32xf32>
    %131 = vector.extract_strided_slice %128 {offsets = [0, 0], sizes = [32, 32], strides = [1, 1]} : vector<32x64xf32> to vector<32x32xf32>
    %cst_45 = arith.constant dense<0.000000e+00> : vector<32x32xf32>
    %132 = tpu.matmul %130, %131, %cst_45 {dimension_numbers = #tpu.dot_dimension_numbers<[1], [1], [0], [0], [0, 0, 1, 0], [], []>} : vector<32x32xf32>, vector<32x32xf32>, vector<32x32xf32> -> vector<32x32xf32>
    %133 = vector.broadcast %15 : vector<1x32xf32> to vector<32x32xf32>
    %134 = arith.addf %132, %133 : vector<32x32xf32>
    %cst_46 = arith.constant dense<0xFF800000> : vector<32xf32>
    %135 = vector.multi_reduction <maximumf>, %134, %cst_46 [1] : vector<32x32xf32> to vector<32xf32>
    %136 = vector.shape_cast %135 : vector<32xf32> to vector<32x1xf32>
    %137 = vector.broadcast %136 : vector<32x1xf32> to vector<32x32xf32>
    %138 = arith.subf %134, %137 : vector<32x32xf32>
    %139 = math.exp %138 : vector<32x32xf32>
    %cst_47 = arith.constant dense<0.000000e+00> : vector<32xf32>
    %140 = vector.multi_reduction <add>, %139, %cst_47 [1] : vector<32x32xf32> to vector<32xf32>
    %141 = vector.shape_cast %140 : vector<32xf32> to vector<32x1xf32>
    %142 = tpu.reciprocal %141 {approx = true} : vector<32x1xf32> -> vector<32x1xf32>
    %143 = vector.broadcast %142 : vector<32x1xf32> to vector<32x32xf32>
    %144 = arith.mulf %139, %143 : vector<32x32xf32>
    %145 = vector.extract_strided_slice %129 {offsets = [0, 0], sizes = [32, 32], strides = [1, 1]} : vector<32x64xf32> to vector<32x32xf32>
    %cst_48 = arith.constant dense<0.000000e+00> : vector<32x32xf32>
    %146 = tpu.matmul %144, %145, %cst_48 {dimension_numbers = #tpu.dot_dimension_numbers<[1], [0], [0], [1], [0, 0, 1, 1], [], []>} : vector<32x32xf32>, vector<32x32xf32>, vector<32x32xf32> -> vector<32x32xf32>
    %147 = vector.extract_strided_slice %127 {offsets = [0, 32], sizes = [32, 32], strides = [1, 1]} : vector<32x64xf32> to vector<32x32xf32>
    %148 = vector.extract_strided_slice %128 {offsets = [0, 32], sizes = [32, 32], strides = [1, 1]} : vector<32x64xf32> to vector<32x32xf32>
    %cst_49 = arith.constant dense<0.000000e+00> : vector<32x32xf32>
    %149 = tpu.matmul %147, %148, %cst_49 {dimension_numbers = #tpu.dot_dimension_numbers<[1], [1], [0], [0], [0, 0, 1, 0], [], []>} : vector<32x32xf32>, vector<32x32xf32>, vector<32x32xf32> -> vector<32x32xf32>
    %150 = vector.broadcast %15 : vector<1x32xf32> to vector<32x32xf32>
    %151 = arith.addf %149, %150 : vector<32x32xf32>
    %cst_50 = arith.constant dense<0xFF800000> : vector<32xf32>
    %152 = vector.multi_reduction <maximumf>, %151, %cst_50 [1] : vector<32x32xf32> to vector<32xf32>
    %153 = vector.shape_cast %152 : vector<32xf32> to vector<32x1xf32>
    %154 = vector.broadcast %153 : vector<32x1xf32> to vector<32x32xf32>
    %155 = arith.subf %151, %154 : vector<32x32xf32>
    %156 = math.exp %155 : vector<32x32xf32>
    %cst_51 = arith.constant dense<0.000000e+00> : vector<32xf32>
    %157 = vector.multi_reduction <add>, %156, %cst_51 [1] : vector<32x32xf32> to vector<32xf32>
    %158 = vector.shape_cast %157 : vector<32xf32> to vector<32x1xf32>
    %159 = tpu.reciprocal %158 {approx = true} : vector<32x1xf32> -> vector<32x1xf32>
    %160 = vector.broadcast %159 : vector<32x1xf32> to vector<32x32xf32>
    %161 = arith.mulf %156, %160 : vector<32x32xf32>
    %162 = vector.extract_strided_slice %129 {offsets = [0, 32], sizes = [32, 32], strides = [1, 1]} : vector<32x64xf32> to vector<32x32xf32>
    %cst_52 = arith.constant dense<0.000000e+00> : vector<32x32xf32>
    %163 = tpu.matmul %161, %162, %cst_52 {dimension_numbers = #tpu.dot_dimension_numbers<[1], [0], [0], [1], [0, 0, 1, 1], [], []>} : vector<32x32xf32>, vector<32x32xf32>, vector<32x32xf32> -> vector<32x32xf32>
    %164 = tpu.concatenate %146, %163 in 1 : vector<32x32xf32>, vector<32x32xf32> -> vector<32x64xf32>
    %165 = vector.extract_strided_slice %126 {offsets = [32, 0], sizes = [32, 64], strides = [1, 1]} : vector<64x192xf32> to vector<32x64xf32>
    %166 = vector.extract_strided_slice %126 {offsets = [32, 64], sizes = [32, 64], strides = [1, 1]} : vector<64x192xf32> to vector<32x64xf32>
    %167 = vector.extract_strided_slice %126 {offsets = [32, 128], sizes = [32, 64], strides = [1, 1]} : vector<64x192xf32> to vector<32x64xf32>
    %168 = vector.extract_strided_slice %165 {offsets = [0, 0], sizes = [32, 32], strides = [1, 1]} : vector<32x64xf32> to vector<32x32xf32>
    %169 = vector.extract_strided_slice %166 {offsets = [0, 0], sizes = [32, 32], strides = [1, 1]} : vector<32x64xf32> to vector<32x32xf32>
    %cst_53 = arith.constant dense<0.000000e+00> : vector<32x32xf32>
    %170 = tpu.matmul %168, %169, %cst_53 {dimension_numbers = #tpu.dot_dimension_numbers<[1], [1], [0], [0], [0, 0, 1, 0], [], []>} : vector<32x32xf32>, vector<32x32xf32>, vector<32x32xf32> -> vector<32x32xf32>
    %171 = vector.broadcast %15 : vector<1x32xf32> to vector<32x32xf32>
    %172 = arith.addf %170, %171 : vector<32x32xf32>
    %cst_54 = arith.constant dense<0xFF800000> : vector<32xf32>
    %173 = vector.multi_reduction <maximumf>, %172, %cst_54 [1] : vector<32x32xf32> to vector<32xf32>
    %174 = vector.shape_cast %173 : vector<32xf32> to vector<32x1xf32>
    %175 = vector.broadcast %174 : vector<32x1xf32> to vector<32x32xf32>
    %176 = arith.subf %172, %175 : vector<32x32xf32>
    %177 = math.exp %176 : vector<32x32xf32>
    %cst_55 = arith.constant dense<0.000000e+00> : vector<32xf32>
    %178 = vector.multi_reduction <add>, %177, %cst_55 [1] : vector<32x32xf32> to vector<32xf32>
    %179 = vector.shape_cast %178 : vector<32xf32> to vector<32x1xf32>
    %180 = tpu.reciprocal %179 {approx = true} : vector<32x1xf32> -> vector<32x1xf32>
    %181 = vector.broadcast %180 : vector<32x1xf32> to vector<32x32xf32>
    %182 = arith.mulf %177, %181 : vector<32x32xf32>
    %183 = vector.extract_strided_slice %167 {offsets = [0, 0], sizes = [32, 32], strides = [1, 1]} : vector<32x64xf32> to vector<32x32xf32>
    %cst_56 = arith.constant dense<0.000000e+00> : vector<32x32xf32>
    %184 = tpu.matmul %182, %183, %cst_56 {dimension_numbers = #tpu.dot_dimension_numbers<[1], [0], [0], [1], [0, 0, 1, 1], [], []>} : vector<32x32xf32>, vector<32x32xf32>, vector<32x32xf32> -> vector<32x32xf32>
    %185 = vector.extract_strided_slice %165 {offsets = [0, 32], sizes = [32, 32], strides = [1, 1]} : vector<32x64xf32> to vector<32x32xf32>
    %186 = vector.extract_strided_slice %166 {offsets = [0, 32], sizes = [32, 32], strides = [1, 1]} : vector<32x64xf32> to vector<32x32xf32>
    %cst_57 = arith.constant dense<0.000000e+00> : vector<32x32xf32>
    %187 = tpu.matmul %185, %186, %cst_57 {dimension_numbers = #tpu.dot_dimension_numbers<[1], [1], [0], [0], [0, 0, 1, 0], [], []>} : vector<32x32xf32>, vector<32x32xf32>, vector<32x32xf32> -> vector<32x32xf32>
    %188 = vector.broadcast %15 : vector<1x32xf32> to vector<32x32xf32>
    %189 = arith.addf %187, %188 : vector<32x32xf32>
    %cst_58 = arith.constant dense<0xFF800000> : vector<32xf32>
    %190 = vector.multi_reduction <maximumf>, %189, %cst_58 [1] : vector<32x32xf32> to vector<32xf32>
    %191 = vector.shape_cast %190 : vector<32xf32> to vector<32x1xf32>
    %192 = vector.broadcast %191 : vector<32x1xf32> to vector<32x32xf32>
    %193 = arith.subf %189, %192 : vector<32x32xf32>
    %194 = math.exp %193 : vector<32x32xf32>
    %cst_59 = arith.constant dense<0.000000e+00> : vector<32xf32>
    %195 = vector.multi_reduction <add>, %194, %cst_59 [1] : vector<32x32xf32> to vector<32xf32>
    %196 = vector.shape_cast %195 : vector<32xf32> to vector<32x1xf32>
    %197 = tpu.reciprocal %196 {approx = true} : vector<32x1xf32> -> vector<32x1xf32>
    %198 = vector.broadcast %197 : vector<32x1xf32> to vector<32x32xf32>
    %199 = arith.mulf %194, %198 : vector<32x32xf32>
    %200 = vector.extract_strided_slice %167 {offsets = [0, 32], sizes = [32, 32], strides = [1, 1]} : vector<32x64xf32> to vector<32x32xf32>
    %cst_60 = arith.constant dense<0.000000e+00> : vector<32x32xf32>
    %201 = tpu.matmul %199, %200, %cst_60 {dimension_numbers = #tpu.dot_dimension_numbers<[1], [0], [0], [1], [0, 0, 1, 1], [], []>} : vector<32x32xf32>, vector<32x32xf32>, vector<32x32xf32> -> vector<32x32xf32>
    %202 = tpu.concatenate %184, %201 in 1 : vector<32x32xf32>, vector<32x32xf32> -> vector<32x64xf32>
    %203 = tpu.concatenate %164, %202 in 0 : vector<32x64xf32>, vector<32x64xf32> -> vector<64x64xf32>
    %cst_61 = arith.constant dense<0.000000e+00> : vector<64x128xf32>
    %204 = tpu.matmul %203, %18, %cst_61 {dimension_numbers = #tpu.dot_dimension_numbers<[1], [0], [0], [1], [0, 0, 1, 1], [], []>} : vector<64x64xf32>, vector<64x128xf32>, vector<64x128xf32> -> vector<64x128xf32>
    %205 = vector.broadcast %19 : vector<1x128xf32> to vector<64x128xf32>
    %206 = arith.addf %204, %205 : vector<64x128xf32>
    %cst_62 = arith.constant dense<0.000000e+00> : vector<64x64xf32>
    %207 = tpu.matmul %206, %20, %cst_62 {dimension_numbers = #tpu.dot_dimension_numbers<[1], [0], [0], [1], [0, 0, 1, 1], [], []>} : vector<64x128xf32>, vector<128x64xf32>, vector<64x64xf32> -> vector<64x64xf32>
    %208 = vector.broadcast %21 : vector<1x64xf32> to vector<64x64xf32>
    %209 = arith.addf %207, %208 : vector<64x64xf32>
    %210 = vector.extract_strided_slice %209 {offsets = [12, 0], sizes = [1, 64], strides = [1, 1]} : vector<64x64xf32> to vector<1x64xf32>
    %211 = vector.extract_strided_slice %209 {offsets = [44, 0], sizes = [1, 64], strides = [1, 1]} : vector<64x64xf32> to vector<1x64xf32>
    %212 = tpu.concatenate %210, %211 in 0 : vector<1x64xf32>, vector<1x64xf32> -> vector<2x64xf32>
    %213 = vector.extract_strided_slice %22 {offsets = [2, 0], sizes = [1, 64], strides = [1, 1]} : vector<3x64xf32> to vector<1x64xf32>
    %214 = vector.broadcast %213 : vector<1x64xf32> to vector<2x64xf32>
    %215 = arith.mulf %214, %212 : vector<2x64xf32>
    %216 = arith.addf %123, %215 : vector<2x64xf32>
    %c0_63 = arith.constant 0 : index
    %c0_64 = arith.constant 0 : index
    %217 = vector.load %arg12[%c0_63, %c0_64] : memref<64x192xf32, #tpu.memory_space<vmem>>, vector<64x192xf32>
    %cst_65 = arith.constant dense<0.000000e+00> : vector<2x192xf32>
    %218 = tpu.matmul %216, %217, %cst_65 {dimension_numbers = #tpu.dot_dimension_numbers<[1], [0], [0], [1], [0, 0, 1, 1], [], []>} : vector<2x64xf32>, vector<64x192xf32>, vector<2x192xf32> -> vector<2x192xf32>
    %c0_66 = arith.constant 0 : index
    %c0_67 = arith.constant 0 : index
    %219 = vector.load %arg13[%c0_66, %c0_67] : memref<1x192xf32, #tpu.memory_space<vmem>>, vector<1x192xf32>
    %220 = vector.broadcast %219 : vector<1x192xf32> to vector<2x192xf32>
    %221 = arith.addf %218, %220 : vector<2x192xf32>
    %c0_68 = arith.constant 0 : index
    %c0_69 = arith.constant 0 : index
    %222 = vector.load %arg14[%c0_68, %c0_69] : memref<1x192xf32, #tpu.memory_space<vmem>>, vector<1x192xf32>
    %223 = vector.broadcast %222 : vector<1x192xf32> to vector<2x192xf32>
    %224 = arith.mulf %221, %223 : vector<2x192xf32>
    %c0_70 = arith.constant 0 : index
    %c0_71 = arith.constant 0 : index
    %225 = vector.load %arg15[%c0_70, %c0_71] : memref<1x192xf32, #tpu.memory_space<vmem>>, vector<1x192xf32>
    %226 = vector.broadcast %225 : vector<1x192xf32> to vector<2x192xf32>
    %227 = arith.addf %224, %226 : vector<2x192xf32>
    %cst_72 = arith.constant 0.000000e+00 : f32
    %228 = vector.broadcast %cst_72 : f32 to vector<2x192xf32>
    %229 = arith.maximumf %227, %228 : vector<2x192xf32>
    %c0_73 = arith.constant 0 : index
    %c0_74 = arith.constant 0 : index
    %230 = vector.load %arg16[%c0_73, %c0_74] : memref<192x10xf32, #tpu.memory_space<vmem>>, vector<192x10xf32>
    %cst_75 = arith.constant dense<0.000000e+00> : vector<2x10xf32>
    %231 = tpu.matmul %229, %230, %cst_75 {dimension_numbers = #tpu.dot_dimension_numbers<[1], [0], [0], [1], [0, 0, 1, 1], [], []>} : vector<2x192xf32>, vector<192x10xf32>, vector<2x10xf32> -> vector<2x10xf32>
    %c0_76 = arith.constant 0 : index
    %c0_77 = arith.constant 0 : index
    %232 = vector.load %arg17[%c0_76, %c0_77] : memref<1x10xf32, #tpu.memory_space<vmem>>, vector<1x10xf32>
    %233 = vector.broadcast %232 : vector<1x10xf32> to vector<2x10xf32>
    %234 = arith.addf %231, %233 : vector<2x10xf32>
    %c0_78 = arith.constant 0 : index
    %c0_79 = arith.constant 0 : index
    %235 = vector.load %arg18[%c0_78, %c0_79] : memref<2x10xf32, #tpu.memory_space<vmem>>, vector<2x10xf32>
    tpu.vector_store %arg18[%c0_78, %c0_79], %234 {strides = array<i32>} : memref<2x10xf32, #tpu.memory_space<vmem>>, vector<2x10xf32>,
    return
  }
  func.func @transform_0(%arg0: i32) -> (i32, i32) {
    %c0_i32 = arith.constant 0 : i32
    %c0_i32_0 = arith.constant 0 : i32
    %c0_i32_1 = arith.constant 0 : i32
    return %c0_i32, %c0_i32_0 : i32, i32
  }
  func.func @transform_1(%arg0: i32) -> (i32, i32) {
    %c0_i32 = arith.constant 0 : i32
    %c0_i32_0 = arith.constant 0 : i32
    %c0_i32_1 = arith.constant 0 : i32
    return %c0_i32, %c0_i32_0 : i32, i32
  }
  func.func @transform_2(%arg0: i32) -> (i32, i32) {
    %c0_i32 = arith.constant 0 : i32
    %c0_i32_0 = arith.constant 0 : i32
    %c0_i32_1 = arith.constant 0 : i32
    return %c0_i32, %c0_i32_0 : i32, i32
  }
  func.func @transform_3(%arg0: i32) -> (i32, i32) {
    %c0_i32 = arith.constant 0 : i32
    %c0_i32_0 = arith.constant 0 : i32
    %c0_i32_1 = arith.constant 0 : i32
    return %c0_i32, %c0_i32_0 : i32, i32
  }
  func.func @transform_4(%arg0: i32) -> (i32, i32) {
    %c0_i32 = arith.constant 0 : i32
    %c0_i32_0 = arith.constant 0 : i32
    %c0_i32_1 = arith.constant 0 : i32
    return %c0_i32, %c0_i32_0 : i32, i32
  }
  func.func @transform_5(%arg0: i32) -> (i32, i32) {
    %c0_i32 = arith.constant 0 : i32
    %c0_i32_0 = arith.constant 0 : i32
    %c0_i32_1 = arith.constant 0 : i32
    return %c0_i32, %c0_i32_0 : i32, i32
  }
  func.func @transform_6(%arg0: i32) -> (i32, i32) {
    %c0_i32 = arith.constant 0 : i32
    %c0_i32_0 = arith.constant 0 : i32
    %c0_i32_1 = arith.constant 0 : i32
    return %c0_i32, %c0_i32_0 : i32, i32
  }
  func.func @transform_7(%arg0: i32) -> (i32, i32) {
    %c0_i32 = arith.constant 0 : i32
    %c0_i32_0 = arith.constant 0 : i32
    %c0_i32_1 = arith.constant 0 : i32
    return %c0_i32, %c0_i32_0 : i32, i32
  }
  func.func @transform_8(%arg0: i32) -> (i32, i32) {
    %c0_i32 = arith.constant 0 : i32
    %c0_i32_0 = arith.constant 0 : i32
    %c0_i32_1 = arith.constant 0 : i32
    return %c0_i32, %c0_i32_0 : i32, i32
  }
  func.func @transform_9(%arg0: i32) -> (i32, i32) {
    %c0_i32 = arith.constant 0 : i32
    %c0_i32_0 = arith.constant 0 : i32
    %c0_i32_1 = arith.constant 0 : i32
    return %c0_i32, %c0_i32_0 : i32, i32
  }
  func.func @transform_10(%arg0: i32) -> (i32, i32) {
    %c0_i32 = arith.constant 0 : i32
    %c0_i32_0 = arith.constant 0 : i32
    %c0_i32_1 = arith.constant 0 : i32
    return %c0_i32, %c0_i32_0 : i32, i32
  }
  func.func @transform_11(%arg0: i32) -> (i32, i32) {
    %c0_i32 = arith.constant 0 : i32
    %c0_i32_0 = arith.constant 0 : i32
    %c0_i32_1 = arith.constant 0 : i32
    return %c0_i32, %c0_i32_0 : i32, i32
  }
  func.func @transform_12(%arg0: i32) -> (i32, i32) {
    %c0_i32 = arith.constant 0 : i32
    %c0_i32_0 = arith.constant 0 : i32
    %c0_i32_1 = arith.constant 0 : i32
    return %c0_i32, %c0_i32_0 : i32, i32
  }
  func.func @transform_13(%arg0: i32) -> (i32, i32) {
    %c0_i32 = arith.constant 0 : i32
    %c0_i32_0 = arith.constant 0 : i32
    %c0_i32_1 = arith.constant 0 : i32
    return %c0_i32, %c0_i32_0 : i32, i32
  }
  func.func @transform_14(%arg0: i32) -> (i32, i32) {
    %c0_i32 = arith.constant 0 : i32
    %c0_i32_0 = arith.constant 0 : i32
    %c0_i32_1 = arith.constant 0 : i32
    return %c0_i32, %c0_i32_0 : i32, i32
  }
  func.func @transform_15(%arg0: i32) -> (i32, i32) {
    %c0_i32 = arith.constant 0 : i32
    %c0_i32_0 = arith.constant 0 : i32
    %c0_i32_1 = arith.constant 0 : i32
    return %c0_i32, %c0_i32_0 : i32, i32
  }
  func.func @transform_16(%arg0: i32) -> (i32, i32) {
    %c0_i32 = arith.constant 0 : i32
    %c0_i32_0 = arith.constant 0 : i32
    %c0_i32_1 = arith.constant 0 : i32
    return %c0_i32, %c0_i32_0 : i32, i32
  }
  func.func @transform_17(%arg0: i32) -> (i32, i32) {
    %c0_i32 = arith.constant 0 : i32
    %c0_i32_0 = arith.constant 0 : i32
    %c0_i32_1 = arith.constant 0 : i32
    return %c0_i32, %c0_i32_0 : i32, i32
  }
}

</mosaic_0001>

<llo_original>
// kernel: sqsformer_forward.1
$region0: #{sqsformer_forward.1}
  #allocation0 [shape = 'u32[]', space=smem, size = 0x4, offset = 0x4, fixed_abs, tag = 'smem constant byte address 0x4 - core index']
  #allocation1 [shape = 'u32[144,128]{1,0:T(1,128)}', space=vmem, size = 0x12000, scoped, tag = 'internal scratch']
  %s0 = inlined_call_operand.vmem [shape: f32[64,128], index: 0, kind: input, shape index: {}]
  %s1 = inlined_call_operand.vmem [shape: f32[128,64], index: 1, kind: input, shape index: {}]
  %s2 = inlined_call_operand.vmem [shape: f32[1,64], index: 2, kind: input, shape index: {}]
  %s3 = inlined_call_operand.vmem [shape: f32[64,64], index: 3, kind: input, shape index: {}]
  %s4 = inlined_call_operand.vmem [shape: f32[64,192], index: 4, kind: input, shape index: {}]
  %s5 = inlined_call_operand.vmem [shape: f32[1,192], index: 5, kind: input, shape index: {}]
  %s6 = inlined_call_operand.vmem [shape: f32[64,128], index: 6, kind: input, shape index: {}]
  %s7 = inlined_call_operand.vmem [shape: f32[1,128], index: 7, kind: input, shape index: {}]
  %s8 = inlined_call_operand.vmem [shape: f32[128,64], index: 8, kind: input, shape index: {}]
  %s9 = inlined_call_operand.vmem [shape: f32[1,64], index: 9, kind: input, shape index: {}]
  %s10 = inlined_call_operand.vmem [shape: f32[3,64], index: 10, kind: input, shape index: {}]
  %s11 = inlined_call_operand.vmem [shape: f32[64,192], index: 11, kind: input, shape index: {}]
  %s12 = inlined_call_operand.vmem [shape: f32[1,192], index: 12, kind: input, shape index: {}]
  %s13 = inlined_call_operand.vmem [shape: f32[1,192], index: 13, kind: input, shape index: {}]
  %s14 = inlined_call_operand.vmem [shape: f32[1,192], index: 14, kind: input, shape index: {}]
  %s15 = inlined_call_operand.vmem [shape: f32[192,10], index: 15, kind: input, shape index: {}]
  %s16 = inlined_call_operand.vmem [shape: f32[1,10], index: 16, kind: input, shape index: {}]
  %s17 = inlined_call_operand.hbm [shape: f32[2,10], index: 17, kind: output, shape index: {}]
  %s18 = sld [smem:[#allocation0]]
  $region78: #{sqsformer_forward.1} parent=0
    _
  %s20 = ssub.s32 1, %s18
  %s21 = scalar_select 0, %s20, %s18
  $region1: #{sqsformer_forward.1} parent=0
    #allocation2 [shape = 'u8[1024]{0}', space=vmem, size = 0x400, scoped, tag = 'output window, operand 0, single buffered']
    #allocation3 [shape = 's32[1]{0}', space=sflag, size = 0x4, scoped, tag = 'scoped memory for sqsformer_forward.1']
    %22 = vsyncpa [#allocation3], 0
    // Predicated region
    $region2: #{sqsformer_forward.1} parent=1 // pred_check
      _
    $region3: #{sqsformer_forward.1} parent=1 // pred_check_branch
      %24 = sbr.rel (0) target = $region5
    $region4: #{sqsformer_forward.1} parent=1 // pred_region
      _
    $region5: #{sqsformer_forward.1} parent=1 // pred_fallthru
      _
    // Predicated region
    $region6: #{sqsformer_forward.1} parent=1 // pred_check
      _
    $region7: #{sqsformer_forward.1} parent=1 // pred_check_branch
      %26 = sbr.rel (0) target = $region9
    $region8: #{sqsformer_forward.1} parent=1 // pred_region
      _
    $region9: #{sqsformer_forward.1} parent=1 // pred_fallthru
      _
    // Predicated region
    $region10: #{sqsformer_forward.1} parent=1 // pred_check
      _
    $region11: #{sqsformer_forward.1} parent=1 // pred_check_branch
      %28 = sbr.rel (0) target = $region13
    $region12: #{sqsformer_forward.1} parent=1 // pred_region
      _
    $region13: #{sqsformer_forward.1} parent=1 // pred_fallthru
      _
    // Predicated region
    $region14: #{sqsformer_forward.1} parent=1 // pred_check
      _
    $region15: #{sqsformer_forward.1} parent=1 // pred_check_branch
      %30 = sbr.rel (0) target = $region17
    $region16: #{sqsformer_forward.1} parent=1 // pred_region
      _
    $region17: #{sqsformer_forward.1} parent=1 // pred_fallthru
      _
    // Predicated region
    $region18: #{sqsformer_forward.1} parent=1 // pred_check
      _
    $region19: #{sqsformer_forward.1} parent=1 // pred_check_branch
      %32 = sbr.rel (0) target = $region21
    $region20: #{sqsformer_forward.1} parent=1 // pred_region
      _
    $region21: #{sqsformer_forward.1} parent=1 // pred_fallthru
      _
    // Predicated region
    $region22: #{sqsformer_forward.1} parent=1 // pred_check
      _
    $region23: #{sqsformer_forward.1} parent=1 // pred_check_branch
      %34 = sbr.rel (0) target = $region25
    $region24: #{sqsformer_forward.1} parent=1 // pred_region
      _
    $region25: #{sqsformer_forward.1} parent=1 // pred_fallthru
      _
    // Predicated region
    $region26: #{sqsformer_forward.1} parent=1 // pred_check
      _
    $region27: #{sqsformer_forward.1} parent=1 // pred_check_branch
      %36 = sbr.rel (0) target = $region29
    $region28: #{sqsformer_forward.1} parent=1 // pred_region
      _
    $region29: #{sqsformer_forward.1} parent=1 // pred_fallthru
      _
    // Predicated region
    $region30: #{sqsformer_forward.1} parent=1 // pred_check
      _
    $region31: #{sqsformer_forward.1} parent=1 // pred_check_branch
      %38 = sbr.rel (0) target = $region33
    $region32: #{sqsformer_forward.1} parent=1 // pred_region
      _
    $region33: #{sqsformer_forward.1} parent=1 // pred_fallthru
      _
    // Predicated region
    $region34: #{sqsformer_forward.1} parent=1 // pred_check
      _
    $region35: #{sqsformer_forward.1} parent=1 // pred_check_branch
      %40 = sbr.rel (0) target = $region37
    $region36: #{sqsformer_forward.1} parent=1 // pred_region
      _
    $region37: #{sqsformer_forward.1} parent=1 // pred_fallthru
      _
    // Predicated region
    $region38: #{sqsformer_forward.1} parent=1 // pred_check
      _
    $region39: #{sqsformer_forward.1} parent=1 // pred_check_branch
      %42 = sbr.rel (0) target = $region41
    $region40: #{sqsformer_forward.1} parent=1 // pred_region
      _
    $region41: #{sqsformer_forward.1} parent=1 // pred_fallthru
      _
    // Predicated region
    $region42: #{sqsformer_forward.1} parent=1 // pred_check
      _
    $region43: #{sqsformer_forward.1} parent=1 // pred_check_branch
      %44 = sbr.rel (0) target = $region45
    $region44: #{sqsformer_forward.1} parent=1 // pred_region
      _
    $region45: #{sqsformer_forward.1} parent=1 // pred_fallthru
      _
    // Predicated region
    $region46: #{sqsformer_forward.1} parent=1 // pred_check
      _
    $region47: #{sqsformer_forward.1} parent=1 // pred_check_branch
      %46 = sbr.rel (0) target = $region49
    $region48: #{sqsformer_forward.1} parent=1 // pred_region
      _
    $region49: #{sqsformer_forward.1} parent=1 // pred_fallthru
      _
    // Predicated region
    $region50: #{sqsformer_forward.1} parent=1 // pred_check
      _
    $region51: #{sqsformer_forward.1} parent=1 // pred_check_branch
      %48 = sbr.rel (0) target = $region53
    $region52: #{sqsformer_forward.1} parent=1 // pred_region
      _
    $region53: #{sqsformer_forward.1} parent=1 // pred_fallthru
      _
    // Predicated region
    $region54: #{sqsformer_forward.1} parent=1 // pred_check
      _
    $region55: #{sqsformer_forward.1} parent=1 // pred_check_branch
      %50 = sbr.rel (0) target = $region57
    $region56: #{sqsformer_forward.1} parent=1 // pred_region
      _
    $region57: #{sqsformer_forward.1} parent=1 // pred_fallthru
      _
    // Predicated region
    $region58: #{sqsformer_forward.1} parent=1 // pred_check
      _
    $region59: #{sqsformer_forward.1} parent=1 // pred_check_branch
      %52 = sbr.rel (0) target = $region61
    $region60: #{sqsformer_forward.1} parent=1 // pred_region
      _
    $region61: #{sqsformer_forward.1} parent=1 // pred_fallthru
      _
    // Predicated region
    $region62: #{sqsformer_forward.1} parent=1 // pred_check
      _
    $region63: #{sqsformer_forward.1} parent=1 // pred_check_branch
      %54 = sbr.rel (0) target = $region65
    $region64: #{sqsformer_forward.1} parent=1 // pred_region
      _
    $region65: #{sqsformer_forward.1} parent=1 // pred_fallthru
      _
    // Predicated region
    $region66: #{sqsformer_forward.1} parent=1 // pred_check
      _
    $region67: #{sqsformer_forward.1} parent=1 // pred_check_branch
      %56 = sbr.rel (0) target = $region69
    $region68: #{sqsformer_forward.1} parent=1 // pred_region
      _
    $region69: #{sqsformer_forward.1} parent=1 // pred_fallthru
      _
    %v57 = vld [vmem:[%s0] sm:$0xff]
    %v58 = vld [vmem:[%s0 + $0x8] sm:$0xff]
    %v59 = vld [vmem:[%s0 + $0x10] sm:$0xff]
    %v60 = vld [vmem:[%s0 + $0x18] sm:$0xff]
    %v61 = vld [vmem:[%s0 + $0x20] sm:$0xff]
    %v62 = vld [vmem:[%s0 + $0x28] sm:$0xff]
    %v63 = vld [vmem:[%s0 + $0x30] sm:$0xff]
    %v64 = vld [vmem:[%s0 + $0x38] sm:$0xff]
    %v65 = vld [vmem:[%s1] sm:$0xff]
    %v66 = vld [vmem:[%s1 + $0x8] sm:$0xff]
    %v67 = vld [vmem:[%s1 + $0x10] sm:$0xff]
    %v68 = vld [vmem:[%s1 + $0x18] sm:$0xff]
    %v69 = vld [vmem:[%s1 + $0x20] sm:$0xff]
    %v70 = vld [vmem:[%s1 + $0x28] sm:$0xff]
    %v71 = vld [vmem:[%s1 + $0x30] sm:$0xff]
    %v72 = vld [vmem:[%s1 + $0x38] sm:$0xff]
    %v73 = vld [vmem:[%s1 + $0x40] sm:$0xff]
    %v74 = vld [vmem:[%s1 + $0x48] sm:$0xff]
    %v75 = vld [vmem:[%s1 + $0x50] sm:$0xff]
    %v76 = vld [vmem:[%s1 + $0x58] sm:$0xff]
    %v77 = vld [vmem:[%s1 + $0x60] sm:$0xff]
    %v78 = vld [vmem:[%s1 + $0x68] sm:$0xff]
    %v79 = vld [vmem:[%s1 + $0x70] sm:$0xff]
    %v80 = vld [vmem:[%s1 + $0x78] sm:$0xff]
    %v81 = vld [vmem:[%s2] sm:$0x1]
    %v83 = vlaneseq
    %v84 = vshrl.u32 %v83, 7
    %v85 = vsub.s32 0, %v84
    %v86 = vrot.slane %v81, %v85
    %88 = vmatprep.subr.mxu0 0.0
    %89 = vmatpush1.msra.mxu0 %v80
    %90 = vmatprep.subr.mxu0 0.0
    %91 = vmatpush1.msra.mxu0 %v79
    %92 = vmatprep.subr.mxu0 0.0
    %93 = vmatpush1.msra.mxu0 %v78
    %94 = vmatprep.subr.mxu0 0.0
    %95 = vmatpush1.msra.mxu0 %v77
    %96 = vmatprep.subr.mxu0 0.0
    %97 = vmatpush1.msra.mxu0 %v76
    %98 = vmatprep.subr.mxu0 0.0
    %99 = vmatpush1.msra.mxu0 %v75
    %100 = vmatprep.subr.mxu0 0.0
    %101 = vmatpush1.msra.mxu0 %v74
    %102 = vmatprep.subr.mxu0 0.0
    %103 = vmatpush1.msra.mxu0 %v73
    %104 = vmatprep.subr.mxu0 0.0
    %105 = vmatpush1.msra.mxu0 %v72
    %106 = vmatprep.subr.mxu0 0.0
    %107 = vmatpush1.msra.mxu0 %v71
    %108 = vmatprep.subr.mxu0 0.0
    %109 = vmatpush1.msra.mxu0 %v70
    %110 = vmatprep.subr.mxu0 0.0
    %111 = vmatpush1.msra.mxu0 %v69
    %112 = vmatprep.subr.mxu0 0.0
    %113 = vmatpush1.msra.mxu0 %v68
    %114 = vmatprep.subr.mxu0 0.0
    %115 = vmatpush1.msra.mxu0 %v67
    %116 = vmatprep.subr.mxu0 0.0
    %117 = vmatpush1.msra.mxu0 %v66
    %118 = vmatprep.subr.mxu0 0.0
    %119 = vmatpush1.msra.mxu0 %v65
    %120 = vmatprep.subr.mxu0 0.0
    %121 = vmatpush2.msra.mxu0 0.0
    %122 = vmatprep.subr.mxu0 0.0
    %123 = vmatpush2.msra.mxu0 0.0
    %124 = vmatprep.subr.mxu0 0.0
    %125 = vmatpush2.msra.mxu0 0.0
    %126 = vmatprep.subr.mxu0 0.0
    %127 = vmatpush2.msra.mxu0 0.0
    %128 = vmatprep.subr.mxu0 0.0
    %129 = vmatpush2.msra.mxu0 0.0
    %130 = vmatprep.subr.mxu0 0.0
    %131 = vmatpush2.msra.mxu0 0.0
    %132 = vmatprep.subr.mxu0 0.0
    %133 = vmatpush2.msra.mxu0 0.0
    %134 = vmatprep.subr.mxu0 0.0
    %135 = vmatpush2.msra.mxu0 0.0
    %136 = vmatprep.subr.mxu0 0.0
    %137 = vmatpush2.msra.mxu0 0.0
    %138 = vmatprep.subr.mxu0 0.0
    %139 = vmatpush2.msra.mxu0 0.0
    %140 = vmatprep.subr.mxu0 0.0
    %141 = vmatpush2.msra.mxu0 0.0
    %142 = vmatprep.subr.mxu0 0.0
    %143 = vmatpush2.msra.mxu0 0.0
    %144 = vmatprep.subr.mxu0 0.0
    %145 = vmatpush2.msra.mxu0 0.0
    %146 = vmatprep.subr.mxu0 0.0
    %147 = vmatpush2.msra.mxu0 0.0
    %148 = vmatprep.subr.mxu0 0.0
    %149 = vmatpush2.msra.mxu0 0.0
    %150 = vmatprep.subr.mxu0 0.0
    %151 = vmatpush2.msra.mxu0 0.0
    %152 = vmatprep.mubr.f32.mxu0 0.0
    %153 = vmatmul.mubr.f32.gmra.mxu0 %v57
    %v154 = vpop.f32.mrf.mxu0
    %v155 = vadd.f32 %v86, %v154
    %v156 = vpop.f32.mrf.mxu0
    %157 = vmatprep.mubr.f32.mxu0 0.0
    %158 = vmatmul.mubr.f32.gmra.mxu0 %v58
    %v159 = vpop.f32.mrf.mxu0
    %v160 = vadd.f32 %v86, %v159
    %v161 = vpop.f32.mrf.mxu0
    %162 = vmatprep.mubr.f32.mxu0 0.0
    %163 = vmatmul.mubr.f32.gmra.mxu0 %v59
    %v164 = vpop.f32.mrf.mxu0
    %v165 = vadd.f32 %v86, %v164
    %v166 = vpop.f32.mrf.mxu0
    %167 = vmatprep.mubr.f32.mxu0 0.0
    %168 = vmatmul.mubr.f32.gmra.mxu0 %v60
    %v169 = vpop.f32.mrf.mxu0
    %v170 = vadd.f32 %v86, %v169
    %v171 = vpop.f32.mrf.mxu0
    %172 = vmatprep.mubr.f32.mxu0 0.0
    %173 = vmatmul.mubr.f32.gmra.mxu0 %v61
    %v174 = vpop.f32.mrf.mxu0
    %v175 = vadd.f32 %v86, %v174
    %v176 = vpop.f32.mrf.mxu0
    %177 = vmatprep.mubr.f32.mxu0 0.0
    %178 = vmatmul.mubr.f32.gmra.mxu0 %v62
    %v179 = vpop.f32.mrf.mxu0
    %v180 = vadd.f32 %v86, %v179
    %v181 = vpop.f32.mrf.mxu0
    %182 = vmatprep.mubr.f32.mxu0 0.0
    %183 = vmatmul.mubr.f32.gmra.mxu0 %v63
    %v184 = vpop.f32.mrf.mxu0
    %v185 = vadd.f32 %v86, %v184
    %v186 = vpop.f32.mrf.mxu0
    %187 = vmatprep.mubr.f32.mxu0 0.0
    %188 = vmatmul.mubr.f32.gmra.mxu0 %v64
    %v189 = vpop.f32.mrf.mxu0
    %v190 = vadd.f32 %v86, %v189
    %v191 = vpop.f32.mrf.mxu0
    %192 = vdwg.mxu0
    %v193 = vmax.f32 %v155, 0.0
    %v194 = vmax.f32 %v160, 0.0
    %v195 = vmax.f32 %v165, 0.0
    %v196 = vmax.f32 %v170, 0.0
    %v197 = vmax.f32 %v175, 0.0
    %v198 = vmax.f32 %v180, 0.0
    %v199 = vmax.f32 %v185, 0.0
    %v200 = vmax.f32 %v190, 0.0
    %v201 = vld [vmem:[%s3] sm:$0xff]
    %v202 = vld [vmem:[%s3 + $0x8] sm:$0xff]
    %v203 = vld [vmem:[%s3 + $0x10] sm:$0xff]
    %v204 = vld [vmem:[%s3 + $0x18] sm:$0xff]
    %v205 = vld [vmem:[%s3 + $0x20] sm:$0xff]
    %v206 = vld [vmem:[%s3 + $0x28] sm:$0xff]
    %v207 = vld [vmem:[%s3 + $0x30] sm:$0xff]
    %v208 = vld [vmem:[%s3 + $0x38] sm:$0xff]
    %v209 = vadd.f32 %v193, %v201
    %v210 = vadd.f32 %v194, %v202
    %v211 = vadd.f32 %v195, %v203
    %v212 = vadd.f32 %v196, %v204
    %v213 = vadd.f32 %v197, %v205
    %v214 = vadd.f32 %v198, %v206
    %v215 = vadd.f32 %v199, %v207
    %v216 = vadd.f32 %v200, %v208
    %v217 = vlaneseq
    %v218 = vand.u32 %v217, 127
    %vm219 = vcmp.ge.s32.totalorder %v218, 25
    %v220 = vsel %vm219, -1e+30, 0.0
    %v221 = vld [vmem:[%s4] sm:$0xff]
    %v222 = vld [vmem:[%s4 + $0x8] sm:$0xff]
    %v223 = vld [vmem:[%s4 + $0x10] sm:$0xff]
    %v224 = vld [vmem:[%s4 + $0x18] sm:$0xff]
    %v225 = vld [vmem:[%s4 + $0x20] sm:$0xff]
    %v226 = vld [vmem:[%s4 + $0x28] sm:$0xff]
    %v227 = vld [vmem:[%s4 + $0x30] sm:$0xff]
    %v228 = vld [vmem:[%s4 + $0x38] sm:$0xff]
    %v229 = vld [vmem:[%s4 + $0x40] sm:$0xff]
    %v230 = vld [vmem:[%s4 + $0x48] sm:$0xff]
    %v231 = vld [vmem:[%s4 + $0x50] sm:$0xff]
    %v232 = vld [vmem:[%s4 + $0x58] sm:$0xff]
    %v233 = vld [vmem:[%s4 + $0x60] sm:$0xff]
    %v234 = vld [vmem:[%s4 + $0x68] sm:$0xff]
    %v235 = vld [vmem:[%s4 + $0x70] sm:$0xff]
    %v236 = vld [vmem:[%s4 + $0x78] sm:$0xff]
    %v237 = vld [vmem:[%s5] sm:$0x3]
    %v238 = vld [vmem:[%s6] sm:$0xff]
    %v239 = vld [vmem:[%s6 + $0x8] sm:$0xff]
    %v240 = vld [vmem:[%s6 + $0x10] sm:$0xff]
    %v241 = vld [vmem:[%s6 + $0x18] sm:$0xff]
    %v242 = vld [vmem:[%s6 + $0x20] sm:$0xff]
    %v243 = vld [vmem:[%s6 + $0x28] sm:$0xff]
    %v244 = vld [vmem:[%s6 + $0x30] sm:$0xff]
    %v245 = vld [vmem:[%s6 + $0x38] sm:$0xff]
    %v246 = vld [vmem:[%s7] sm:$0x1]
    %v247 = vld [vmem:[%s8] sm:$0xff]
    %v248 = vld [vmem:[%s8 + $0x8] sm:$0xff]
    %v249 = vld [vmem:[%s8 + $0x10] sm:$0xff]
    %v250 = vld [vmem:[%s8 + $0x18] sm:$0xff]
    %v251 = vld [vmem:[%s8 + $0x20] sm:$0xff]
    %v252 = vld [vmem:[%s8 + $0x28] sm:$0xff]
    %v253 = vld [vmem:[%s8 + $0x30] sm:$0xff]
    %v254 = vld [vmem:[%s8 + $0x38] sm:$0xff]
    %v255 = vld [vmem:[%s8 + $0x40] sm:$0xff]
    %v256 = vld [vmem:[%s8 + $0x48] sm:$0xff]
    %v257 = vld [vmem:[%s8 + $0x50] sm:$0xff]
    %v258 = vld [vmem:[%s8 + $0x58] sm:$0xff]
    %v259 = vld [vmem:[%s8 + $0x60] sm:$0xff]
    %v260 = vld [vmem:[%s8 + $0x68] sm:$0xff]
    %v261 = vld [vmem:[%s8 + $0x70] sm:$0xff]
    %v262 = vld [vmem:[%s8 + $0x78] sm:$0xff]
    %v263 = vld [vmem:[%s9] sm:$0x1]
    %v264 = vld [vmem:[%s10] sm:$0x7]
    %v266 = vrot.slane %v210, 4
    %v269 = vrot.slane %v214, 3
    %vm271 = vcmask 1040384
    %v272 = vsel %vm271, %v266, %v269
    %v273 = vlaneseq
    %v274 = vshrl.u32 %v273, 7
    %v275 = vsub.s32 0, %v274
    %v276 = vrot.slane %v264, %v275
    %v277 = vmul.f32 %v276, %v272
    %v278 = vadd.f32 %v277, 0.0
    %v280 = vlaneseq
    %v281 = vshrl.u32 %v280, 7
    %v282 = vsub.s32 0, %v281
    %v283 = vrot.slane %v237, %v282
    %v284 = vlaneseq
    %v285 = vshrl.u32 %v284, 7
    %v286 = vsub.s32 1, %v285
    %v287 = vrot.slane %v237, %v286
    %vm290 = vcmask 523264
    %v292 = vsel %vm290, %v209, 0
    %v294 = vsel %vm290, %v210, 0
    %v297 = vsel %vm290, %v211, 0
    %v300 = vsel %vm290, %v212, 0
    %v303 = vsel %vm290, %v213, 0
    %v305 = vsel %vm290, %v214, 0
    %v308 = vsel %vm290, %v215, 0
    %v311 = vsel %vm290, %v216, 0
    %313 = vmatprep.subr.mxu0 0.0
    %314 = vmatpush1.msra.mxu0 0.0
    %315 = vmatprep.subr.mxu0 0.0
    %316 = vmatpush1.msra.mxu0 0.0
    %317 = vmatprep.subr.mxu0 0.0
    %318 = vmatpush1.msra.mxu0 0.0
    %319 = vmatprep.subr.mxu0 0.0
    %320 = vmatpush1.msra.mxu0 0.0
    %321 = vmatprep.subr.mxu0 0.0
    %322 = vmatpush1.msra.mxu0 0.0
    %323 = vmatprep.subr.mxu0 0.0
    %324 = vmatpush1.msra.mxu0 0.0
    %325 = vmatprep.subr.mxu0 0.0
    %326 = vmatpush1.msra.mxu0 0.0
    %327 = vmatprep.subr.mxu0 0.0
    %328 = vmatpush1.msra.mxu0 0.0
    %329 = vmatprep.subr.mxu0 %v236
    %330 = vmatpush1.msra.mxu0 %v235
    %331 = vmatprep.subr.mxu0 %v234
    %332 = vmatpush1.msra.mxu0 %v233
    %333 = vmatprep.subr.mxu0 %v232
    %334 = vmatpush1.msra.mxu0 %v231
    %335 = vmatprep.subr.mxu0 %v230
    %336 = vmatpush1.msra.mxu0 %v229
    %337 = vmatprep.subr.mxu0 %v228
    %338 = vmatpush1.msra.mxu0 %v227
    %339 = vmatprep.subr.mxu0 %v226
    %340 = vmatpush1.msra.mxu0 %v225
    %341 = vmatprep.subr.mxu0 %v224
    %342 = vmatpush1.msra.mxu0 %v223
    %343 = vmatprep.subr.mxu0 %v222
    %344 = vmatpush1.msra.mxu0 %v221
    %345 = vmatprep.subr.mxu0 0.0
    %346 = vmatpush2.msra.mxu0 0.0
    %347 = vmatprep.subr.mxu0 0.0
    %348 = vmatpush2.msra.mxu0 0.0
    %349 = vmatprep.subr.mxu0 0.0
    %350 = vmatpush2.msra.mxu0 0.0
    %351 = vmatprep.subr.mxu0 0.0
    %352 = vmatpush2.msra.mxu0 0.0
    %353 = vmatprep.subr.mxu0 0.0
    %354 = vmatpush2.msra.mxu0 0.0
    %355 = vmatprep.subr.mxu0 0.0
    %356 = vmatpush2.msra.mxu0 0.0
    %357 = vmatprep.subr.mxu0 0.0
    %358 = vmatpush2.msra.mxu0 0.0
    %359 = vmatprep.subr.mxu0 0.0
    %360 = vmatpush2.msra.mxu0 0.0
    %361 = vmatprep.subr.mxu0 0.0
    %362 = vmatpush2.msra.mxu0 0.0
    %363 = vmatprep.subr.mxu0 0.0
    %364 = vmatpush2.msra.mxu0 0.0
    %365 = vmatprep.subr.mxu0 0.0
    %366 = vmatpush2.msra.mxu0 0.0
    %367 = vmatprep.subr.mxu0 0.0
    %368 = vmatpush2.msra.mxu0 0.0
    %369 = vmatprep.subr.mxu0 0.0
    %370 = vmatpush2.msra.mxu0 0.0
    %371 = vmatprep.subr.mxu0 0.0
    %372 = vmatpush2.msra.mxu0 0.0
    %373 = vmatprep.subr.mxu0 0.0
    %374 = vmatpush2.msra.mxu0 0.0
    %375 = vmatprep.subr.mxu0 0.0
    %376 = vmatpush2.msra.mxu0 0.0
    %377 = vmatprep.mubr.f32.mxu0 0.0
    %378 = vmatmul.mubr.f32.gmra.mxu0 %v292
    %v379 = vpop.f32.mrf.mxu0
    %v380 = vadd.f32 %v283, %v379
    %v381 = vpop.f32.mrf.mxu0
    %v382 = vadd.f32 %v287, %v381
    %383 = vmatprep.mubr.f32.mxu0 0.0
    %384 = vmatmul.mubr.f32.gmra.mxu0 %v294
    %v385 = vpop.f32.mrf.mxu0
    %v386 = vadd.f32 %v283, %v385
    %v387 = vpop.f32.mrf.mxu0
    %v388 = vadd.f32 %v287, %v387
    %389 = vmatprep.mubr.f32.mxu0 0.0
    %390 = vmatmul.mubr.f32.gmra.mxu0 %v297
    %v391 = vpop.f32.mrf.mxu0
    %v392 = vadd.f32 %v283, %v391
    %v393 = vpop.f32.mrf.mxu0
    %v394 = vadd.f32 %v287, %v393
    %395 = vmatprep.mubr.f32.mxu0 0.0
    %396 = vmatmul.mubr.f32.gmra.mxu0 %v300
    %v397 = vpop.f32.mrf.mxu0
    %v398 = vadd.f32 %v283, %v397
    %v399 = vpop.f32.mrf.mxu0
    %v400 = vadd.f32 %v287, %v399
    %401 = vmatprep.mubr.f32.mxu0 0.0
    %402 = vmatmul.mubr.f32.gmra.mxu0 %v303
    %v403 = vpop.f32.mrf.mxu0
    %v404 = vadd.f32 %v283, %v403
    %v405 = vpop.f32.mrf.mxu0
    %v406 = vadd.f32 %v287, %v405
    %407 = vmatprep.mubr.f32.mxu0 0.0
    %408 = vmatmul.mubr.f32.gmra.mxu0 %v305
    %v409 = vpop.f32.mrf.mxu0
    %v410 = vadd.f32 %v283, %v409
    %v411 = vpop.f32.mrf.mxu0
    %v412 = vadd.f32 %v287, %v411
    %413 = vmatprep.mubr.f32.mxu0 0.0
    %414 = vmatmul.mubr.f32.gmra.mxu0 %v308
    %v415 = vpop.f32.mrf.mxu0
    %v416 = vadd.f32 %v283, %v415
    %v417 = vpop.f32.mrf.mxu0
    %v418 = vadd.f32 %v287, %v417
    %419 = vmatprep.mubr.f32.mxu0 0.0
    %420 = vmatmul.mubr.f32.gmra.mxu0 %v311
    %v421 = vpop.f32.mrf.mxu0
    %v422 = vadd.f32 %v283, %v421
    %v423 = vpop.f32.mrf.mxu0
    %v424 = vadd.f32 %v287, %v423
    %425 = vdwg.mxu0
    %430 = vrot.lane.b32.xlu0 %v380, 64
    %v431 = vpop.permute.xlu0 %430
    %432 = vrot.lane.b32.xlu0 %v386, 64
    %v433 = vpop.permute.xlu0 %432
    %434 = vrot.lane.b32.xlu0 %v392, 64
    %v435 = vpop.permute.xlu0 %434
    %436 = vrot.lane.b32.xlu0 %v398, 64
    %v437 = vpop.permute.xlu0 %436
    %vm438 = vcmask 261120
    %v439 = vsel %vm438, %v380, 0
    %v441 = vsel %vm438, %v386, 0
    %v443 = vsel %vm438, %v392, 0
    %v445 = vsel %vm438, %v398, 0
    %v447 = vsel %vm438, %v431, 0
    %v449 = vsel %vm438, %v433, 0
    %v451 = vsel %vm438, %v435, 0
    %v453 = vsel %vm438, %v437, 0
    %455 = vmatprep.subr.mxu0 0.0
    %456 = vmatpush1.xpose.msra.mxu0 0.0
    %457 = vmatprep.subr.mxu0 0.0
    %458 = vmatpush1.xpose.msra.mxu0 0.0
    %459 = vmatprep.subr.mxu0 0.0
    %460 = vmatpush1.xpose.msra.mxu0 0.0
    %461 = vmatprep.subr.mxu0 0.0
    %462 = vmatpush1.xpose.msra.mxu0 0.0
    %463 = vmatprep.subr.mxu0 0.0
    %464 = vmatpush1.xpose.msra.mxu0 0.0
    %465 = vmatprep.subr.mxu0 0.0
    %466 = vmatpush1.xpose.msra.mxu0 0.0
    %467 = vmatprep.subr.mxu0 0.0
    %468 = vmatpush1.xpose.msra.mxu0 0.0
    %469 = vmatprep.subr.mxu0 0.0
    %470 = vmatpush1.xpose.msra.mxu0 0.0
    %471 = vmatprep.subr.mxu0 0.0
    %472 = vmatpush1.xpose.msra.mxu0 0.0
    %473 = vmatprep.subr.mxu0 0.0
    %474 = vmatpush1.xpose.msra.mxu0 0.0
    %475 = vmatprep.subr.mxu0 0.0
    %476 = vmatpush1.xpose.msra.mxu0 0.0
    %477 = vmatprep.subr.mxu0 0.0
    %478 = vmatpush1.xpose.msra.mxu0 0.0
    %479 = vmatprep.subr.mxu0 0.0
    %480 = vmatpush1.xpose.msra.mxu0 %v453
    %481 = vmatprep.subr.mxu0 0.0
    %482 = vmatpush1.xpose.msra.mxu0 %v451
    %483 = vmatprep.subr.mxu0 0.0
    %484 = vmatpush1.xpose.msra.mxu0 %v449
    %485 = vmatprep.subr.mxu0 0.0
    %486 = vmatpush1.xpose.msra.mxu0 %v447
    %487 = vmatprep.subr.mxu0 0.0
    %488 = vmatpush2.xpose.msra.mxu0 0.0
    %489 = vmatprep.subr.mxu0 0.0
    %490 = vmatpush2.xpose.msra.mxu0 0.0
    %491 = vmatprep.subr.mxu0 0.0
    %492 = vmatpush2.xpose.msra.mxu0 0.0
    %493 = vmatprep.subr.mxu0 0.0
    %494 = vmatpush2.xpose.msra.mxu0 0.0
    %495 = vmatprep.subr.mxu0 0.0
    %496 = vmatpush2.xpose.msra.mxu0 0.0
    %497 = vmatprep.subr.mxu0 0.0
    %498 = vmatpush2.xpose.msra.mxu0 0.0
    %499 = vmatprep.subr.mxu0 0.0
    %500 = vmatpush2.xpose.msra.mxu0 0.0
    %501 = vmatprep.subr.mxu0 0.0
    %502 = vmatpush2.xpose.msra.mxu0 0.0
    %503 = vmatprep.subr.mxu0 0.0
    %504 = vmatpush2.xpose.msra.mxu0 0.0
    %505 = vmatprep.subr.mxu0 0.0
    %506 = vmatpush2.xpose.msra.mxu0 0.0
    %507 = vmatprep.subr.mxu0 0.0
    %508 = vmatpush2.xpose.msra.mxu0 0.0
    %509 = vmatprep.subr.mxu0 0.0
    %510 = vmatpush2.xpose.msra.mxu0 0.0
    %511 = vmatprep.subr.mxu0 0.0
    %512 = vmatpush2.xpose.msra.mxu0 0.0
    %513 = vmatprep.subr.mxu0 0.0
    %514 = vmatpush2.xpose.msra.mxu0 0.0
    %515 = vmatprep.subr.mxu0 0.0
    %516 = vmatpush2.xpose.msra.mxu0 0.0
    %517 = vmatprep.subr.mxu0 0.0
    %518 = vmatpush2.xpose.msra.mxu0 0.0
    %519 = vmatprep.mubr.f32.mxu0 0.0
    %520 = vmatmul.mubr.f32.gmra.mxu0 %v439
    %v521 = vpop.f32.mrf.mxu0
    %v522 = vadd.f32 %v220, %v521
    %v523 = vpop.f32.mrf.mxu0
    %524 = vmatprep.mubr.f32.mxu0 0.0
    %525 = vmatmul.mubr.f32.gmra.mxu0 %v441
    %v526 = vpop.f32.mrf.mxu0
    %v527 = vadd.f32 %v220, %v526
    %v528 = vpop.f32.mrf.mxu0
    %529 = vmatprep.mubr.f32.mxu0 0.0
    %530 = vmatmul.mubr.f32.gmra.mxu0 %v443
    %v531 = vpop.f32.mrf.mxu0
    %v532 = vadd.f32 %v220, %v531
    %v533 = vpop.f32.mrf.mxu0
    %534 = vmatprep.mubr.f32.mxu0 0.0
    %535 = vmatmul.mubr.f32.gmra.mxu0 %v445
    %v536 = vpop.f32.mrf.mxu0
    %v537 = vadd.f32 %v220, %v536
    %v538 = vpop.f32.mrf.mxu0
    %539 = vdwg.mxu0
    %v540 = vsel %vm438, %v522, -inf
    %541 = vmax.xlane.f32.xlu0 %v540
    %v542 = vpop.xlane.xlu0 %541
    %v543 = vsel %vm438, %v527, -inf
    %544 = vmax.xlane.f32.xlu0 %v543
    %v545 = vpop.xlane.xlu0 %544
    %v546 = vsel %vm438, %v532, -inf
    %547 = vmax.xlane.f32.xlu0 %v546
    %v548 = vpop.xlane.xlu0 %547
    %v549 = vsel %vm438, %v537, -inf
    %550 = vmax.xlane.f32.xlu0 %v549
    %v551 = vpop.xlane.xlu0 %550
    %v552 = vsub.f32 %v522, %v542
    %v553 = vsub.f32 %v527, %v545
    %v554 = vsub.f32 %v532, %v548
    %v555 = vsub.f32 %v537, %v551
    %v556 = vmul.f32 %v552, 1.442695
    %v557 = vpow.pop %v556
    %v558 = vmul.f32 %v553, 1.442695
    %v559 = vpow.pop %v558
    %v560 = vmul.f32 %v554, 1.442695
    %v561 = vpow.pop %v560
    %v562 = vmul.f32 %v555, 1.442695
    %v563 = vpow.pop %v562
    %v564 = vsel %vm438, %v557, 0.0
    %565 = vadd.xlane.f32.xlu0 %v564
    %v566 = vpop.xlane.xlu0 %565
    %v567 = vsel %vm438, %v559, 0.0
    %568 = vadd.xlane.f32.xlu0 %v567
    %v569 = vpop.xlane.xlu0 %568
    %v570 = vsel %vm438, %v561, 0.0
    %571 = vadd.xlane.f32.xlu0 %v570
    %v572 = vpop.xlane.xlu0 %571
    %v573 = vsel %vm438, %v563, 0.0
    %574 = vadd.xlane.f32.xlu0 %v573
    %v575 = vpop.xlane.xlu0 %574
    %v576 = vrcp.pop %v566
    %v577 = vrcp.pop %v569
    %v578 = vrcp.pop %v572
    %v579 = vrcp.pop %v575
    %v580 = vmul.f32 %v557, %v576
    %v581 = vmul.f32 %v559, %v577
    %v582 = vmul.f32 %v561, %v578
    %v583 = vmul.f32 %v563, %v579
    %v585 = vsel %vm438, %v580, 0
    %v588 = vsel %vm438, %v581, 0
    %v591 = vsel %vm438, %v582, 0
    %v594 = vsel %vm438, %v583, 0
    %596 = vmatprep.subr.mxu0 0.0
    %597 = vmatpush1.msra.mxu0 0.0
    %598 = vmatprep.subr.mxu0 0.0
    %599 = vmatpush1.msra.mxu0 0.0
    %600 = vmatprep.subr.mxu0 0.0
    %601 = vmatpush1.msra.mxu0 0.0
    %602 = vmatprep.subr.mxu0 0.0
    %603 = vmatpush1.msra.mxu0 0.0
    %604 = vmatprep.subr.mxu0 0.0
    %605 = vmatpush1.msra.mxu0 0.0
    %606 = vmatprep.subr.mxu0 0.0
    %607 = vmatpush1.msra.mxu0 0.0
    %608 = vmatprep.subr.mxu0 0.0
    %609 = vmatpush1.msra.mxu0 0.0
    %610 = vmatprep.subr.mxu0 0.0
    %611 = vmatpush1.msra.mxu0 0.0
    %612 = vmatprep.subr.mxu0 0.0
    %613 = vmatpush1.msra.mxu0 0.0
    %614 = vmatprep.subr.mxu0 0.0
    %615 = vmatpush1.msra.mxu0 0.0
    %616 = vmatprep.subr.mxu0 0.0
    %617 = vmatpush1.msra.mxu0 0.0
    %618 = vmatprep.subr.mxu0 0.0
    %619 = vmatpush1.msra.mxu0 0.0
    %620 = vmatprep.subr.mxu0 0.0
    %621 = vmatpush1.msra.mxu0 %v400
    %622 = vmatprep.subr.mxu0 0.0
    %623 = vmatpush1.msra.mxu0 %v394
    %624 = vmatprep.subr.mxu0 0.0
    %625 = vmatpush1.msra.mxu0 %v388
    %626 = vmatprep.subr.mxu0 0.0
    %627 = vmatpush1.msra.mxu0 %v382
    %628 = vmatprep.subr.mxu0 0.0
    %629 = vmatpush2.msra.mxu0 0.0
    %630 = vmatprep.subr.mxu0 0.0
    %631 = vmatpush2.msra.mxu0 0.0
    %632 = vmatprep.subr.mxu0 0.0
    %633 = vmatpush2.msra.mxu0 0.0
    %634 = vmatprep.subr.mxu0 0.0
    %635 = vmatpush2.msra.mxu0 0.0
    %636 = vmatprep.subr.mxu0 0.0
    %637 = vmatpush2.msra.mxu0 0.0
    %638 = vmatprep.subr.mxu0 0.0
    %639 = vmatpush2.msra.mxu0 0.0
    %640 = vmatprep.subr.mxu0 0.0
    %641 = vmatpush2.msra.mxu0 0.0
    %642 = vmatprep.subr.mxu0 0.0
    %643 = vmatpush2.msra.mxu0 0.0
    %644 = vmatprep.subr.mxu0 0.0
    %645 = vmatpush2.msra.mxu0 0.0
    %646 = vmatprep.subr.mxu0 0.0
    %647 = vmatpush2.msra.mxu0 0.0
    %648 = vmatprep.subr.mxu0 0.0
    %649 = vmatpush2.msra.mxu0 0.0
    %650 = vmatprep.subr.mxu0 0.0
    %651 = vmatpush2.msra.mxu0 0.0
    %652 = vmatprep.subr.mxu0 0.0
    %653 = vmatpush2.msra.mxu0 0.0
    %654 = vmatprep.subr.mxu0 0.0
    %655 = vmatpush2.msra.mxu0 0.0
    %656 = vmatprep.subr.mxu0 0.0
    %657 = vmatpush2.msra.mxu0 0.0
    %658 = vmatprep.subr.mxu0 0.0
    %659 = vmatpush2.msra.mxu0 0.0
    %660 = vmatprep.mubr.f32.mxu0 0.0
    %661 = vmatmul.mubr.f32.gmra.mxu0 %v585
    %v662 = vpop.f32.mrf.mxu0
    %v663 = vadd.f32 0.0, %v662
    %v664 = vpop.f32.mrf.mxu0
    %665 = vmatprep.mubr.f32.mxu0 0.0
    %666 = vmatmul.mubr.f32.gmra.mxu0 %v588
    %v667 = vpop.f32.mrf.mxu0
    %v668 = vadd.f32 0.0, %v667
    %v669 = vpop.f32.mrf.mxu0
    %670 = vmatprep.mubr.f32.mxu0 0.0
    %671 = vmatmul.mubr.f32.gmra.mxu0 %v591
    %v672 = vpop.f32.mrf.mxu0
    %v673 = vadd.f32 0.0, %v672
    %v674 = vpop.f32.mrf.mxu0
    %675 = vmatprep.mubr.f32.mxu0 0.0
    %676 = vmatmul.mubr.f32.gmra.mxu0 %v594
    %v677 = vpop.f32.mrf.mxu0
    %v678 = vadd.f32 0.0, %v677
    %v679 = vpop.f32.mrf.mxu0
    %680 = vdwg.mxu0
    %681 = vrot.lane.b32.xlu0 %v380, 96
    %v682 = vpop.permute.xlu0 %681
    %683 = vrot.lane.b32.xlu0 %v386, 96
    %v684 = vpop.permute.xlu0 %683
    %685 = vrot.lane.b32.xlu0 %v392, 96
    %v686 = vpop.permute.xlu0 %685
    %687 = vrot.lane.b32.xlu0 %v398, 96
    %v688 = vpop.permute.xlu0 %687
    %689 = vrot.lane.b32.xlu0 %v380, 32
    %v690 = vpop.permute.xlu0 %689
    %691 = vrot.lane.b32.xlu0 %v386, 32
    %v692 = vpop.permute.xlu0 %691
    %693 = vrot.lane.b32.xlu0 %v392, 32
    %v694 = vpop.permute.xlu0 %693
    %695 = vrot.lane.b32.xlu0 %v398, 32
    %v696 = vpop.permute.xlu0 %695
    %v697 = vsel %vm438, %v682, 0
    %v699 = vsel %vm438, %v684, 0
    %v701 = vsel %vm438, %v686, 0
    %v703 = vsel %vm438, %v688, 0
    %v705 = vsel %vm438, %v690, 0
    %v707 = vsel %vm438, %v692, 0
    %v709 = vsel %vm438, %v694, 0
    %v711 = vsel %vm438, %v696, 0
    %713 = vmatprep.subr.mxu0 0.0
    %714 = vmatpush1.xpose.msra.mxu0 0.0
    %715 = vmatprep.subr.mxu0 0.0
    %716 = vmatpush1.xpose.msra.mxu0 0.0
    %717 = vmatprep.subr.mxu0 0.0
    %718 = vmatpush1.xpose.msra.mxu0 0.0
    %719 = vmatprep.subr.mxu0 0.0
    %720 = vmatpush1.xpose.msra.mxu0 0.0
    %721 = vmatprep.subr.mxu0 0.0
    %722 = vmatpush1.xpose.msra.mxu0 0.0
    %723 = vmatprep.subr.mxu0 0.0
    %724 = vmatpush1.xpose.msra.mxu0 0.0
    %725 = vmatprep.subr.mxu0 0.0
    %726 = vmatpush1.xpose.msra.mxu0 0.0
    %727 = vmatprep.subr.mxu0 0.0
    %728 = vmatpush1.xpose.msra.mxu0 0.0
    %729 = vmatprep.subr.mxu0 0.0
    %730 = vmatpush1.xpose.msra.mxu0 0.0
    %731 = vmatprep.subr.mxu0 0.0
    %732 = vmatpush1.xpose.msra.mxu0 0.0
    %733 = vmatprep.subr.mxu0 0.0
    %734 = vmatpush1.xpose.msra.mxu0 0.0
    %735 = vmatprep.subr.mxu0 0.0
    %736 = vmatpush1.xpose.msra.mxu0 0.0
    %737 = vmatprep.subr.mxu0 0.0
    %738 = vmatpush1.xpose.msra.mxu0 %v711
    %739 = vmatprep.subr.mxu0 0.0
    %740 = vmatpush1.xpose.msra.mxu0 %v709
    %741 = vmatprep.subr.mxu0 0.0
    %742 = vmatpush1.xpose.msra.mxu0 %v707
    %743 = vmatprep.subr.mxu0 0.0
    %744 = vmatpush1.xpose.msra.mxu0 %v705
    %745 = vmatprep.subr.mxu0 0.0
    %746 = vmatpush2.xpose.msra.mxu0 0.0
    %747 = vmatprep.subr.mxu0 0.0
    %748 = vmatpush2.xpose.msra.mxu0 0.0
    %749 = vmatprep.subr.mxu0 0.0
    %750 = vmatpush2.xpose.msra.mxu0 0.0
    %751 = vmatprep.subr.mxu0 0.0
    %752 = vmatpush2.xpose.msra.mxu0 0.0
    %753 = vmatprep.subr.mxu0 0.0
    %754 = vmatpush2.xpose.msra.mxu0 0.0
    %755 = vmatprep.subr.mxu0 0.0
    %756 = vmatpush2.xpose.msra.mxu0 0.0
    %757 = vmatprep.subr.mxu0 0.0
    %758 = vmatpush2.xpose.msra.mxu0 0.0
    %759 = vmatprep.subr.mxu0 0.0
    %760 = vmatpush2.xpose.msra.mxu0 0.0
    %761 = vmatprep.subr.mxu0 0.0
    %762 = vmatpush2.xpose.msra.mxu0 0.0
    %763 = vmatprep.subr.mxu0 0.0
    %764 = vmatpush2.xpose.msra.mxu0 0.0
    %765 = vmatprep.subr.mxu0 0.0
    %766 = vmatpush2.xpose.msra.mxu0 0.0
    %767 = vmatprep.subr.mxu0 0.0
    %768 = vmatpush2.xpose.msra.mxu0 0.0
    %769 = vmatprep.subr.mxu0 0.0
    %770 = vmatpush2.xpose.msra.mxu0 0.0
    %771 = vmatprep.subr.mxu0 0.0
    %772 = vmatpush2.xpose.msra.mxu0 0.0
    %773 = vmatprep.subr.mxu0 0.0
    %774 = vmatpush2.xpose.msra.mxu0 0.0
    %775 = vmatprep.subr.mxu0 0.0
    %776 = vmatpush2.xpose.msra.mxu0 0.0
    %777 = vmatprep.mubr.f32.mxu0 0.0
    %778 = vmatmul.mubr.f32.gmra.mxu0 %v697
    %v779 = vpop.f32.mrf.mxu0
    %v780 = vadd.f32 %v220, %v779
    %v781 = vpop.f32.mrf.mxu0
    %782 = vmatprep.mubr.f32.mxu0 0.0
    %783 = vmatmul.mubr.f32.gmra.mxu0 %v699
    %v784 = vpop.f32.mrf.mxu0
    %v785 = vadd.f32 %v220, %v784
    %v786 = vpop.f32.mrf.mxu0
    %787 = vmatprep.mubr.f32.mxu0 0.0
    %788 = vmatmul.mubr.f32.gmra.mxu0 %v701
    %v789 = vpop.f32.mrf.mxu0
    %v790 = vadd.f32 %v220, %v789
    %v791 = vpop.f32.mrf.mxu0
    %792 = vmatprep.mubr.f32.mxu0 0.0
    %793 = vmatmul.mubr.f32.gmra.mxu0 %v703
    %v794 = vpop.f32.mrf.mxu0
    %v795 = vadd.f32 %v220, %v794
    %v796 = vpop.f32.mrf.mxu0
    %797 = vdwg.mxu0
    %v798 = vsel %vm438, %v780, -inf
    %799 = vmax.xlane.f32.xlu0 %v798
    %v800 = vpop.xlane.xlu0 %799
    %v801 = vsel %vm438, %v785, -inf
    %802 = vmax.xlane.f32.xlu0 %v801
    %v803 = vpop.xlane.xlu0 %802
    %v804 = vsel %vm438, %v790, -inf
    %805 = vmax.xlane.f32.xlu0 %v804
    %v806 = vpop.xlane.xlu0 %805
    %v807 = vsel %vm438, %v795, -inf
    %808 = vmax.xlane.f32.xlu0 %v807
    %v809 = vpop.xlane.xlu0 %808
    %v810 = vsub.f32 %v780, %v800
    %v811 = vsub.f32 %v785, %v803
    %v812 = vsub.f32 %v790, %v806
    %v813 = vsub.f32 %v795, %v809
    %v814 = vmul.f32 %v810, 1.442695
    %v815 = vpow.pop %v814
    %v816 = vmul.f32 %v811, 1.442695
    %v817 = vpow.pop %v816
    %v818 = vmul.f32 %v812, 1.442695
    %v819 = vpow.pop %v818
    %v820 = vmul.f32 %v813, 1.442695
    %v821 = vpow.pop %v820
    %v822 = vsel %vm438, %v815, 0.0
    %823 = vadd.xlane.f32.xlu0 %v822
    %v824 = vpop.xlane.xlu0 %823
    %v825 = vsel %vm438, %v817, 0.0
    %826 = vadd.xlane.f32.xlu0 %v825
    %v827 = vpop.xlane.xlu0 %826
    %v828 = vsel %vm438, %v819, 0.0
    %829 = vadd.xlane.f32.xlu0 %v828
    %v830 = vpop.xlane.xlu0 %829
    %v831 = vsel %vm438, %v821, 0.0
    %832 = vadd.xlane.f32.xlu0 %v831
    %v833 = vpop.xlane.xlu0 %832
    %v834 = vrcp.pop %v824
    %v835 = vrcp.pop %v827
    %v836 = vrcp.pop %v830
    %v837 = vrcp.pop %v833
    %v838 = vmul.f32 %v815, %v834
    %v839 = vmul.f32 %v817, %v835
    %v840 = vmul.f32 %v819, %v836
    %v841 = vmul.f32 %v821, %v837
    %846 = vrot.lane.b32.xlu0 %v382, 96
    %v847 = vpop.permute.xlu0 %846
    %848 = vrot.lane.b32.xlu0 %v388, 96
    %v849 = vpop.permute.xlu0 %848
    %850 = vrot.lane.b32.xlu0 %v394, 96
    %v851 = vpop.permute.xlu0 %850
    %852 = vrot.lane.b32.xlu0 %v400, 96
    %v853 = vpop.permute.xlu0 %852
    %v859 = vsel %vm438, %v838, 0
    %v862 = vsel %vm438, %v839, 0
    %v865 = vsel %vm438, %v840, 0
    %v868 = vsel %vm438, %v841, 0
    %870 = vmatprep.subr.mxu0 0.0
    %871 = vmatpush1.msra.mxu0 0.0
    %872 = vmatprep.subr.mxu0 0.0
    %873 = vmatpush1.msra.mxu0 0.0
    %874 = vmatprep.subr.mxu0 0.0
    %875 = vmatpush1.msra.mxu0 0.0
    %876 = vmatprep.subr.mxu0 0.0
    %877 = vmatpush1.msra.mxu0 0.0
    %878 = vmatprep.subr.mxu0 0.0
    %879 = vmatpush1.msra.mxu0 0.0
    %880 = vmatprep.subr.mxu0 0.0
    %881 = vmatpush1.msra.mxu0 0.0
    %882 = vmatprep.subr.mxu0 0.0
    %883 = vmatpush1.msra.mxu0 0.0
    %884 = vmatprep.subr.mxu0 0.0
    %885 = vmatpush1.msra.mxu0 0.0
    %886 = vmatprep.subr.mxu0 0.0
    %887 = vmatpush1.msra.mxu0 0.0
    %888 = vmatprep.subr.mxu0 0.0
    %889 = vmatpush1.msra.mxu0 0.0
    %890 = vmatprep.subr.mxu0 0.0
    %891 = vmatpush1.msra.mxu0 0.0
    %892 = vmatprep.subr.mxu0 0.0
    %893 = vmatpush1.msra.mxu0 0.0
    %894 = vmatprep.subr.mxu0 0.0
    %895 = vmatpush1.msra.mxu0 %v853
    %896 = vmatprep.subr.mxu0 0.0
    %897 = vmatpush1.msra.mxu0 %v851
    %898 = vmatprep.subr.mxu0 0.0
    %899 = vmatpush1.msra.mxu0 %v849
    %900 = vmatprep.subr.mxu0 0.0
    %901 = vmatpush1.msra.mxu0 %v847
    %902 = vmatprep.subr.mxu0 0.0
    %903 = vmatpush2.msra.mxu0 0.0
    %904 = vmatprep.subr.mxu0 0.0
    %905 = vmatpush2.msra.mxu0 0.0
    %906 = vmatprep.subr.mxu0 0.0
    %907 = vmatpush2.msra.mxu0 0.0
    %908 = vmatprep.subr.mxu0 0.0
    %909 = vmatpush2.msra.mxu0 0.0
    %910 = vmatprep.subr.mxu0 0.0
    %911 = vmatpush2.msra.mxu0 0.0
    %912 = vmatprep.subr.mxu0 0.0
    %913 = vmatpush2.msra.mxu0 0.0
    %914 = vmatprep.subr.mxu0 0.0
    %915 = vmatpush2.msra.mxu0 0.0
    %916 = vmatprep.subr.mxu0 0.0
    %917 = vmatpush2.msra.mxu0 0.0
    %918 = vmatprep.subr.mxu0 0.0
    %919 = vmatpush2.msra.mxu0 0.0
    %920 = vmatprep.subr.mxu0 0.0
    %921 = vmatpush2.msra.mxu0 0.0
    %922 = vmatprep.subr.mxu0 0.0
    %923 = vmatpush2.msra.mxu0 0.0
    %924 = vmatprep.subr.mxu0 0.0
    %925 = vmatpush2.msra.mxu0 0.0
    %926 = vmatprep.subr.mxu0 0.0
    %927 = vmatpush2.msra.mxu0 0.0
    %928 = vmatprep.subr.mxu0 0.0
    %929 = vmatpush2.msra.mxu0 0.0
    %930 = vmatprep.subr.mxu0 0.0
    %931 = vmatpush2.msra.mxu0 0.0
    %932 = vmatprep.subr.mxu0 0.0
    %933 = vmatpush2.msra.mxu0 0.0
    %934 = vmatprep.mubr.f32.mxu0 0.0
    %935 = vmatmul.mubr.f32.gmra.mxu0 %v859
    %v936 = vpop.f32.mrf.mxu0
    %v937 = vadd.f32 0.0, %v936
    %v938 = vpop.f32.mrf.mxu0
    %939 = vmatprep.mubr.f32.mxu0 0.0
    %940 = vmatmul.mubr.f32.gmra.mxu0 %v862
    %v941 = vpop.f32.mrf.mxu0
    %v942 = vadd.f32 0.0, %v941
    %v943 = vpop.f32.mrf.mxu0
    %944 = vmatprep.mubr.f32.mxu0 0.0
    %945 = vmatmul.mubr.f32.gmra.mxu0 %v865
    %v946 = vpop.f32.mrf.mxu0
    %v947 = vadd.f32 0.0, %v946
    %v948 = vpop.f32.mrf.mxu0
    %949 = vmatprep.mubr.f32.mxu0 0.0
    %950 = vmatmul.mubr.f32.gmra.mxu0 %v868
    %v951 = vpop.f32.mrf.mxu0
    %v952 = vadd.f32 0.0, %v951
    %v953 = vpop.f32.mrf.mxu0
    %954 = vdwg.mxu0
    %959 = vrot.lane.b32.xlu0 %v937, 32
    %v960 = vpop.permute.xlu0 %959
    %961 = vrot.lane.b32.xlu0 %v942, 32
    %v962 = vpop.permute.xlu0 %961
    %963 = vrot.lane.b32.xlu0 %v947, 32
    %v964 = vpop.permute.xlu0 %963
    %965 = vrot.lane.b32.xlu0 %v952, 32
    %v966 = vpop.permute.xlu0 %965
    %v971 = vsel %vm438, %v663, %v960
    %v972 = vsel %vm438, %v668, %v962
    %v973 = vsel %vm438, %v673, %v964
    %v974 = vsel %vm438, %v678, %v966
    %979 = vrot.lane.b32.xlu0 %v404, 64
    %v980 = vpop.permute.xlu0 %979
    %981 = vrot.lane.b32.xlu0 %v410, 64
    %v982 = vpop.permute.xlu0 %981
    %983 = vrot.lane.b32.xlu0 %v416, 64
    %v984 = vpop.permute.xlu0 %983
    %985 = vrot.lane.b32.xlu0 %v422, 64
    %v986 = vpop.permute.xlu0 %985
    %v987 = vsel %vm438, %v404, 0
    %v989 = vsel %vm438, %v410, 0
    %v991 = vsel %vm438, %v416, 0
    %v993 = vsel %vm438, %v422, 0
    %v995 = vsel %vm438, %v980, 0
    %v997 = vsel %vm438, %v982, 0
    %v999 = vsel %vm438, %v984, 0
    %v1001 = vsel %vm438, %v986, 0
    %1003 = vmatprep.subr.mxu0 0.0
    %1004 = vmatpush1.xpose.msra.mxu0 0.0
    %1005 = vmatprep.subr.mxu0 0.0
    %1006 = vmatpush1.xpose.msra.mxu0 0.0
    %1007 = vmatprep.subr.mxu0 0.0
    %1008 = vmatpush1.xpose.msra.mxu0 0.0
    %1009 = vmatprep.subr.mxu0 0.0
    %1010 = vmatpush1.xpose.msra.mxu0 0.0
    %1011 = vmatprep.subr.mxu0 0.0
    %1012 = vmatpush1.xpose.msra.mxu0 0.0
    %1013 = vmatprep.subr.mxu0 0.0
    %1014 = vmatpush1.xpose.msra.mxu0 0.0
    %1015 = vmatprep.subr.mxu0 0.0
    %1016 = vmatpush1.xpose.msra.mxu0 0.0
    %1017 = vmatprep.subr.mxu0 0.0
    %1018 = vmatpush1.xpose.msra.mxu0 0.0
    %1019 = vmatprep.subr.mxu0 0.0
    %1020 = vmatpush1.xpose.msra.mxu0 0.0
    %1021 = vmatprep.subr.mxu0 0.0
    %1022 = vmatpush1.xpose.msra.mxu0 0.0
    %1023 = vmatprep.subr.mxu0 0.0
    %1024 = vmatpush1.xpose.msra.mxu0 0.0
    %1025 = vmatprep.subr.mxu0 0.0
    %1026 = vmatpush1.xpose.msra.mxu0 0.0
    %1027 = vmatprep.subr.mxu0 0.0
    %1028 = vmatpush1.xpose.msra.mxu0 %v1001
    %1029 = vmatprep.subr.mxu0 0.0
    %1030 = vmatpush1.xpose.msra.mxu0 %v999
    %1031 = vmatprep.subr.mxu0 0.0
    %1032 = vmatpush1.xpose.msra.mxu0 %v997
    %1033 = vmatprep.subr.mxu0 0.0
    %1034 = vmatpush1.xpose.msra.mxu0 %v995
    %1035 = vmatprep.subr.mxu0 0.0
    %1036 = vmatpush2.xpose.msra.mxu0 0.0
    %1037 = vmatprep.subr.mxu0 0.0
    %1038 = vmatpush2.xpose.msra.mxu0 0.0
    %1039 = vmatprep.subr.mxu0 0.0
    %1040 = vmatpush2.xpose.msra.mxu0 0.0
    %1041 = vmatprep.subr.mxu0 0.0
    %1042 = vmatpush2.xpose.msra.mxu0 0.0
    %1043 = vmatprep.subr.mxu0 0.0
    %1044 = vmatpush2.xpose.msra.mxu0 0.0
    %1045 = vmatprep.subr.mxu0 0.0
    %1046 = vmatpush2.xpose.msra.mxu0 0.0
    %1047 = vmatprep.subr.mxu0 0.0
    %1048 = vmatpush2.xpose.msra.mxu0 0.0
    %1049 = vmatprep.subr.mxu0 0.0
    %1050 = vmatpush2.xpose.msra.mxu0 0.0
    %1051 = vmatprep.subr.mxu0 0.0
    %1052 = vmatpush2.xpose.msra.mxu0 0.0
    %1053 = vmatprep.subr.mxu0 0.0
    %1054 = vmatpush2.xpose.msra.mxu0 0.0
    %1055 = vmatprep.subr.mxu0 0.0
    %1056 = vmatpush2.xpose.msra.mxu0 0.0
    %1057 = vmatprep.subr.mxu0 0.0
    %1058 = vmatpush2.xpose.msra.mxu0 0.0
    %1059 = vmatprep.subr.mxu0 0.0
    %1060 = vmatpush2.xpose.msra.mxu0 0.0
    %1061 = vmatprep.subr.mxu0 0.0
    %1062 = vmatpush2.xpose.msra.mxu0 0.0
    %1063 = vmatprep.subr.mxu0 0.0
    %1064 = vmatpush2.xpose.msra.mxu0 0.0
    %1065 = vmatprep.subr.mxu0 0.0
    %1066 = vmatpush2.xpose.msra.mxu0 0.0
    %1067 = vmatprep.mubr.f32.mxu0 0.0
    %1068 = vmatmul.mubr.f32.gmra.mxu0 %v987
    %v1069 = vpop.f32.mrf.mxu0
    %v1070 = vadd.f32 %v220, %v1069
    %v1071 = vpop.f32.mrf.mxu0
    %1072 = vmatprep.mubr.f32.mxu0 0.0
    %1073 = vmatmul.mubr.f32.gmra.mxu0 %v989
    %v1074 = vpop.f32.mrf.mxu0
    %v1075 = vadd.f32 %v220, %v1074
    %v1076 = vpop.f32.mrf.mxu0
    %1077 = vmatprep.mubr.f32.mxu0 0.0
    %1078 = vmatmul.mubr.f32.gmra.mxu0 %v991
    %v1079 = vpop.f32.mrf.mxu0
    %v1080 = vadd.f32 %v220, %v1079
    %v1081 = vpop.f32.mrf.mxu0
    %1082 = vmatprep.mubr.f32.mxu0 0.0
    %1083 = vmatmul.mubr.f32.gmra.mxu0 %v993
    %v1084 = vpop.f32.mrf.mxu0
    %v1085 = vadd.f32 %v220, %v1084
    %v1086 = vpop.f32.mrf.mxu0
    %1087 = vdwg.mxu0
    %v1088 = vsel %vm438, %v1070, -inf
    %1089 = vmax.xlane.f32.xlu0 %v1088
    %v1090 = vpop.xlane.xlu0 %1089
    %v1091 = vsel %vm438, %v1075, -inf
    %1092 = vmax.xlane.f32.xlu0 %v1091
    %v1093 = vpop.xlane.xlu0 %1092
    %v1094 = vsel %vm438, %v1080, -inf
    %1095 = vmax.xlane.f32.xlu0 %v1094
    %v1096 = vpop.xlane.xlu0 %1095
    %v1097 = vsel %vm438, %v1085, -inf
    %1098 = vmax.xlane.f32.xlu0 %v1097
    %v1099 = vpop.xlane.xlu0 %1098
    %v1100 = vsub.f32 %v1070, %v1090
    %v1101 = vsub.f32 %v1075, %v1093
    %v1102 = vsub.f32 %v1080, %v1096
    %v1103 = vsub.f32 %v1085, %v1099
    %v1104 = vmul.f32 %v1100, 1.442695
    %v1105 = vpow.pop %v1104
    %v1106 = vmul.f32 %v1101, 1.442695
    %v1107 = vpow.pop %v1106
    %v1108 = vmul.f32 %v1102, 1.442695
    %v1109 = vpow.pop %v1108
    %v1110 = vmul.f32 %v1103, 1.442695
    %v1111 = vpow.pop %v1110
    %v1112 = vsel %vm438, %v1105, 0.0
    %1113 = vadd.xlane.f32.xlu0 %v1112
    %v1114 = vpop.xlane.xlu0 %1113
    %v1115 = vsel %vm438, %v1107, 0.0
    %1116 = vadd.xlane.f32.xlu0 %v1115
    %v1117 = vpop.xlane.xlu0 %1116
    %v1118 = vsel %vm438, %v1109, 0.0
    %1119 = vadd.xlane.f32.xlu0 %v1118
    %v1120 = vpop.xlane.xlu0 %1119
    %v1121 = vsel %vm438, %v1111, 0.0
    %1122 = vadd.xlane.f32.xlu0 %v1121
    %v1123 = vpop.xlane.xlu0 %1122
    %v1124 = vrcp.pop %v1114
    %v1125 = vrcp.pop %v1117
    %v1126 = vrcp.pop %v1120
    %v1127 = vrcp.pop %v1123
    %v1128 = vmul.f32 %v1105, %v1124
    %v1129 = vmul.f32 %v1107, %v1125
    %v1130 = vmul.f32 %v1109, %v1126
    %v1131 = vmul.f32 %v1111, %v1127
    %v1133 = vsel %vm438, %v1128, 0
    %v1136 = vsel %vm438, %v1129, 0
    %v1139 = vsel %vm438, %v1130, 0
    %v1142 = vsel %vm438, %v1131, 0
    %1144 = vmatprep.subr.mxu0 0.0
    %1145 = vmatpush1.msra.mxu0 0.0
    %1146 = vmatprep.subr.mxu0 0.0
    %1147 = vmatpush1.msra.mxu0 0.0
    %1148 = vmatprep.subr.mxu0 0.0
    %1149 = vmatpush1.msra.mxu0 0.0
    %1150 = vmatprep.subr.mxu0 0.0
    %1151 = vmatpush1.msra.mxu0 0.0
    %1152 = vmatprep.subr.mxu0 0.0
    %1153 = vmatpush1.msra.mxu0 0.0
    %1154 = vmatprep.subr.mxu0 0.0
    %1155 = vmatpush1.msra.mxu0 0.0
    %1156 = vmatprep.subr.mxu0 0.0
    %1157 = vmatpush1.msra.mxu0 0.0
    %1158 = vmatprep.subr.mxu0 0.0
    %1159 = vmatpush1.msra.mxu0 0.0
    %1160 = vmatprep.subr.mxu0 0.0
    %1161 = vmatpush1.msra.mxu0 0.0
    %1162 = vmatprep.subr.mxu0 0.0
    %1163 = vmatpush1.msra.mxu0 0.0
    %1164 = vmatprep.subr.mxu0 0.0
    %1165 = vmatpush1.msra.mxu0 0.0
    %1166 = vmatprep.subr.mxu0 0.0
    %1167 = vmatpush1.msra.mxu0 0.0
    %1168 = vmatprep.subr.mxu0 0.0
    %1169 = vmatpush1.msra.mxu0 %v424
    %1170 = vmatprep.subr.mxu0 0.0
    %1171 = vmatpush1.msra.mxu0 %v418
    %1172 = vmatprep.subr.mxu0 0.0
    %1173 = vmatpush1.msra.mxu0 %v412
    %1174 = vmatprep.subr.mxu0 0.0
    %1175 = vmatpush1.msra.mxu0 %v406
    %1176 = vmatprep.subr.mxu0 0.0
    %1177 = vmatpush2.msra.mxu0 0.0
    %1178 = vmatprep.subr.mxu0 0.0
    %1179 = vmatpush2.msra.mxu0 0.0
    %1180 = vmatprep.subr.mxu0 0.0
    %1181 = vmatpush2.msra.mxu0 0.0
    %1182 = vmatprep.subr.mxu0 0.0
    %1183 = vmatpush2.msra.mxu0 0.0
    %1184 = vmatprep.subr.mxu0 0.0
    %1185 = vmatpush2.msra.mxu0 0.0
    %1186 = vmatprep.subr.mxu0 0.0
    %1187 = vmatpush2.msra.mxu0 0.0
    %1188 = vmatprep.subr.mxu0 0.0
    %1189 = vmatpush2.msra.mxu0 0.0
    %1190 = vmatprep.subr.mxu0 0.0
    %1191 = vmatpush2.msra.mxu0 0.0
    %1192 = vmatprep.subr.mxu0 0.0
    %1193 = vmatpush2.msra.mxu0 0.0
    %1194 = vmatprep.subr.mxu0 0.0
    %1195 = vmatpush2.msra.mxu0 0.0
    %1196 = vmatprep.subr.mxu0 0.0
    %1197 = vmatpush2.msra.mxu0 0.0
    %1198 = vmatprep.subr.mxu0 0.0
    %1199 = vmatpush2.msra.mxu0 0.0
    %1200 = vmatprep.subr.mxu0 0.0
    %1201 = vmatpush2.msra.mxu0 0.0
    %1202 = vmatprep.subr.mxu0 0.0
    %1203 = vmatpush2.msra.mxu0 0.0
    %1204 = vmatprep.subr.mxu0 0.0
    %1205 = vmatpush2.msra.mxu0 0.0
    %1206 = vmatprep.subr.mxu0 0.0
    %1207 = vmatpush2.msra.mxu0 0.0
    %1208 = vmatprep.mubr.f32.mxu0 0.0
    %1209 = vmatmul.mubr.f32.gmra.mxu0 %v1133
    %v1210 = vpop.f32.mrf.mxu0
    %v1211 = vadd.f32 0.0, %v1210
    %v1212 = vpop.f32.mrf.mxu0
    %1213 = vmatprep.mubr.f32.mxu0 0.0
    %1214 = vmatmul.mubr.f32.gmra.mxu0 %v1136
    %v1215 = vpop.f32.mrf.mxu0
    %v1216 = vadd.f32 0.0, %v1215
    %v1217 = vpop.f32.mrf.mxu0
    %1218 = vmatprep.mubr.f32.mxu0 0.0
    %1219 = vmatmul.mubr.f32.gmra.mxu0 %v1139
    %v1220 = vpop.f32.mrf.mxu0
    %v1221 = vadd.f32 0.0, %v1220
    %v1222 = vpop.f32.mrf.mxu0
    %1223 = vmatprep.mubr.f32.mxu0 0.0
    %1224 = vmatmul.mubr.f32.gmra.mxu0 %v1142
    %v1225 = vpop.f32.mrf.mxu0
    %v1226 = vadd.f32 0.0, %v1225
    %v1227 = vpop.f32.mrf.mxu0
    %1228 = vdwg.mxu0
    %1229 = vrot.lane.b32.xlu0 %v404, 96
    %v1230 = vpop.permute.xlu0 %1229
    %1231 = vrot.lane.b32.xlu0 %v410, 96
    %v1232 = vpop.permute.xlu0 %1231
    %1233 = vrot.lane.b32.xlu0 %v416, 96
    %v1234 = vpop.permute.xlu0 %1233
    %1235 = vrot.lane.b32.xlu0 %v422, 96
    %v1236 = vpop.permute.xlu0 %1235
    %1237 = vrot.lane.b32.xlu0 %v404, 32
    %v1238 = vpop.permute.xlu0 %1237
    %1239 = vrot.lane.b32.xlu0 %v410, 32
    %v1240 = vpop.permute.xlu0 %1239
    %1241 = vrot.lane.b32.xlu0 %v416, 32
    %v1242 = vpop.permute.xlu0 %1241
    %1243 = vrot.lane.b32.xlu0 %v422, 32
    %v1244 = vpop.permute.xlu0 %1243
    %v1245 = vsel %vm438, %v1230, 0
    %v1247 = vsel %vm438, %v1232, 0
    %v1249 = vsel %vm438, %v1234, 0
    %v1251 = vsel %vm438, %v1236, 0
    %v1253 = vsel %vm438, %v1238, 0
    %v1255 = vsel %vm438, %v1240, 0
    %v1257 = vsel %vm438, %v1242, 0
    %v1259 = vsel %vm438, %v1244, 0
    %1261 = vmatprep.subr.mxu0 0.0
    %1262 = vmatpush1.xpose.msra.mxu0 0.0
    %1263 = vmatprep.subr.mxu0 0.0
    %1264 = vmatpush1.xpose.msra.mxu0 0.0
    %1265 = vmatprep.subr.mxu0 0.0
    %1266 = vmatpush1.xpose.msra.mxu0 0.0
    %1267 = vmatprep.subr.mxu0 0.0
    %1268 = vmatpush1.xpose.msra.mxu0 0.0
    %1269 = vmatprep.subr.mxu0 0.0
    %1270 = vmatpush1.xpose.msra.mxu0 0.0
    %1271 = vmatprep.subr.mxu0 0.0
    %1272 = vmatpush1.xpose.msra.mxu0 0.0
    %1273 = vmatprep.subr.mxu0 0.0
    %1274 = vmatpush1.xpose.msra.mxu0 0.0
    %1275 = vmatprep.subr.mxu0 0.0
    %1276 = vmatpush1.xpose.msra.mxu0 0.0
    %1277 = vmatprep.subr.mxu0 0.0
    %1278 = vmatpush1.xpose.msra.mxu0 0.0
    %1279 = vmatprep.subr.mxu0 0.0
    %1280 = vmatpush1.xpose.msra.mxu0 0.0
    %1281 = vmatprep.subr.mxu0 0.0
    %1282 = vmatpush1.xpose.msra.mxu0 0.0
    %1283 = vmatprep.subr.mxu0 0.0
    %1284 = vmatpush1.xpose.msra.mxu0 0.0
    %1285 = vmatprep.subr.mxu0 0.0
    %1286 = vmatpush1.xpose.msra.mxu0 %v1259
    %1287 = vmatprep.subr.mxu0 0.0
    %1288 = vmatpush1.xpose.msra.mxu0 %v1257
    %1289 = vmatprep.subr.mxu0 0.0
    %1290 = vmatpush1.xpose.msra.mxu0 %v1255
    %1291 = vmatprep.subr.mxu0 0.0
    %1292 = vmatpush1.xpose.msra.mxu0 %v1253
    %1293 = vmatprep.subr.mxu0 0.0
    %1294 = vmatpush2.xpose.msra.mxu0 0.0
    %1295 = vmatprep.subr.mxu0 0.0
    %1296 = vmatpush2.xpose.msra.mxu0 0.0
    %1297 = vmatprep.subr.mxu0 0.0
    %1298 = vmatpush2.xpose.msra.mxu0 0.0
    %1299 = vmatprep.subr.mxu0 0.0
    %1300 = vmatpush2.xpose.msra.mxu0 0.0
    %1301 = vmatprep.subr.mxu0 0.0
    %1302 = vmatpush2.xpose.msra.mxu0 0.0
    %1303 = vmatprep.subr.mxu0 0.0
    %1304 = vmatpush2.xpose.msra.mxu0 0.0
    %1305 = vmatprep.subr.mxu0 0.0
    %1306 = vmatpush2.xpose.msra.mxu0 0.0
    %1307 = vmatprep.subr.mxu0 0.0
    %1308 = vmatpush2.xpose.msra.mxu0 0.0
    %1309 = vmatprep.subr.mxu0 0.0
    %1310 = vmatpush2.xpose.msra.mxu0 0.0
    %1311 = vmatprep.subr.mxu0 0.0
    %1312 = vmatpush2.xpose.msra.mxu0 0.0
    %1313 = vmatprep.subr.mxu0 0.0
    %1314 = vmatpush2.xpose.msra.mxu0 0.0
    %1315 = vmatprep.subr.mxu0 0.0
    %1316 = vmatpush2.xpose.msra.mxu0 0.0
    %1317 = vmatprep.subr.mxu0 0.0
    %1318 = vmatpush2.xpose.msra.mxu0 0.0
    %1319 = vmatprep.subr.mxu0 0.0
    %1320 = vmatpush2.xpose.msra.mxu0 0.0
    %1321 = vmatprep.subr.mxu0 0.0
    %1322 = vmatpush2.xpose.msra.mxu0 0.0
    %1323 = vmatprep.subr.mxu0 0.0
    %1324 = vmatpush2.xpose.msra.mxu0 0.0
    %1325 = vmatprep.mubr.f32.mxu0 0.0
    %1326 = vmatmul.mubr.f32.gmra.mxu0 %v1245
    %v1327 = vpop.f32.mrf.mxu0
    %v1328 = vadd.f32 %v220, %v1327
    %v1329 = vpop.f32.mrf.mxu0
    %1330 = vmatprep.mubr.f32.mxu0 0.0
    %1331 = vmatmul.mubr.f32.gmra.mxu0 %v1247
    %v1332 = vpop.f32.mrf.mxu0
    %v1333 = vadd.f32 %v220, %v1332
    %v1334 = vpop.f32.mrf.mxu0
    %1335 = vmatprep.mubr.f32.mxu0 0.0
    %1336 = vmatmul.mubr.f32.gmra.mxu0 %v1249
    %v1337 = vpop.f32.mrf.mxu0
    %v1338 = vadd.f32 %v220, %v1337
    %v1339 = vpop.f32.mrf.mxu0
    %1340 = vmatprep.mubr.f32.mxu0 0.0
    %1341 = vmatmul.mubr.f32.gmra.mxu0 %v1251
    %v1342 = vpop.f32.mrf.mxu0
    %v1343 = vadd.f32 %v220, %v1342
    %v1344 = vpop.f32.mrf.mxu0
    %1345 = vdwg.mxu0
    %v1346 = vsel %vm438, %v1328, -inf
    %1347 = vmax.xlane.f32.xlu0 %v1346
    %v1348 = vpop.xlane.xlu0 %1347
    %v1349 = vsel %vm438, %v1333, -inf
    %1350 = vmax.xlane.f32.xlu0 %v1349
    %v1351 = vpop.xlane.xlu0 %1350
    %v1352 = vsel %vm438, %v1338, -inf
    %1353 = vmax.xlane.f32.xlu0 %v1352
    %v1354 = vpop.xlane.xlu0 %1353
    %v1355 = vsel %vm438, %v1343, -inf
    %1356 = vmax.xlane.f32.xlu0 %v1355
    %v1357 = vpop.xlane.xlu0 %1356
    %v1358 = vsub.f32 %v1328, %v1348
    %v1359 = vsub.f32 %v1333, %v1351
    %v1360 = vsub.f32 %v1338, %v1354
    %v1361 = vsub.f32 %v1343, %v1357
    %v1362 = vmul.f32 %v1358, 1.442695
    %v1363 = vpow.pop %v1362
    %v1364 = vmul.f32 %v1359, 1.442695
    %v1365 = vpow.pop %v1364
    %v1366 = vmul.f32 %v1360, 1.442695
    %v1367 = vpow.pop %v1366
    %v1368 = vmul.f32 %v1361, 1.442695
    %v1369 = vpow.pop %v1368
    %v1370 = vsel %vm438, %v1363, 0.0
    %1371 = vadd.xlane.f32.xlu0 %v1370
    %v1372 = vpop.xlane.xlu0 %1371
    %v1373 = vsel %vm438, %v1365, 0.0
    %1374 = vadd.xlane.f32.xlu0 %v1373
    %v1375 = vpop.xlane.xlu0 %1374
    %v1376 = vsel %vm438, %v1367, 0.0
    %1377 = vadd.xlane.f32.xlu0 %v1376
    %v1378 = vpop.xlane.xlu0 %1377
    %v1379 = vsel %vm438, %v1369, 0.0
    %1380 = vadd.xlane.f32.xlu0 %v1379
    %v1381 = vpop.xlane.xlu0 %1380
    %v1382 = vrcp.pop %v1372
    %v1383 = vrcp.pop %v1375
    %v1384 = vrcp.pop %v1378
    %v1385 = vrcp.pop %v1381
    %v1386 = vmul.f32 %v1363, %v1382
    %v1387 = vmul.f32 %v1365, %v1383
    %v1388 = vmul.f32 %v1367, %v1384
    %v1389 = vmul.f32 %v1369, %v1385
    %1394 = vrot.lane.b32.xlu0 %v406, 96
    %v1395 = vpop.permute.xlu0 %1394
    %1396 = vrot.lane.b32.xlu0 %v412, 96
    %v1397 = vpop.permute.xlu0 %1396
    %1398 = vrot.lane.b32.xlu0 %v418, 96
    %v1399 = vpop.permute.xlu0 %1398
    %1400 = vrot.lane.b32.xlu0 %v424, 96
    %v1401 = vpop.permute.xlu0 %1400
    %v1407 = vsel %vm438, %v1386, 0
    %v1410 = vsel %vm438, %v1387, 0
    %v1413 = vsel %vm438, %v1388, 0
    %v1416 = vsel %vm438, %v1389, 0
    %1418 = vmatprep.subr.mxu0 0.0
    %1419 = vmatpush1.msra.mxu0 0.0
    %1420 = vmatprep.subr.mxu0 0.0
    %1421 = vmatpush1.msra.mxu0 0.0
    %1422 = vmatprep.subr.mxu0 0.0
    %1423 = vmatpush1.msra.mxu0 0.0
    %1424 = vmatprep.subr.mxu0 0.0
    %1425 = vmatpush1.msra.mxu0 0.0
    %1426 = vmatprep.subr.mxu0 0.0
    %1427 = vmatpush1.msra.mxu0 0.0
    %1428 = vmatprep.subr.mxu0 0.0
    %1429 = vmatpush1.msra.mxu0 0.0
    %1430 = vmatprep.subr.mxu0 0.0
    %1431 = vmatpush1.msra.mxu0 0.0
    %1432 = vmatprep.subr.mxu0 0.0
    %1433 = vmatpush1.msra.mxu0 0.0
    %1434 = vmatprep.subr.mxu0 0.0
    %1435 = vmatpush1.msra.mxu0 0.0
    %1436 = vmatprep.subr.mxu0 0.0
    %1437 = vmatpush1.msra.mxu0 0.0
    %1438 = vmatprep.subr.mxu0 0.0
    %1439 = vmatpush1.msra.mxu0 0.0
    %1440 = vmatprep.subr.mxu0 0.0
    %1441 = vmatpush1.msra.mxu0 0.0
    %1442 = vmatprep.subr.mxu0 0.0
    %1443 = vmatpush1.msra.mxu0 %v1401
    %1444 = vmatprep.subr.mxu0 0.0
    %1445 = vmatpush1.msra.mxu0 %v1399
    %1446 = vmatprep.subr.mxu0 0.0
    %1447 = vmatpush1.msra.mxu0 %v1397
    %1448 = vmatprep.subr.mxu0 0.0
    %1449 = vmatpush1.msra.mxu0 %v1395
    %1450 = vmatprep.subr.mxu0 0.0
    %1451 = vmatpush2.msra.mxu0 0.0
    %1452 = vmatprep.subr.mxu0 0.0
    %1453 = vmatpush2.msra.mxu0 0.0
    %1454 = vmatprep.subr.mxu0 0.0
    %1455 = vmatpush2.msra.mxu0 0.0
    %1456 = vmatprep.subr.mxu0 0.0
    %1457 = vmatpush2.msra.mxu0 0.0
    %1458 = vmatprep.subr.mxu0 0.0
    %1459 = vmatpush2.msra.mxu0 0.0
    %1460 = vmatprep.subr.mxu0 0.0
    %1461 = vmatpush2.msra.mxu0 0.0
    %1462 = vmatprep.subr.mxu0 0.0
    %1463 = vmatpush2.msra.mxu0 0.0
    %1464 = vmatprep.subr.mxu0 0.0
    %1465 = vmatpush2.msra.mxu0 0.0
    %1466 = vmatprep.subr.mxu0 0.0
    %1467 = vmatpush2.msra.mxu0 0.0
    %1468 = vmatprep.subr.mxu0 0.0
    %1469 = vmatpush2.msra.mxu0 0.0
    %1470 = vmatprep.subr.mxu0 0.0
    %1471 = vmatpush2.msra.mxu0 0.0
    %1472 = vmatprep.subr.mxu0 0.0
    %1473 = vmatpush2.msra.mxu0 0.0
    %1474 = vmatprep.subr.mxu0 0.0
    %1475 = vmatpush2.msra.mxu0 0.0
    %1476 = vmatprep.subr.mxu0 0.0
    %1477 = vmatpush2.msra.mxu0 0.0
    %1478 = vmatprep.subr.mxu0 0.0
    %1479 = vmatpush2.msra.mxu0 0.0
    %1480 = vmatprep.subr.mxu0 0.0
    %1481 = vmatpush2.msra.mxu0 0.0
    %1482 = vmatprep.mubr.f32.mxu0 0.0
    %1483 = vmatmul.mubr.f32.gmra.mxu0 %v1407
    %v1484 = vpop.f32.mrf.mxu0
    %v1485 = vadd.f32 0.0, %v1484
    %v1486 = vpop.f32.mrf.mxu0
    %1487 = vmatprep.mubr.f32.mxu0 0.0
    %1488 = vmatmul.mubr.f32.gmra.mxu0 %v1410
    %v1489 = vpop.f32.mrf.mxu0
    %v1490 = vadd.f32 0.0, %v1489
    %v1491 = vpop.f32.mrf.mxu0
    %1492 = vmatprep.mubr.f32.mxu0 0.0
    %1493 = vmatmul.mubr.f32.gmra.mxu0 %v1413
    %v1494 = vpop.f32.mrf.mxu0
    %v1495 = vadd.f32 0.0, %v1494
    %v1496 = vpop.f32.mrf.mxu0
    %1497 = vmatprep.mubr.f32.mxu0 0.0
    %1498 = vmatmul.mubr.f32.gmra.mxu0 %v1416
    %v1499 = vpop.f32.mrf.mxu0
    %v1500 = vadd.f32 0.0, %v1499
    %v1501 = vpop.f32.mrf.mxu0
    %1502 = vdwg.mxu0
    %1507 = vrot.lane.b32.xlu0 %v1485, 32
    %v1508 = vpop.permute.xlu0 %1507
    %1509 = vrot.lane.b32.xlu0 %v1490, 32
    %v1510 = vpop.permute.xlu0 %1509
    %1511 = vrot.lane.b32.xlu0 %v1495, 32
    %v1512 = vpop.permute.xlu0 %1511
    %1513 = vrot.lane.b32.xlu0 %v1500, 32
    %v1514 = vpop.permute.xlu0 %1513
    %v1519 = vsel %vm438, %v1211, %v1508
    %v1520 = vsel %vm438, %v1216, %v1510
    %v1521 = vsel %vm438, %v1221, %v1512
    %v1522 = vsel %vm438, %v1226, %v1514
    %v1524 = vlaneseq
    %v1525 = vshrl.u32 %v1524, 7
    %v1526 = vsub.s32 0, %v1525
    %v1527 = vrot.slane %v246, %v1526
    %v1530 = vsel %vm290, %v971, 0
    %v1533 = vsel %vm290, %v972, 0
    %v1536 = vsel %vm290, %v973, 0
    %v1539 = vsel %vm290, %v974, 0
    %v1542 = vsel %vm290, %v1519, 0
    %v1545 = vsel %vm290, %v1520, 0
    %v1548 = vsel %vm290, %v1521, 0
    %v1551 = vsel %vm290, %v1522, 0
    %1553 = vmatprep.subr.mxu0 0.0
    %1554 = vmatpush1.msra.mxu0 0.0
    %1555 = vmatprep.subr.mxu0 0.0
    %1556 = vmatpush1.msra.mxu0 0.0
    %1557 = vmatprep.subr.mxu0 0.0
    %1558 = vmatpush1.msra.mxu0 0.0
    %1559 = vmatprep.subr.mxu0 0.0
    %1560 = vmatpush1.msra.mxu0 0.0
    %1561 = vmatprep.subr.mxu0 0.0
    %1562 = vmatpush1.msra.mxu0 0.0
    %1563 = vmatprep.subr.mxu0 0.0
    %1564 = vmatpush1.msra.mxu0 0.0
    %1565 = vmatprep.subr.mxu0 0.0
    %1566 = vmatpush1.msra.mxu0 0.0
    %1567 = vmatprep.subr.mxu0 0.0
    %1568 = vmatpush1.msra.mxu0 0.0
    %1569 = vmatprep.subr.mxu0 0.0
    %1570 = vmatpush1.msra.mxu0 %v245
    %1571 = vmatprep.subr.mxu0 0.0
    %1572 = vmatpush1.msra.mxu0 %v244
    %1573 = vmatprep.subr.mxu0 0.0
    %1574 = vmatpush1.msra.mxu0 %v243
    %1575 = vmatprep.subr.mxu0 0.0
    %1576 = vmatpush1.msra.mxu0 %v242
    %1577 = vmatprep.subr.mxu0 0.0
    %1578 = vmatpush1.msra.mxu0 %v241
    %1579 = vmatprep.subr.mxu0 0.0
    %1580 = vmatpush1.msra.mxu0 %v240
    %1581 = vmatprep.subr.mxu0 0.0
    %1582 = vmatpush1.msra.mxu0 %v239
    %1583 = vmatprep.subr.mxu0 0.0
    %1584 = vmatpush1.msra.mxu0 %v238
    %1585 = vmatprep.subr.mxu0 0.0
    %1586 = vmatpush2.msra.mxu0 0.0
    %1587 = vmatprep.subr.mxu0 0.0
    %1588 = vmatpush2.msra.mxu0 0.0
    %1589 = vmatprep.subr.mxu0 0.0
    %1590 = vmatpush2.msra.mxu0 0.0
    %1591 = vmatprep.subr.mxu0 0.0
    %1592 = vmatpush2.msra.mxu0 0.0
    %1593 = vmatprep.subr.mxu0 0.0
    %1594 = vmatpush2.msra.mxu0 0.0
    %1595 = vmatprep.subr.mxu0 0.0
    %1596 = vmatpush2.msra.mxu0 0.0
    %1597 = vmatprep.subr.mxu0 0.0
    %1598 = vmatpush2.msra.mxu0 0.0
    %1599 = vmatprep.subr.mxu0 0.0
    %1600 = vmatpush2.msra.mxu0 0.0
    %1601 = vmatprep.subr.mxu0 0.0
    %1602 = vmatpush2.msra.mxu0 0.0
    %1603 = vmatprep.subr.mxu0 0.0
    %1604 = vmatpush2.msra.mxu0 0.0
    %1605 = vmatprep.subr.mxu0 0.0
    %1606 = vmatpush2.msra.mxu0 0.0
    %1607 = vmatprep.subr.mxu0 0.0
    %1608 = vmatpush2.msra.mxu0 0.0
    %1609 = vmatprep.subr.mxu0 0.0
    %1610 = vmatpush2.msra.mxu0 0.0
    %1611 = vmatprep.subr.mxu0 0.0
    %1612 = vmatpush2.msra.mxu0 0.0
    %1613 = vmatprep.subr.mxu0 0.0
    %1614 = vmatpush2.msra.mxu0 0.0
    %1615 = vmatprep.subr.mxu0 0.0
    %1616 = vmatpush2.msra.mxu0 0.0
    %1617 = vmatprep.mubr.f32.mxu0 0.0
    %1618 = vmatmul.mubr.f32.gmra.mxu0 %v1530
    %v1619 = vpop.f32.mrf.mxu0
    %v1620 = vadd.f32 %v1527, %v1619
    %v1621 = vpop.f32.mrf.mxu0
    %1622 = vmatprep.mubr.f32.mxu0 0.0
    %1623 = vmatmul.mubr.f32.gmra.mxu0 %v1533
    %v1624 = vpop.f32.mrf.mxu0
    %v1625 = vadd.f32 %v1527, %v1624
    %v1626 = vpop.f32.mrf.mxu0
    %1627 = vmatprep.mubr.f32.mxu0 0.0
    %1628 = vmatmul.mubr.f32.gmra.mxu0 %v1536
    %v1629 = vpop.f32.mrf.mxu0
    %v1630 = vadd.f32 %v1527, %v1629
    %v1631 = vpop.f32.mrf.mxu0
    %1632 = vmatprep.mubr.f32.mxu0 0.0
    %1633 = vmatmul.mubr.f32.gmra.mxu0 %v1539
    %v1634 = vpop.f32.mrf.mxu0
    %v1635 = vadd.f32 %v1527, %v1634
    %v1636 = vpop.f32.mrf.mxu0
    %1637 = vmatprep.mubr.f32.mxu0 0.0
    %1638 = vmatmul.mubr.f32.gmra.mxu0 %v1542
    %v1639 = vpop.f32.mrf.mxu0
    %v1640 = vadd.f32 %v1527, %v1639
    %v1641 = vpop.f32.mrf.mxu0
    %1642 = vmatprep.mubr.f32.mxu0 0.0
    %1643 = vmatmul.mubr.f32.gmra.mxu0 %v1545
    %v1644 = vpop.f32.mrf.mxu0
    %v1645 = vadd.f32 %v1527, %v1644
    %v1646 = vpop.f32.mrf.mxu0
    %1647 = vmatprep.mubr.f32.mxu0 0.0
    %1648 = vmatmul.mubr.f32.gmra.mxu0 %v1548
    %v1649 = vpop.f32.mrf.mxu0
    %v1650 = vadd.f32 %v1527, %v1649
    %v1651 = vpop.f32.mrf.mxu0
    %1652 = vmatprep.mubr.f32.mxu0 0.0
    %1653 = vmatmul.mubr.f32.gmra.mxu0 %v1551
    %v1654 = vpop.f32.mrf.mxu0
    %v1655 = vadd.f32 %v1527, %v1654
    %v1656 = vpop.f32.mrf.mxu0
    %1657 = vdwg.mxu0
    %v1659 = vlaneseq
    %v1660 = vshrl.u32 %v1659, 7
    %v1661 = vsub.s32 0, %v1660
    %v1662 = vrot.slane %v263, %v1661
    %1664 = vmatprep.subr.mxu0 0.0
    %1665 = vmatpush1.msra.mxu0 %v262
    %1666 = vmatprep.subr.mxu0 0.0
    %1667 = vmatpush1.msra.mxu0 %v261
    %1668 = vmatprep.subr.mxu0 0.0
    %1669 = vmatpush1.msra.mxu0 %v260
    %1670 = vmatprep.subr.mxu0 0.0
    %1671 = vmatpush1.msra.mxu0 %v259
    %1672 = vmatprep.subr.mxu0 0.0
    %1673 = vmatpush1.msra.mxu0 %v258
    %1674 = vmatprep.subr.mxu0 0.0
    %1675 = vmatpush1.msra.mxu0 %v257
    %1676 = vmatprep.subr.mxu0 0.0
    %1677 = vmatpush1.msra.mxu0 %v256
    %1678 = vmatprep.subr.mxu0 0.0
    %1679 = vmatpush1.msra.mxu0 %v255
    %1680 = vmatprep.subr.mxu0 0.0
    %1681 = vmatpush1.msra.mxu0 %v254
    %1682 = vmatprep.subr.mxu0 0.0
    %1683 = vmatpush1.msra.mxu0 %v253
    %1684 = vmatprep.subr.mxu0 0.0
    %1685 = vmatpush1.msra.mxu0 %v252
    %1686 = vmatprep.subr.mxu0 0.0
    %1687 = vmatpush1.msra.mxu0 %v251
    %1688 = vmatprep.subr.mxu0 0.0
    %1689 = vmatpush1.msra.mxu0 %v250
    %1690 = vmatprep.subr.mxu0 0.0
    %1691 = vmatpush1.msra.mxu0 %v249
    %1692 = vmatprep.subr.mxu0 0.0
    %1693 = vmatpush1.msra.mxu0 %v248
    %1694 = vmatprep.subr.mxu0 0.0
    %1695 = vmatpush1.msra.mxu0 %v247
    %1696 = vmatprep.subr.mxu0 0.0
    %1697 = vmatpush2.msra.mxu0 0.0
    %1698 = vmatprep.subr.mxu0 0.0
    %1699 = vmatpush2.msra.mxu0 0.0
    %1700 = vmatprep.subr.mxu0 0.0
    %1701 = vmatpush2.msra.mxu0 0.0
    %1702 = vmatprep.subr.mxu0 0.0
    %1703 = vmatpush2.msra.mxu0 0.0
    %1704 = vmatprep.subr.mxu0 0.0
    %1705 = vmatpush2.msra.mxu0 0.0
    %1706 = vmatprep.subr.mxu0 0.0
    %1707 = vmatpush2.msra.mxu0 0.0
    %1708 = vmatprep.subr.mxu0 0.0
    %1709 = vmatpush2.msra.mxu0 0.0
    %1710 = vmatprep.subr.mxu0 0.0
    %1711 = vmatpush2.msra.mxu0 0.0
    %1712 = vmatprep.subr.mxu0 0.0
    %1713 = vmatpush2.msra.mxu0 0.0
    %1714 = vmatprep.subr.mxu0 0.0
    %1715 = vmatpush2.msra.mxu0 0.0
    %1716 = vmatprep.subr.mxu0 0.0
    %1717 = vmatpush2.msra.mxu0 0.0
    %1718 = vmatprep.subr.mxu0 0.0
    %1719 = vmatpush2.msra.mxu0 0.0
    %1720 = vmatprep.subr.mxu0 0.0
    %1721 = vmatpush2.msra.mxu0 0.0
    %1722 = vmatprep.subr.mxu0 0.0
    %1723 = vmatpush2.msra.mxu0 0.0
    %1724 = vmatprep.subr.mxu0 0.0
    %1725 = vmatpush2.msra.mxu0 0.0
    %1726 = vmatprep.subr.mxu0 0.0
    %1727 = vmatpush2.msra.mxu0 0.0
    %1728 = vmatprep.mubr.f32.mxu0 0.0
    %1729 = vmatmul.mubr.f32.gmra.mxu0 %v1620
    %v1730 = vpop.f32.mrf.mxu0
    %v1731 = vadd.f32 %v1662, %v1730
    %v1732 = vpop.f32.mrf.mxu0
    %1733 = vmatprep.mubr.f32.mxu0 0.0
    %1734 = vmatmul.mubr.f32.gmra.mxu0 %v1625
    %v1735 = vpop.f32.mrf.mxu0
    %v1736 = vadd.f32 %v1662, %v1735
    %v1737 = vpop.f32.mrf.mxu0
    %1738 = vmatprep.mubr.f32.mxu0 0.0
    %1739 = vmatmul.mubr.f32.gmra.mxu0 %v1630
    %v1740 = vpop.f32.mrf.mxu0
    %v1741 = vadd.f32 %v1662, %v1740
    %v1742 = vpop.f32.mrf.mxu0
    %1743 = vmatprep.mubr.f32.mxu0 0.0
    %1744 = vmatmul.mubr.f32.gmra.mxu0 %v1635
    %v1745 = vpop.f32.mrf.mxu0
    %v1746 = vadd.f32 %v1662, %v1745
    %v1747 = vpop.f32.mrf.mxu0
    %1748 = vmatprep.mubr.f32.mxu0 0.0
    %1749 = vmatmul.mubr.f32.gmra.mxu0 %v1640
    %v1750 = vpop.f32.mrf.mxu0
    %v1751 = vadd.f32 %v1662, %v1750
    %v1752 = vpop.f32.mrf.mxu0
    %1753 = vmatprep.mubr.f32.mxu0 0.0
    %1754 = vmatmul.mubr.f32.gmra.mxu0 %v1645
    %v1755 = vpop.f32.mrf.mxu0
    %v1756 = vadd.f32 %v1662, %v1755
    %v1757 = vpop.f32.mrf.mxu0
    %1758 = vmatprep.mubr.f32.mxu0 0.0
    %1759 = vmatmul.mubr.f32.gmra.mxu0 %v1650
    %v1760 = vpop.f32.mrf.mxu0
    %v1761 = vadd.f32 %v1662, %v1760
    %v1762 = vpop.f32.mrf.mxu0
    %1763 = vmatprep.mubr.f32.mxu0 0.0
    %1764 = vmatmul.mubr.f32.gmra.mxu0 %v1655
    %v1765 = vpop.f32.mrf.mxu0
    %v1766 = vadd.f32 %v1662, %v1765
    %v1767 = vpop.f32.mrf.mxu0
    %1768 = vdwg.mxu0
    %v1770 = vrot.slane %v1736, 4
    %v1773 = vrot.slane %v1756, 3
    %v1775 = vsel %vm271, %v1770, %v1773
    %v1776 = vlaneseq
    %v1777 = vshrl.u32 %v1776, 7
    %v1778 = vsub.s32 1, %v1777
    %v1779 = vrot.slane %v264, %v1778
    %v1780 = vmul.f32 %v1779, %v1775
    %v1781 = vadd.f32 %v278, %v1780
    %v1783 = vsel %vm290, %v1731, 0
    %v1785 = vsel %vm290, %v1736, 0
    %v1788 = vsel %vm290, %v1741, 0
    %v1791 = vsel %vm290, %v1746, 0
    %v1794 = vsel %vm290, %v1751, 0
    %v1796 = vsel %vm290, %v1756, 0
    %v1799 = vsel %vm290, %v1761, 0
    %v1802 = vsel %vm290, %v1766, 0
    %1804 = vmatprep.subr.mxu0 0.0
    %1805 = vmatpush1.msra.mxu0 0.0
    %1806 = vmatprep.subr.mxu0 0.0
    %1807 = vmatpush1.msra.mxu0 0.0
    %1808 = vmatprep.subr.mxu0 0.0
    %1809 = vmatpush1.msra.mxu0 0.0
    %1810 = vmatprep.subr.mxu0 0.0
    %1811 = vmatpush1.msra.mxu0 0.0
    %1812 = vmatprep.subr.mxu0 0.0
    %1813 = vmatpush1.msra.mxu0 0.0
    %1814 = vmatprep.subr.mxu0 0.0
    %1815 = vmatpush1.msra.mxu0 0.0
    %1816 = vmatprep.subr.mxu0 0.0
    %1817 = vmatpush1.msra.mxu0 0.0
    %1818 = vmatprep.subr.mxu0 0.0
    %1819 = vmatpush1.msra.mxu0 0.0
    %1820 = vmatprep.subr.mxu0 %v236
    %1821 = vmatpush1.msra.mxu0 %v235
    %1822 = vmatprep.subr.mxu0 %v234
    %1823 = vmatpush1.msra.mxu0 %v233
    %1824 = vmatprep.subr.mxu0 %v232
    %1825 = vmatpush1.msra.mxu0 %v231
    %1826 = vmatprep.subr.mxu0 %v230
    %1827 = vmatpush1.msra.mxu0 %v229
    %1828 = vmatprep.subr.mxu0 %v228
    %1829 = vmatpush1.msra.mxu0 %v227
    %1830 = vmatprep.subr.mxu0 %v226
    %1831 = vmatpush1.msra.mxu0 %v225
    %1832 = vmatprep.subr.mxu0 %v224
    %1833 = vmatpush1.msra.mxu0 %v223
    %1834 = vmatprep.subr.mxu0 %v222
    %1835 = vmatpush1.msra.mxu0 %v221
    %1836 = vmatprep.subr.mxu0 0.0
    %1837 = vmatpush2.msra.mxu0 0.0
    %1838 = vmatprep.subr.mxu0 0.0
    %1839 = vmatpush2.msra.mxu0 0.0
    %1840 = vmatprep.subr.mxu0 0.0
    %1841 = vmatpush2.msra.mxu0 0.0
    %1842 = vmatprep.subr.mxu0 0.0
    %1843 = vmatpush2.msra.mxu0 0.0
    %1844 = vmatprep.subr.mxu0 0.0
    %1845 = vmatpush2.msra.mxu0 0.0
    %1846 = vmatprep.subr.mxu0 0.0
    %1847 = vmatpush2.msra.mxu0 0.0
    %1848 = vmatprep.subr.mxu0 0.0
    %1849 = vmatpush2.msra.mxu0 0.0
    %1850 = vmatprep.subr.mxu0 0.0
    %1851 = vmatpush2.msra.mxu0 0.0
    %1852 = vmatprep.subr.mxu0 0.0
    %1853 = vmatpush2.msra.mxu0 0.0
    %1854 = vmatprep.subr.mxu0 0.0
    %1855 = vmatpush2.msra.mxu0 0.0
    %1856 = vmatprep.subr.mxu0 0.0
    %1857 = vmatpush2.msra.mxu0 0.0
    %1858 = vmatprep.subr.mxu0 0.0
    %1859 = vmatpush2.msra.mxu0 0.0
    %1860 = vmatprep.subr.mxu0 0.0
    %1861 = vmatpush2.msra.mxu0 0.0
    %1862 = vmatprep.subr.mxu0 0.0
    %1863 = vmatpush2.msra.mxu0 0.0
    %1864 = vmatprep.subr.mxu0 0.0
    %1865 = vmatpush2.msra.mxu0 0.0
    %1866 = vmatprep.subr.mxu0 0.0
    %1867 = vmatpush2.msra.mxu0 0.0
    %1868 = vmatprep.mubr.f32.mxu0 0.0
    %1869 = vmatmul.mubr.f32.gmra.mxu0 %v1783
    %v1870 = vpop.f32.mrf.mxu0
    %v1871 = vadd.f32 %v283, %v1870
    %v1872 = vpop.f32.mrf.mxu0
    %v1873 = vadd.f32 %v287, %v1872
    %1874 = vmatprep.mubr.f32.mxu0 0.0
    %1875 = vmatmul.mubr.f32.gmra.mxu0 %v1785
    %v1876 = vpop.f32.mrf.mxu0
    %v1877 = vadd.f32 %v283, %v1876
    %v1878 = vpop.f32.mrf.mxu0
    %v1879 = vadd.f32 %v287, %v1878
    %1880 = vmatprep.mubr.f32.mxu0 0.0
    %1881 = vmatmul.mubr.f32.gmra.mxu0 %v1788
    %v1882 = vpop.f32.mrf.mxu0
    %v1883 = vadd.f32 %v283, %v1882
    %v1884 = vpop.f32.mrf.mxu0
    %v1885 = vadd.f32 %v287, %v1884
    %1886 = vmatprep.mubr.f32.mxu0 0.0
    %1887 = vmatmul.mubr.f32.gmra.mxu0 %v1791
    %v1888 = vpop.f32.mrf.mxu0
    %v1889 = vadd.f32 %v283, %v1888
    %v1890 = vpop.f32.mrf.mxu0
    %v1891 = vadd.f32 %v287, %v1890
    %1892 = vmatprep.mubr.f32.mxu0 0.0
    %1893 = vmatmul.mubr.f32.gmra.mxu0 %v1794
    %v1894 = vpop.f32.mrf.mxu0
    %v1895 = vadd.f32 %v283, %v1894
    %v1896 = vpop.f32.mrf.mxu0
    %v1897 = vadd.f32 %v287, %v1896
    %1898 = vmatprep.mubr.f32.mxu0 0.0
    %1899 = vmatmul.mubr.f32.gmra.mxu0 %v1796
    %v1900 = vpop.f32.mrf.mxu0
    %v1901 = vadd.f32 %v283, %v1900
    %v1902 = vpop.f32.mrf.mxu0
    %v1903 = vadd.f32 %v287, %v1902
    %1904 = vmatprep.mubr.f32.mxu0 0.0
    %1905 = vmatmul.mubr.f32.gmra.mxu0 %v1799
    %v1906 = vpop.f32.mrf.mxu0
    %v1907 = vadd.f32 %v283, %v1906
    %v1908 = vpop.f32.mrf.mxu0
    %v1909 = vadd.f32 %v287, %v1908
    %1910 = vmatprep.mubr.f32.mxu0 0.0
    %1911 = vmatmul.mubr.f32.gmra.mxu0 %v1802
    %v1912 = vpop.f32.mrf.mxu0
    %v1913 = vadd.f32 %v283, %v1912
    %v1914 = vpop.f32.mrf.mxu0
    %v1915 = vadd.f32 %v287, %v1914
    %1916 = vdwg.mxu0
    %1921 = vrot.lane.b32.xlu0 %v1871, 64
    %v1922 = vpop.permute.xlu0 %1921
    %1923 = vrot.lane.b32.xlu0 %v1877, 64
    %v1924 = vpop.permute.xlu0 %1923
    %1925 = vrot.lane.b32.xlu0 %v1883, 64
    %v1926 = vpop.permute.xlu0 %1925
    %1927 = vrot.lane.b32.xlu0 %v1889, 64
    %v1928 = vpop.permute.xlu0 %1927
    %v1929 = vsel %vm438, %v1871, 0
    %v1931 = vsel %vm438, %v1877, 0
    %v1933 = vsel %vm438, %v1883, 0
    %v1935 = vsel %vm438, %v1889, 0
    %v1937 = vsel %vm438, %v1922, 0
    %v1939 = vsel %vm438, %v1924, 0
    %v1941 = vsel %vm438, %v1926, 0
    %v1943 = vsel %vm438, %v1928, 0
    %1945 = vmatprep.subr.mxu0 0.0
    %1946 = vmatpush1.xpose.msra.mxu0 0.0
    %1947 = vmatprep.subr.mxu0 0.0
    %1948 = vmatpush1.xpose.msra.mxu0 0.0
    %1949 = vmatprep.subr.mxu0 0.0
    %1950 = vmatpush1.xpose.msra.mxu0 0.0
    %1951 = vmatprep.subr.mxu0 0.0
    %1952 = vmatpush1.xpose.msra.mxu0 0.0
    %1953 = vmatprep.subr.mxu0 0.0
    %1954 = vmatpush1.xpose.msra.mxu0 0.0
    %1955 = vmatprep.subr.mxu0 0.0
    %1956 = vmatpush1.xpose.msra.mxu0 0.0
    %1957 = vmatprep.subr.mxu0 0.0
    %1958 = vmatpush1.xpose.msra.mxu0 0.0
    %1959 = vmatprep.subr.mxu0 0.0
    %1960 = vmatpush1.xpose.msra.mxu0 0.0
    %1961 = vmatprep.subr.mxu0 0.0
    %1962 = vmatpush1.xpose.msra.mxu0 0.0
    %1963 = vmatprep.subr.mxu0 0.0
    %1964 = vmatpush1.xpose.msra.mxu0 0.0
    %1965 = vmatprep.subr.mxu0 0.0
    %1966 = vmatpush1.xpose.msra.mxu0 0.0
    %1967 = vmatprep.subr.mxu0 0.0
    %1968 = vmatpush1.xpose.msra.mxu0 0.0
    %1969 = vmatprep.subr.mxu0 0.0
    %1970 = vmatpush1.xpose.msra.mxu0 %v1943
    %1971 = vmatprep.subr.mxu0 0.0
    %1972 = vmatpush1.xpose.msra.mxu0 %v1941
    %1973 = vmatprep.subr.mxu0 0.0
    %1974 = vmatpush1.xpose.msra.mxu0 %v1939
    %1975 = vmatprep.subr.mxu0 0.0
    %1976 = vmatpush1.xpose.msra.mxu0 %v1937
    %1977 = vmatprep.subr.mxu0 0.0
    %1978 = vmatpush2.xpose.msra.mxu0 0.0
    %1979 = vmatprep.subr.mxu0 0.0
    %1980 = vmatpush2.xpose.msra.mxu0 0.0
    %1981 = vmatprep.subr.mxu0 0.0
    %1982 = vmatpush2.xpose.msra.mxu0 0.0
    %1983 = vmatprep.subr.mxu0 0.0
    %1984 = vmatpush2.xpose.msra.mxu0 0.0
    %1985 = vmatprep.subr.mxu0 0.0
    %1986 = vmatpush2.xpose.msra.mxu0 0.0
    %1987 = vmatprep.subr.mxu0 0.0
    %1988 = vmatpush2.xpose.msra.mxu0 0.0
    %1989 = vmatprep.subr.mxu0 0.0
    %1990 = vmatpush2.xpose.msra.mxu0 0.0
    %1991 = vmatprep.subr.mxu0 0.0
    %1992 = vmatpush2.xpose.msra.mxu0 0.0
    %1993 = vmatprep.subr.mxu0 0.0
    %1994 = vmatpush2.xpose.msra.mxu0 0.0
    %1995 = vmatprep.subr.mxu0 0.0
    %1996 = vmatpush2.xpose.msra.mxu0 0.0
    %1997 = vmatprep.subr.mxu0 0.0
    %1998 = vmatpush2.xpose.msra.mxu0 0.0
    %1999 = vmatprep.subr.mxu0 0.0
    %2000 = vmatpush2.xpose.msra.mxu0 0.0
    %2001 = vmatprep.subr.mxu0 0.0
    %2002 = vmatpush2.xpose.msra.mxu0 0.0
    %2003 = vmatprep.subr.mxu0 0.0
    %2004 = vmatpush2.xpose.msra.mxu0 0.0
    %2005 = vmatprep.subr.mxu0 0.0
    %2006 = vmatpush2.xpose.msra.mxu0 0.0
    %2007 = vmatprep.subr.mxu0 0.0
    %2008 = vmatpush2.xpose.msra.mxu0 0.0
    %2009 = vmatprep.mubr.f32.mxu0 0.0
    %2010 = vmatmul.mubr.f32.gmra.mxu0 %v1929
    %v2011 = vpop.f32.mrf.mxu0
    %v2012 = vadd.f32 %v220, %v2011
    %v2013 = vpop.f32.mrf.mxu0
    %2014 = vmatprep.mubr.f32.mxu0 0.0
    %2015 = vmatmul.mubr.f32.gmra.mxu0 %v1931
    %v2016 = vpop.f32.mrf.mxu0
    %v2017 = vadd.f32 %v220, %v2016
    %v2018 = vpop.f32.mrf.mxu0
    %2019 = vmatprep.mubr.f32.mxu0 0.0
    %2020 = vmatmul.mubr.f32.gmra.mxu0 %v1933
    %v2021 = vpop.f32.mrf.mxu0
    %v2022 = vadd.f32 %v220, %v2021
    %v2023 = vpop.f32.mrf.mxu0
    %2024 = vmatprep.mubr.f32.mxu0 0.0
    %2025 = vmatmul.mubr.f32.gmra.mxu0 %v1935
    %v2026 = vpop.f32.mrf.mxu0
    %v2027 = vadd.f32 %v220, %v2026
    %v2028 = vpop.f32.mrf.mxu0
    %2029 = vdwg.mxu0
    %v2030 = vsel %vm438, %v2012, -inf
    %2031 = vmax.xlane.f32.xlu0 %v2030
    %v2032 = vpop.xlane.xlu0 %2031
    %v2033 = vsel %vm438, %v2017, -inf
    %2034 = vmax.xlane.f32.xlu0 %v2033
    %v2035 = vpop.xlane.xlu0 %2034
    %v2036 = vsel %vm438, %v2022, -inf
    %2037 = vmax.xlane.f32.xlu0 %v2036
    %v2038 = vpop.xlane.xlu0 %2037
    %v2039 = vsel %vm438, %v2027, -inf
    %2040 = vmax.xlane.f32.xlu0 %v2039
    %v2041 = vpop.xlane.xlu0 %2040
    %v2042 = vsub.f32 %v2012, %v2032
    %v2043 = vsub.f32 %v2017, %v2035
    %v2044 = vsub.f32 %v2022, %v2038
    %v2045 = vsub.f32 %v2027, %v2041
    %v2046 = vmul.f32 %v2042, 1.442695
    %v2047 = vpow.pop %v2046
    %v2048 = vmul.f32 %v2043, 1.442695
    %v2049 = vpow.pop %v2048
    %v2050 = vmul.f32 %v2044, 1.442695
    %v2051 = vpow.pop %v2050
    %v2052 = vmul.f32 %v2045, 1.442695
    %v2053 = vpow.pop %v2052
    %v2054 = vsel %vm438, %v2047, 0.0
    %2055 = vadd.xlane.f32.xlu0 %v2054
    %v2056 = vpop.xlane.xlu0 %2055
    %v2057 = vsel %vm438, %v2049, 0.0
    %2058 = vadd.xlane.f32.xlu0 %v2057
    %v2059 = vpop.xlane.xlu0 %2058
    %v2060 = vsel %vm438, %v2051, 0.0
    %2061 = vadd.xlane.f32.xlu0 %v2060
    %v2062 = vpop.xlane.xlu0 %2061
    %v2063 = vsel %vm438, %v2053, 0.0
    %2064 = vadd.xlane.f32.xlu0 %v2063
    %v2065 = vpop.xlane.xlu0 %2064
    %v2066 = vrcp.pop %v2056
    %v2067 = vrcp.pop %v2059
    %v2068 = vrcp.pop %v2062
    %v2069 = vrcp.pop %v2065
    %v2070 = vmul.f32 %v2047, %v2066
    %v2071 = vmul.f32 %v2049, %v2067
    %v2072 = vmul.f32 %v2051, %v2068
    %v2073 = vmul.f32 %v2053, %v2069
    %v2075 = vsel %vm438, %v2070, 0
    %v2078 = vsel %vm438, %v2071, 0
    %v2081 = vsel %vm438, %v2072, 0
    %v2084 = vsel %vm438, %v2073, 0
    %2086 = vmatprep.subr.mxu0 0.0
    %2087 = vmatpush1.msra.mxu0 0.0
    %2088 = vmatprep.subr.mxu0 0.0
    %2089 = vmatpush1.msra.mxu0 0.0
    %2090 = vmatprep.subr.mxu0 0.0
    %2091 = vmatpush1.msra.mxu0 0.0
    %2092 = vmatprep.subr.mxu0 0.0
    %2093 = vmatpush1.msra.mxu0 0.0
    %2094 = vmatprep.subr.mxu0 0.0
    %2095 = vmatpush1.msra.mxu0 0.0
    %2096 = vmatprep.subr.mxu0 0.0
    %2097 = vmatpush1.msra.mxu0 0.0
    %2098 = vmatprep.subr.mxu0 0.0
    %2099 = vmatpush1.msra.mxu0 0.0
    %2100 = vmatprep.subr.mxu0 0.0
    %2101 = vmatpush1.msra.mxu0 0.0
    %2102 = vmatprep.subr.mxu0 0.0
    %2103 = vmatpush1.msra.mxu0 0.0
    %2104 = vmatprep.subr.mxu0 0.0
    %2105 = vmatpush1.msra.mxu0 0.0
    %2106 = vmatprep.subr.mxu0 0.0
    %2107 = vmatpush1.msra.mxu0 0.0
    %2108 = vmatprep.subr.mxu0 0.0
    %2109 = vmatpush1.msra.mxu0 0.0
    %2110 = vmatprep.subr.mxu0 0.0
    %2111 = vmatpush1.msra.mxu0 %v1891
    %2112 = vmatprep.subr.mxu0 0.0
    %2113 = vmatpush1.msra.mxu0 %v1885
    %2114 = vmatprep.subr.mxu0 0.0
    %2115 = vmatpush1.msra.mxu0 %v1879
    %2116 = vmatprep.subr.mxu0 0.0
    %2117 = vmatpush1.msra.mxu0 %v1873
    %2118 = vmatprep.subr.mxu0 0.0
    %2119 = vmatpush2.msra.mxu0 0.0
    %2120 = vmatprep.subr.mxu0 0.0
    %2121 = vmatpush2.msra.mxu0 0.0
    %2122 = vmatprep.subr.mxu0 0.0
    %2123 = vmatpush2.msra.mxu0 0.0
    %2124 = vmatprep.subr.mxu0 0.0
    %2125 = vmatpush2.msra.mxu0 0.0
    %2126 = vmatprep.subr.mxu0 0.0
    %2127 = vmatpush2.msra.mxu0 0.0
    %2128 = vmatprep.subr.mxu0 0.0
    %2129 = vmatpush2.msra.mxu0 0.0
    %2130 = vmatprep.subr.mxu0 0.0
    %2131 = vmatpush2.msra.mxu0 0.0
    %2132 = vmatprep.subr.mxu0 0.0
    %2133 = vmatpush2.msra.mxu0 0.0
    %2134 = vmatprep.subr.mxu0 0.0
    %2135 = vmatpush2.msra.mxu0 0.0
    %2136 = vmatprep.subr.mxu0 0.0
    %2137 = vmatpush2.msra.mxu0 0.0
    %2138 = vmatprep.subr.mxu0 0.0
    %2139 = vmatpush2.msra.mxu0 0.0
    %2140 = vmatprep.subr.mxu0 0.0
    %2141 = vmatpush2.msra.mxu0 0.0
    %2142 = vmatprep.subr.mxu0 0.0
    %2143 = vmatpush2.msra.mxu0 0.0
    %2144 = vmatprep.subr.mxu0 0.0
    %2145 = vmatpush2.msra.mxu0 0.0
    %2146 = vmatprep.subr.mxu0 0.0
    %2147 = vmatpush2.msra.mxu0 0.0
    %2148 = vmatprep.subr.mxu0 0.0
    %2149 = vmatpush2.msra.mxu0 0.0
    %2150 = vmatprep.mubr.f32.mxu0 0.0
    %2151 = vmatmul.mubr.f32.gmra.mxu0 %v2075
    %v2152 = vpop.f32.mrf.mxu0
    %v2153 = vadd.f32 0.0, %v2152
    %v2154 = vpop.f32.mrf.mxu0
    %2155 = vmatprep.mubr.f32.mxu0 0.0
    %2156 = vmatmul.mubr.f32.gmra.mxu0 %v2078
    %v2157 = vpop.f32.mrf.mxu0
    %v2158 = vadd.f32 0.0, %v2157
    %v2159 = vpop.f32.mrf.mxu0
    %2160 = vmatprep.mubr.f32.mxu0 0.0
    %2161 = vmatmul.mubr.f32.gmra.mxu0 %v2081
    %v2162 = vpop.f32.mrf.mxu0
    %v2163 = vadd.f32 0.0, %v2162
    %v2164 = vpop.f32.mrf.mxu0
    %2165 = vmatprep.mubr.f32.mxu0 0.0
    %2166 = vmatmul.mubr.f32.gmra.mxu0 %v2084
    %v2167 = vpop.f32.mrf.mxu0
    %v2168 = vadd.f32 0.0, %v2167
    %v2169 = vpop.f32.mrf.mxu0
    %2170 = vdwg.mxu0
    %2171 = vrot.lane.b32.xlu0 %v1871, 96
    %v2172 = vpop.permute.xlu0 %2171
    %2173 = vrot.lane.b32.xlu0 %v1877, 96
    %v2174 = vpop.permute.xlu0 %2173
    %2175 = vrot.lane.b32.xlu0 %v1883, 96
    %v2176 = vpop.permute.xlu0 %2175
    %2177 = vrot.lane.b32.xlu0 %v1889, 96
    %v2178 = vpop.permute.xlu0 %2177
    %2179 = vrot.lane.b32.xlu0 %v1871, 32
    %v2180 = vpop.permute.xlu0 %2179
    %2181 = vrot.lane.b32.xlu0 %v1877, 32
    %v2182 = vpop.permute.xlu0 %2181
    %2183 = vrot.lane.b32.xlu0 %v1883, 32
    %v2184 = vpop.permute.xlu0 %2183
    %2185 = vrot.lane.b32.xlu0 %v1889, 32
    %v2186 = vpop.permute.xlu0 %2185
    %v2187 = vsel %vm438, %v2172, 0
    %v2189 = vsel %vm438, %v2174, 0
    %v2191 = vsel %vm438, %v2176, 0
    %v2193 = vsel %vm438, %v2178, 0
    %v2195 = vsel %vm438, %v2180, 0
    %v2197 = vsel %vm438, %v2182, 0
    %v2199 = vsel %vm438, %v2184, 0
    %v2201 = vsel %vm438, %v2186, 0
    %2203 = vmatprep.subr.mxu0 0.0
    %2204 = vmatpush1.xpose.msra.mxu0 0.0
    %2205 = vmatprep.subr.mxu0 0.0
    %2206 = vmatpush1.xpose.msra.mxu0 0.0
    %2207 = vmatprep.subr.mxu0 0.0
    %2208 = vmatpush1.xpose.msra.mxu0 0.0
    %2209 = vmatprep.subr.mxu0 0.0
    %2210 = vmatpush1.xpose.msra.mxu0 0.0
    %2211 = vmatprep.subr.mxu0 0.0
    %2212 = vmatpush1.xpose.msra.mxu0 0.0
    %2213 = vmatprep.subr.mxu0 0.0
    %2214 = vmatpush1.xpose.msra.mxu0 0.0
    %2215 = vmatprep.subr.mxu0 0.0
    %2216 = vmatpush1.xpose.msra.mxu0 0.0
    %2217 = vmatprep.subr.mxu0 0.0
    %2218 = vmatpush1.xpose.msra.mxu0 0.0
    %2219 = vmatprep.subr.mxu0 0.0
    %2220 = vmatpush1.xpose.msra.mxu0 0.0
    %2221 = vmatprep.subr.mxu0 0.0
    %2222 = vmatpush1.xpose.msra.mxu0 0.0
    %2223 = vmatprep.subr.mxu0 0.0
    %2224 = vmatpush1.xpose.msra.mxu0 0.0
    %2225 = vmatprep.subr.mxu0 0.0
    %2226 = vmatpush1.xpose.msra.mxu0 0.0
    %2227 = vmatprep.subr.mxu0 0.0
    %2228 = vmatpush1.xpose.msra.mxu0 %v2201
    %2229 = vmatprep.subr.mxu0 0.0
    %2230 = vmatpush1.xpose.msra.mxu0 %v2199
    %2231 = vmatprep.subr.mxu0 0.0
    %2232 = vmatpush1.xpose.msra.mxu0 %v2197
    %2233 = vmatprep.subr.mxu0 0.0
    %2234 = vmatpush1.xpose.msra.mxu0 %v2195
    %2235 = vmatprep.subr.mxu0 0.0
    %2236 = vmatpush2.xpose.msra.mxu0 0.0
    %2237 = vmatprep.subr.mxu0 0.0
    %2238 = vmatpush2.xpose.msra.mxu0 0.0
    %2239 = vmatprep.subr.mxu0 0.0
    %2240 = vmatpush2.xpose.msra.mxu0 0.0
    %2241 = vmatprep.subr.mxu0 0.0
    %2242 = vmatpush2.xpose.msra.mxu0 0.0
    %2243 = vmatprep.subr.mxu0 0.0
    %2244 = vmatpush2.xpose.msra.mxu0 0.0
    %2245 = vmatprep.subr.mxu0 0.0
    %2246 = vmatpush2.xpose.msra.mxu0 0.0
    %2247 = vmatprep.subr.mxu0 0.0
    %2248 = vmatpush2.xpose.msra.mxu0 0.0
    %2249 = vmatprep.subr.mxu0 0.0
    %2250 = vmatpush2.xpose.msra.mxu0 0.0
    %2251 = vmatprep.subr.mxu0 0.0
    %2252 = vmatpush2.xpose.msra.mxu0 0.0
    %2253 = vmatprep.subr.mxu0 0.0
    %2254 = vmatpush2.xpose.msra.mxu0 0.0
    %2255 = vmatprep.subr.mxu0 0.0
    %2256 = vmatpush2.xpose.msra.mxu0 0.0
    %2257 = vmatprep.subr.mxu0 0.0
    %2258 = vmatpush2.xpose.msra.mxu0 0.0
    %2259 = vmatprep.subr.mxu0 0.0
    %2260 = vmatpush2.xpose.msra.mxu0 0.0
    %2261 = vmatprep.subr.mxu0 0.0
    %2262 = vmatpush2.xpose.msra.mxu0 0.0
    %2263 = vmatprep.subr.mxu0 0.0
    %2264 = vmatpush2.xpose.msra.mxu0 0.0
    %2265 = vmatprep.subr.mxu0 0.0
    %2266 = vmatpush2.xpose.msra.mxu0 0.0
    %2267 = vmatprep.mubr.f32.mxu0 0.0
    %2268 = vmatmul.mubr.f32.gmra.mxu0 %v2187
    %v2269 = vpop.f32.mrf.mxu0
    %v2270 = vadd.f32 %v220, %v2269
    %v2271 = vpop.f32.mrf.mxu0
    %2272 = vmatprep.mubr.f32.mxu0 0.0
    %2273 = vmatmul.mubr.f32.gmra.mxu0 %v2189
    %v2274 = vpop.f32.mrf.mxu0
    %v2275 = vadd.f32 %v220, %v2274
    %v2276 = vpop.f32.mrf.mxu0
    %2277 = vmatprep.mubr.f32.mxu0 0.0
    %2278 = vmatmul.mubr.f32.gmra.mxu0 %v2191
    %v2279 = vpop.f32.mrf.mxu0
    %v2280 = vadd.f32 %v220, %v2279
    %v2281 = vpop.f32.mrf.mxu0
    %2282 = vmatprep.mubr.f32.mxu0 0.0
    %2283 = vmatmul.mubr.f32.gmra.mxu0 %v2193
    %v2284 = vpop.f32.mrf.mxu0
    %v2285 = vadd.f32 %v220, %v2284
    %v2286 = vpop.f32.mrf.mxu0
    %2287 = vdwg.mxu0
    %v2288 = vsel %vm438, %v2270, -inf
    %2289 = vmax.xlane.f32.xlu0 %v2288
    %v2290 = vpop.xlane.xlu0 %2289
    %v2291 = vsel %vm438, %v2275, -inf
    %2292 = vmax.xlane.f32.xlu0 %v2291
    %v2293 = vpop.xlane.xlu0 %2292
    %v2294 = vsel %vm438, %v2280, -inf
    %2295 = vmax.xlane.f32.xlu0 %v2294
    %v2296 = vpop.xlane.xlu0 %2295
    %v2297 = vsel %vm438, %v2285, -inf
    %2298 = vmax.xlane.f32.xlu0 %v2297
    %v2299 = vpop.xlane.xlu0 %2298
    %v2300 = vsub.f32 %v2270, %v2290
    %v2301 = vsub.f32 %v2275, %v2293
    %v2302 = vsub.f32 %v2280, %v2296
    %v2303 = vsub.f32 %v2285, %v2299
    %v2304 = vmul.f32 %v2300, 1.442695
    %v2305 = vpow.pop %v2304
    %v2306 = vmul.f32 %v2301, 1.442695
    %v2307 = vpow.pop %v2306
    %v2308 = vmul.f32 %v2302, 1.442695
    %v2309 = vpow.pop %v2308
    %v2310 = vmul.f32 %v2303, 1.442695
    %v2311 = vpow.pop %v2310
    %v2312 = vsel %vm438, %v2305, 0.0
    %2313 = vadd.xlane.f32.xlu0 %v2312
    %v2314 = vpop.xlane.xlu0 %2313
    %v2315 = vsel %vm438, %v2307, 0.0
    %2316 = vadd.xlane.f32.xlu0 %v2315
    %v2317 = vpop.xlane.xlu0 %2316
    %v2318 = vsel %vm438, %v2309, 0.0
    %2319 = vadd.xlane.f32.xlu0 %v2318
    %v2320 = vpop.xlane.xlu0 %2319
    %v2321 = vsel %vm438, %v2311, 0.0
    %2322 = vadd.xlane.f32.xlu0 %v2321
    %v2323 = vpop.xlane.xlu0 %2322
    %v2324 = vrcp.pop %v2314
    %v2325 = vrcp.pop %v2317
    %v2326 = vrcp.pop %v2320
    %v2327 = vrcp.pop %v2323
    %v2328 = vmul.f32 %v2305, %v2324
    %v2329 = vmul.f32 %v2307, %v2325
    %v2330 = vmul.f32 %v2309, %v2326
    %v2331 = vmul.f32 %v2311, %v2327
    %2336 = vrot.lane.b32.xlu0 %v1873, 96
    %v2337 = vpop.permute.xlu0 %2336
    %2338 = vrot.lane.b32.xlu0 %v1879, 96
    %v2339 = vpop.permute.xlu0 %2338
    %2340 = vrot.lane.b32.xlu0 %v1885, 96
    %v2341 = vpop.permute.xlu0 %2340
    %2342 = vrot.lane.b32.xlu0 %v1891, 96
    %v2343 = vpop.permute.xlu0 %2342
    %v2349 = vsel %vm438, %v2328, 0
    %v2352 = vsel %vm438, %v2329, 0
    %v2355 = vsel %vm438, %v2330, 0
    %v2358 = vsel %vm438, %v2331, 0
    %2360 = vmatprep.subr.mxu0 0.0
    %2361 = vmatpush1.msra.mxu0 0.0
    %2362 = vmatprep.subr.mxu0 0.0
    %2363 = vmatpush1.msra.mxu0 0.0
    %2364 = vmatprep.subr.mxu0 0.0
    %2365 = vmatpush1.msra.mxu0 0.0
    %2366 = vmatprep.subr.mxu0 0.0
    %2367 = vmatpush1.msra.mxu0 0.0
    %2368 = vmatprep.subr.mxu0 0.0
    %2369 = vmatpush1.msra.mxu0 0.0
    %2370 = vmatprep.subr.mxu0 0.0
    %2371 = vmatpush1.msra.mxu0 0.0
    %2372 = vmatprep.subr.mxu0 0.0
    %2373 = vmatpush1.msra.mxu0 0.0
    %2374 = vmatprep.subr.mxu0 0.0
    %2375 = vmatpush1.msra.mxu0 0.0
    %2376 = vmatprep.subr.mxu0 0.0
    %2377 = vmatpush1.msra.mxu0 0.0
    %2378 = vmatprep.subr.mxu0 0.0
    %2379 = vmatpush1.msra.mxu0 0.0
    %2380 = vmatprep.subr.mxu0 0.0
    %2381 = vmatpush1.msra.mxu0 0.0
    %2382 = vmatprep.subr.mxu0 0.0
    %2383 = vmatpush1.msra.mxu0 0.0
    %2384 = vmatprep.subr.mxu0 0.0
    %2385 = vmatpush1.msra.mxu0 %v2343
    %2386 = vmatprep.subr.mxu0 0.0
    %2387 = vmatpush1.msra.mxu0 %v2341
    %2388 = vmatprep.subr.mxu0 0.0
    %2389 = vmatpush1.msra.mxu0 %v2339
    %2390 = vmatprep.subr.mxu0 0.0
    %2391 = vmatpush1.msra.mxu0 %v2337
    %2392 = vmatprep.subr.mxu0 0.0
    %2393 = vmatpush2.msra.mxu0 0.0
    %2394 = vmatprep.subr.mxu0 0.0
    %2395 = vmatpush2.msra.mxu0 0.0
    %2396 = vmatprep.subr.mxu0 0.0
    %2397 = vmatpush2.msra.mxu0 0.0
    %2398 = vmatprep.subr.mxu0 0.0
    %2399 = vmatpush2.msra.mxu0 0.0
    %2400 = vmatprep.subr.mxu0 0.0
    %2401 = vmatpush2.msra.mxu0 0.0
    %2402 = vmatprep.subr.mxu0 0.0
    %2403 = vmatpush2.msra.mxu0 0.0
    %2404 = vmatprep.subr.mxu0 0.0
    %2405 = vmatpush2.msra.mxu0 0.0
    %2406 = vmatprep.subr.mxu0 0.0
    %2407 = vmatpush2.msra.mxu0 0.0
    %2408 = vmatprep.subr.mxu0 0.0
    %2409 = vmatpush2.msra.mxu0 0.0
    %2410 = vmatprep.subr.mxu0 0.0
    %2411 = vmatpush2.msra.mxu0 0.0
    %2412 = vmatprep.subr.mxu0 0.0
    %2413 = vmatpush2.msra.mxu0 0.0
    %2414 = vmatprep.subr.mxu0 0.0
    %2415 = vmatpush2.msra.mxu0 0.0
    %2416 = vmatprep.subr.mxu0 0.0
    %2417 = vmatpush2.msra.mxu0 0.0
    %2418 = vmatprep.subr.mxu0 0.0
    %2419 = vmatpush2.msra.mxu0 0.0
    %2420 = vmatprep.subr.mxu0 0.0
    %2421 = vmatpush2.msra.mxu0 0.0
    %2422 = vmatprep.subr.mxu0 0.0
    %2423 = vmatpush2.msra.mxu0 0.0
    %2424 = vmatprep.mubr.f32.mxu0 0.0
    %2425 = vmatmul.mubr.f32.gmra.mxu0 %v2349
    %v2426 = vpop.f32.mrf.mxu0
    %v2427 = vadd.f32 0.0, %v2426
    %v2428 = vpop.f32.mrf.mxu0
    %2429 = vmatprep.mubr.f32.mxu0 0.0
    %2430 = vmatmul.mubr.f32.gmra.mxu0 %v2352
    %v2431 = vpop.f32.mrf.mxu0
    %v2432 = vadd.f32 0.0, %v2431
    %v2433 = vpop.f32.mrf.mxu0
    %2434 = vmatprep.mubr.f32.mxu0 0.0
    %2435 = vmatmul.mubr.f32.gmra.mxu0 %v2355
    %v2436 = vpop.f32.mrf.mxu0
    %v2437 = vadd.f32 0.0, %v2436
    %v2438 = vpop.f32.mrf.mxu0
    %2439 = vmatprep.mubr.f32.mxu0 0.0
    %2440 = vmatmul.mubr.f32.gmra.mxu0 %v2358
    %v2441 = vpop.f32.mrf.mxu0
    %v2442 = vadd.f32 0.0, %v2441
    %v2443 = vpop.f32.mrf.mxu0
    %2444 = vdwg.mxu0
    %2449 = vrot.lane.b32.xlu0 %v2427, 32
    %v2450 = vpop.permute.xlu0 %2449
    %2451 = vrot.lane.b32.xlu0 %v2432, 32
    %v2452 = vpop.permute.xlu0 %2451
    %2453 = vrot.lane.b32.xlu0 %v2437, 32
    %v2454 = vpop.permute.xlu0 %2453
    %2455 = vrot.lane.b32.xlu0 %v2442, 32
    %v2456 = vpop.permute.xlu0 %2455
    %v2461 = vsel %vm438, %v2153, %v2450
    %v2462 = vsel %vm438, %v2158, %v2452
    %v2463 = vsel %vm438, %v2163, %v2454
    %v2464 = vsel %vm438, %v2168, %v2456
    %2469 = vrot.lane.b32.xlu0 %v1895, 64
    %v2470 = vpop.permute.xlu0 %2469
    %2471 = vrot.lane.b32.xlu0 %v1901, 64
    %v2472 = vpop.permute.xlu0 %2471
    %2473 = vrot.lane.b32.xlu0 %v1907, 64
    %v2474 = vpop.permute.xlu0 %2473
    %2475 = vrot.lane.b32.xlu0 %v1913, 64
    %v2476 = vpop.permute.xlu0 %2475
    %v2477 = vsel %vm438, %v1895, 0
    %v2479 = vsel %vm438, %v1901, 0
    %v2481 = vsel %vm438, %v1907, 0
    %v2483 = vsel %vm438, %v1913, 0
    %v2485 = vsel %vm438, %v2470, 0
    %v2487 = vsel %vm438, %v2472, 0
    %v2489 = vsel %vm438, %v2474, 0
    %v2491 = vsel %vm438, %v2476, 0
    %2493 = vmatprep.subr.mxu0 0.0
    %2494 = vmatpush1.xpose.msra.mxu0 0.0
    %2495 = vmatprep.subr.mxu0 0.0
    %2496 = vmatpush1.xpose.msra.mxu0 0.0
    %2497 = vmatprep.subr.mxu0 0.0
    %2498 = vmatpush1.xpose.msra.mxu0 0.0
    %2499 = vmatprep.subr.mxu0 0.0
    %2500 = vmatpush1.xpose.msra.mxu0 0.0
    %2501 = vmatprep.subr.mxu0 0.0
    %2502 = vmatpush1.xpose.msra.mxu0 0.0
    %2503 = vmatprep.subr.mxu0 0.0
    %2504 = vmatpush1.xpose.msra.mxu0 0.0
    %2505 = vmatprep.subr.mxu0 0.0
    %2506 = vmatpush1.xpose.msra.mxu0 0.0
    %2507 = vmatprep.subr.mxu0 0.0
    %2508 = vmatpush1.xpose.msra.mxu0 0.0
    %2509 = vmatprep.subr.mxu0 0.0
    %2510 = vmatpush1.xpose.msra.mxu0 0.0
    %2511 = vmatprep.subr.mxu0 0.0
    %2512 = vmatpush1.xpose.msra.mxu0 0.0
    %2513 = vmatprep.subr.mxu0 0.0
    %2514 = vmatpush1.xpose.msra.mxu0 0.0
    %2515 = vmatprep.subr.mxu0 0.0
    %2516 = vmatpush1.xpose.msra.mxu0 0.0
    %2517 = vmatprep.subr.mxu0 0.0
    %2518 = vmatpush1.xpose.msra.mxu0 %v2491
    %2519 = vmatprep.subr.mxu0 0.0
    %2520 = vmatpush1.xpose.msra.mxu0 %v2489
    %2521 = vmatprep.subr.mxu0 0.0
    %2522 = vmatpush1.xpose.msra.mxu0 %v2487
    %2523 = vmatprep.subr.mxu0 0.0
    %2524 = vmatpush1.xpose.msra.mxu0 %v2485
    %2525 = vmatprep.subr.mxu0 0.0
    %2526 = vmatpush2.xpose.msra.mxu0 0.0
    %2527 = vmatprep.subr.mxu0 0.0
    %2528 = vmatpush2.xpose.msra.mxu0 0.0
    %2529 = vmatprep.subr.mxu0 0.0
    %2530 = vmatpush2.xpose.msra.mxu0 0.0
    %2531 = vmatprep.subr.mxu0 0.0
    %2532 = vmatpush2.xpose.msra.mxu0 0.0
    %2533 = vmatprep.subr.mxu0 0.0
    %2534 = vmatpush2.xpose.msra.mxu0 0.0
    %2535 = vmatprep.subr.mxu0 0.0
    %2536 = vmatpush2.xpose.msra.mxu0 0.0
    %2537 = vmatprep.subr.mxu0 0.0
    %2538 = vmatpush2.xpose.msra.mxu0 0.0
    %2539 = vmatprep.subr.mxu0 0.0
    %2540 = vmatpush2.xpose.msra.mxu0 0.0
    %2541 = vmatprep.subr.mxu0 0.0
    %2542 = vmatpush2.xpose.msra.mxu0 0.0
    %2543 = vmatprep.subr.mxu0 0.0
    %2544 = vmatpush2.xpose.msra.mxu0 0.0
    %2545 = vmatprep.subr.mxu0 0.0
    %2546 = vmatpush2.xpose.msra.mxu0 0.0
    %2547 = vmatprep.subr.mxu0 0.0
    %2548 = vmatpush2.xpose.msra.mxu0 0.0
    %2549 = vmatprep.subr.mxu0 0.0
    %2550 = vmatpush2.xpose.msra.mxu0 0.0
    %2551 = vmatprep.subr.mxu0 0.0
    %2552 = vmatpush2.xpose.msra.mxu0 0.0
    %2553 = vmatprep.subr.mxu0 0.0
    %2554 = vmatpush2.xpose.msra.mxu0 0.0
    %2555 = vmatprep.subr.mxu0 0.0
    %2556 = vmatpush2.xpose.msra.mxu0 0.0
    %2557 = vmatprep.mubr.f32.mxu0 0.0
    %2558 = vmatmul.mubr.f32.gmra.mxu0 %v2477
    %v2559 = vpop.f32.mrf.mxu0
    %v2560 = vadd.f32 %v220, %v2559
    %v2561 = vpop.f32.mrf.mxu0
    %2562 = vmatprep.mubr.f32.mxu0 0.0
    %2563 = vmatmul.mubr.f32.gmra.mxu0 %v2479
    %v2564 = vpop.f32.mrf.mxu0
    %v2565 = vadd.f32 %v220, %v2564
    %v2566 = vpop.f32.mrf.mxu0
    %2567 = vmatprep.mubr.f32.mxu0 0.0
    %2568 = vmatmul.mubr.f32.gmra.mxu0 %v2481
    %v2569 = vpop.f32.mrf.mxu0
    %v2570 = vadd.f32 %v220, %v2569
    %v2571 = vpop.f32.mrf.mxu0
    %2572 = vmatprep.mubr.f32.mxu0 0.0
    %2573 = vmatmul.mubr.f32.gmra.mxu0 %v2483
    %v2574 = vpop.f32.mrf.mxu0
    %v2575 = vadd.f32 %v220, %v2574
    %v2576 = vpop.f32.mrf.mxu0
    %2577 = vdwg.mxu0
    %v2578 = vsel %vm438, %v2560, -inf
    %2579 = vmax.xlane.f32.xlu0 %v2578
    %v2580 = vpop.xlane.xlu0 %2579
    %v2581 = vsel %vm438, %v2565, -inf
    %2582 = vmax.xlane.f32.xlu0 %v2581
    %v2583 = vpop.xlane.xlu0 %2582
    %v2584 = vsel %vm438, %v2570, -inf
    %2585 = vmax.xlane.f32.xlu0 %v2584
    %v2586 = vpop.xlane.xlu0 %2585
    %v2587 = vsel %vm438, %v2575, -inf
    %2588 = vmax.xlane.f32.xlu0 %v2587
    %v2589 = vpop.xlane.xlu0 %2588
    %v2590 = vsub.f32 %v2560, %v2580
    %v2591 = vsub.f32 %v2565, %v2583
    %v2592 = vsub.f32 %v2570, %v2586
    %v2593 = vsub.f32 %v2575, %v2589
    %v2594 = vmul.f32 %v2590, 1.442695
    %v2595 = vpow.pop %v2594
    %v2596 = vmul.f32 %v2591, 1.442695
    %v2597 = vpow.pop %v2596
    %v2598 = vmul.f32 %v2592, 1.442695
    %v2599 = vpow.pop %v2598
    %v2600 = vmul.f32 %v2593, 1.442695
    %v2601 = vpow.pop %v2600
    %v2602 = vsel %vm438, %v2595, 0.0
    %2603 = vadd.xlane.f32.xlu0 %v2602
    %v2604 = vpop.xlane.xlu0 %2603
    %v2605 = vsel %vm438, %v2597, 0.0
    %2606 = vadd.xlane.f32.xlu0 %v2605
    %v2607 = vpop.xlane.xlu0 %2606
    %v2608 = vsel %vm438, %v2599, 0.0
    %2609 = vadd.xlane.f32.xlu0 %v2608
    %v2610 = vpop.xlane.xlu0 %2609
    %v2611 = vsel %vm438, %v2601, 0.0
    %2612 = vadd.xlane.f32.xlu0 %v2611
    %v2613 = vpop.xlane.xlu0 %2612
    %v2614 = vrcp.pop %v2604
    %v2615 = vrcp.pop %v2607
    %v2616 = vrcp.pop %v2610
    %v2617 = vrcp.pop %v2613
    %v2618 = vmul.f32 %v2595, %v2614
    %v2619 = vmul.f32 %v2597, %v2615
    %v2620 = vmul.f32 %v2599, %v2616
    %v2621 = vmul.f32 %v2601, %v2617
    %v2623 = vsel %vm438, %v2618, 0
    %v2626 = vsel %vm438, %v2619, 0
    %v2629 = vsel %vm438, %v2620, 0
    %v2632 = vsel %vm438, %v2621, 0
    %2634 = vmatprep.subr.mxu0 0.0
    %2635 = vmatpush1.msra.mxu0 0.0
    %2636 = vmatprep.subr.mxu0 0.0
    %2637 = vmatpush1.msra.mxu0 0.0
    %2638 = vmatprep.subr.mxu0 0.0
    %2639 = vmatpush1.msra.mxu0 0.0
    %2640 = vmatprep.subr.mxu0 0.0
    %2641 = vmatpush1.msra.mxu0 0.0
    %2642 = vmatprep.subr.mxu0 0.0
    %2643 = vmatpush1.msra.mxu0 0.0
    %2644 = vmatprep.subr.mxu0 0.0
    %2645 = vmatpush1.msra.mxu0 0.0
    %2646 = vmatprep.subr.mxu0 0.0
    %2647 = vmatpush1.msra.mxu0 0.0
    %2648 = vmatprep.subr.mxu0 0.0
    %2649 = vmatpush1.msra.mxu0 0.0
    %2650 = vmatprep.subr.mxu0 0.0
    %2651 = vmatpush1.msra.mxu0 0.0
    %2652 = vmatprep.subr.mxu0 0.0
    %2653 = vmatpush1.msra.mxu0 0.0
    %2654 = vmatprep.subr.mxu0 0.0
    %2655 = vmatpush1.msra.mxu0 0.0
    %2656 = vmatprep.subr.mxu0 0.0
    %2657 = vmatpush1.msra.mxu0 0.0
    %2658 = vmatprep.subr.mxu0 0.0
    %2659 = vmatpush1.msra.mxu0 %v1915
    %2660 = vmatprep.subr.mxu0 0.0
    %2661 = vmatpush1.msra.mxu0 %v1909
    %2662 = vmatprep.subr.mxu0 0.0
    %2663 = vmatpush1.msra.mxu0 %v1903
    %2664 = vmatprep.subr.mxu0 0.0
    %2665 = vmatpush1.msra.mxu0 %v1897
    %2666 = vmatprep.subr.mxu0 0.0
    %2667 = vmatpush2.msra.mxu0 0.0
    %2668 = vmatprep.subr.mxu0 0.0
    %2669 = vmatpush2.msra.mxu0 0.0
    %2670 = vmatprep.subr.mxu0 0.0
    %2671 = vmatpush2.msra.mxu0 0.0
    %2672 = vmatprep.subr.mxu0 0.0
    %2673 = vmatpush2.msra.mxu0 0.0
    %2674 = vmatprep.subr.mxu0 0.0
    %2675 = vmatpush2.msra.mxu0 0.0
    %2676 = vmatprep.subr.mxu0 0.0
    %2677 = vmatpush2.msra.mxu0 0.0
    %2678 = vmatprep.subr.mxu0 0.0
    %2679 = vmatpush2.msra.mxu0 0.0
    %2680 = vmatprep.subr.mxu0 0.0
    %2681 = vmatpush2.msra.mxu0 0.0
    %2682 = vmatprep.subr.mxu0 0.0
    %2683 = vmatpush2.msra.mxu0 0.0
    %2684 = vmatprep.subr.mxu0 0.0
    %2685 = vmatpush2.msra.mxu0 0.0
    %2686 = vmatprep.subr.mxu0 0.0
    %2687 = vmatpush2.msra.mxu0 0.0
    %2688 = vmatprep.subr.mxu0 0.0
    %2689 = vmatpush2.msra.mxu0 0.0
    %2690 = vmatprep.subr.mxu0 0.0
    %2691 = vmatpush2.msra.mxu0 0.0
    %2692 = vmatprep.subr.mxu0 0.0
    %2693 = vmatpush2.msra.mxu0 0.0
    %2694 = vmatprep.subr.mxu0 0.0
    %2695 = vmatpush2.msra.mxu0 0.0
    %2696 = vmatprep.subr.mxu0 0.0
    %2697 = vmatpush2.msra.mxu0 0.0
    %2698 = vmatprep.mubr.f32.mxu0 0.0
    %2699 = vmatmul.mubr.f32.gmra.mxu0 %v2623
    %v2700 = vpop.f32.mrf.mxu0
    %v2701 = vadd.f32 0.0, %v2700
    %v2702 = vpop.f32.mrf.mxu0
    %2703 = vmatprep.mubr.f32.mxu0 0.0
    %2704 = vmatmul.mubr.f32.gmra.mxu0 %v2626
    %v2705 = vpop.f32.mrf.mxu0
    %v2706 = vadd.f32 0.0, %v2705
    %v2707 = vpop.f32.mrf.mxu0
    %2708 = vmatprep.mubr.f32.mxu0 0.0
    %2709 = vmatmul.mubr.f32.gmra.mxu0 %v2629
    %v2710 = vpop.f32.mrf.mxu0
    %v2711 = vadd.f32 0.0, %v2710
    %v2712 = vpop.f32.mrf.mxu0
    %2713 = vmatprep.mubr.f32.mxu0 0.0
    %2714 = vmatmul.mubr.f32.gmra.mxu0 %v2632
    %v2715 = vpop.f32.mrf.mxu0
    %v2716 = vadd.f32 0.0, %v2715
    %v2717 = vpop.f32.mrf.mxu0
    %2718 = vdwg.mxu0
    %2719 = vrot.lane.b32.xlu0 %v1895, 96
    %v2720 = vpop.permute.xlu0 %2719
    %2721 = vrot.lane.b32.xlu0 %v1901, 96
    %v2722 = vpop.permute.xlu0 %2721
    %2723 = vrot.lane.b32.xlu0 %v1907, 96
    %v2724 = vpop.permute.xlu0 %2723
    %2725 = vrot.lane.b32.xlu0 %v1913, 96
    %v2726 = vpop.permute.xlu0 %2725
    %2727 = vrot.lane.b32.xlu0 %v1895, 32
    %v2728 = vpop.permute.xlu0 %2727
    %2729 = vrot.lane.b32.xlu0 %v1901, 32
    %v2730 = vpop.permute.xlu0 %2729
    %2731 = vrot.lane.b32.xlu0 %v1907, 32
    %v2732 = vpop.permute.xlu0 %2731
    %2733 = vrot.lane.b32.xlu0 %v1913, 32
    %v2734 = vpop.permute.xlu0 %2733
    %v2735 = vsel %vm438, %v2720, 0
    %v2737 = vsel %vm438, %v2722, 0
    %v2739 = vsel %vm438, %v2724, 0
    %v2741 = vsel %vm438, %v2726, 0
    %v2743 = vsel %vm438, %v2728, 0
    %v2745 = vsel %vm438, %v2730, 0
    %v2747 = vsel %vm438, %v2732, 0
    %v2749 = vsel %vm438, %v2734, 0
    %2751 = vmatprep.subr.mxu0 0.0
    %2752 = vmatpush1.xpose.msra.mxu0 0.0
    %2753 = vmatprep.subr.mxu0 0.0
    %2754 = vmatpush1.xpose.msra.mxu0 0.0
    %2755 = vmatprep.subr.mxu0 0.0
    %2756 = vmatpush1.xpose.msra.mxu0 0.0
    %2757 = vmatprep.subr.mxu0 0.0
    %2758 = vmatpush1.xpose.msra.mxu0 0.0
    %2759 = vmatprep.subr.mxu0 0.0
    %2760 = vmatpush1.xpose.msra.mxu0 0.0
    %2761 = vmatprep.subr.mxu0 0.0
    %2762 = vmatpush1.xpose.msra.mxu0 0.0
    %2763 = vmatprep.subr.mxu0 0.0
    %2764 = vmatpush1.xpose.msra.mxu0 0.0
    %2765 = vmatprep.subr.mxu0 0.0
    %2766 = vmatpush1.xpose.msra.mxu0 0.0
    %2767 = vmatprep.subr.mxu0 0.0
    %2768 = vmatpush1.xpose.msra.mxu0 0.0
    %2769 = vmatprep.subr.mxu0 0.0
    %2770 = vmatpush1.xpose.msra.mxu0 0.0
    %2771 = vmatprep.subr.mxu0 0.0
    %2772 = vmatpush1.xpose.msra.mxu0 0.0
    %2773 = vmatprep.subr.mxu0 0.0
    %2774 = vmatpush1.xpose.msra.mxu0 0.0
    %2775 = vmatprep.subr.mxu0 0.0
    %2776 = vmatpush1.xpose.msra.mxu0 %v2749
    %2777 = vmatprep.subr.mxu0 0.0
    %2778 = vmatpush1.xpose.msra.mxu0 %v2747
    %2779 = vmatprep.subr.mxu0 0.0
    %2780 = vmatpush1.xpose.msra.mxu0 %v2745
    %2781 = vmatprep.subr.mxu0 0.0
    %2782 = vmatpush1.xpose.msra.mxu0 %v2743
    %2783 = vmatprep.subr.mxu0 0.0
    %2784 = vmatpush2.xpose.msra.mxu0 0.0
    %2785 = vmatprep.subr.mxu0 0.0
    %2786 = vmatpush2.xpose.msra.mxu0 0.0
    %2787 = vmatprep.subr.mxu0 0.0
    %2788 = vmatpush2.xpose.msra.mxu0 0.0
    %2789 = vmatprep.subr.mxu0 0.0
    %2790 = vmatpush2.xpose.msra.mxu0 0.0
    %2791 = vmatprep.subr.mxu0 0.0
    %2792 = vmatpush2.xpose.msra.mxu0 0.0
    %2793 = vmatprep.subr.mxu0 0.0
    %2794 = vmatpush2.xpose.msra.mxu0 0.0
    %2795 = vmatprep.subr.mxu0 0.0
    %2796 = vmatpush2.xpose.msra.mxu0 0.0
    %2797 = vmatprep.subr.mxu0 0.0
    %2798 = vmatpush2.xpose.msra.mxu0 0.0
    %2799 = vmatprep.subr.mxu0 0.0
    %2800 = vmatpush2.xpose.msra.mxu0 0.0
    %2801 = vmatprep.subr.mxu0 0.0
    %2802 = vmatpush2.xpose.msra.mxu0 0.0
    %2803 = vmatprep.subr.mxu0 0.0
    %2804 = vmatpush2.xpose.msra.mxu0 0.0
    %2805 = vmatprep.subr.mxu0 0.0
    %2806 = vmatpush2.xpose.msra.mxu0 0.0
    %2807 = vmatprep.subr.mxu0 0.0
    %2808 = vmatpush2.xpose.msra.mxu0 0.0
    %2809 = vmatprep.subr.mxu0 0.0
    %2810 = vmatpush2.xpose.msra.mxu0 0.0
    %2811 = vmatprep.subr.mxu0 0.0
    %2812 = vmatpush2.xpose.msra.mxu0 0.0
    %2813 = vmatprep.subr.mxu0 0.0
    %2814 = vmatpush2.xpose.msra.mxu0 0.0
    %2815 = vmatprep.mubr.f32.mxu0 0.0
    %2816 = vmatmul.mubr.f32.gmra.mxu0 %v2735
    %v2817 = vpop.f32.mrf.mxu0
    %v2818 = vadd.f32 %v220, %v2817
    %v2819 = vpop.f32.mrf.mxu0
    %2820 = vmatprep.mubr.f32.mxu0 0.0
    %2821 = vmatmul.mubr.f32.gmra.mxu0 %v2737
    %v2822 = vpop.f32.mrf.mxu0
    %v2823 = vadd.f32 %v220, %v2822
    %v2824 = vpop.f32.mrf.mxu0
    %2825 = vmatprep.mubr.f32.mxu0 0.0
    %2826 = vmatmul.mubr.f32.gmra.mxu0 %v2739
    %v2827 = vpop.f32.mrf.mxu0
    %v2828 = vadd.f32 %v220, %v2827
    %v2829 = vpop.f32.mrf.mxu0
    %2830 = vmatprep.mubr.f32.mxu0 0.0
    %2831 = vmatmul.mubr.f32.gmra.mxu0 %v2741
    %v2832 = vpop.f32.mrf.mxu0
    %v2833 = vadd.f32 %v220, %v2832
    %v2834 = vpop.f32.mrf.mxu0
    %2835 = vdwg.mxu0
    %v2836 = vsel %vm438, %v2818, -inf
    %2837 = vmax.xlane.f32.xlu0 %v2836
    %v2838 = vpop.xlane.xlu0 %2837
    %v2839 = vsel %vm438, %v2823, -inf
    %2840 = vmax.xlane.f32.xlu0 %v2839
    %v2841 = vpop.xlane.xlu0 %2840
    %v2842 = vsel %vm438, %v2828, -inf
    %2843 = vmax.xlane.f32.xlu0 %v2842
    %v2844 = vpop.xlane.xlu0 %2843
    %v2845 = vsel %vm438, %v2833, -inf
    %2846 = vmax.xlane.f32.xlu0 %v2845
    %v2847 = vpop.xlane.xlu0 %2846
    %v2848 = vsub.f32 %v2818, %v2838
    %v2849 = vsub.f32 %v2823, %v2841
    %v2850 = vsub.f32 %v2828, %v2844
    %v2851 = vsub.f32 %v2833, %v2847
    %v2852 = vmul.f32 %v2848, 1.442695
    %v2853 = vpow.pop %v2852
    %v2854 = vmul.f32 %v2849, 1.442695
    %v2855 = vpow.pop %v2854
    %v2856 = vmul.f32 %v2850, 1.442695
    %v2857 = vpow.pop %v2856
    %v2858 = vmul.f32 %v2851, 1.442695
    %v2859 = vpow.pop %v2858
    %v2860 = vsel %vm438, %v2853, 0.0
    %2861 = vadd.xlane.f32.xlu0 %v2860
    %v2862 = vpop.xlane.xlu0 %2861
    %v2863 = vsel %vm438, %v2855, 0.0
    %2864 = vadd.xlane.f32.xlu0 %v2863
    %v2865 = vpop.xlane.xlu0 %2864
    %v2866 = vsel %vm438, %v2857, 0.0
    %2867 = vadd.xlane.f32.xlu0 %v2866
    %v2868 = vpop.xlane.xlu0 %2867
    %v2869 = vsel %vm438, %v2859, 0.0
    %2870 = vadd.xlane.f32.xlu0 %v2869
    %v2871 = vpop.xlane.xlu0 %2870
    %v2872 = vrcp.pop %v2862
    %v2873 = vrcp.pop %v2865
    %v2874 = vrcp.pop %v2868
    %v2875 = vrcp.pop %v2871
    %v2876 = vmul.f32 %v2853, %v2872
    %v2877 = vmul.f32 %v2855, %v2873
    %v2878 = vmul.f32 %v2857, %v2874
    %v2879 = vmul.f32 %v2859, %v2875
    %2884 = vrot.lane.b32.xlu0 %v1897, 96
    %v2885 = vpop.permute.xlu0 %2884
    %2886 = vrot.lane.b32.xlu0 %v1903, 96
    %v2887 = vpop.permute.xlu0 %2886
    %2888 = vrot.lane.b32.xlu0 %v1909, 96
    %v2889 = vpop.permute.xlu0 %2888
    %2890 = vrot.lane.b32.xlu0 %v1915, 96
    %v2891 = vpop.permute.xlu0 %2890
    %v2897 = vsel %vm438, %v2876, 0
    %v2900 = vsel %vm438, %v2877, 0
    %v2903 = vsel %vm438, %v2878, 0
    %v2906 = vsel %vm438, %v2879, 0
    %2908 = vmatprep.subr.mxu0 0.0
    %2909 = vmatpush1.msra.mxu0 0.0
    %2910 = vmatprep.subr.mxu0 0.0
    %2911 = vmatpush1.msra.mxu0 0.0
    %2912 = vmatprep.subr.mxu0 0.0
    %2913 = vmatpush1.msra.mxu0 0.0
    %2914 = vmatprep.subr.mxu0 0.0
    %2915 = vmatpush1.msra.mxu0 0.0
    %2916 = vmatprep.subr.mxu0 0.0
    %2917 = vmatpush1.msra.mxu0 0.0
    %2918 = vmatprep.subr.mxu0 0.0
    %2919 = vmatpush1.msra.mxu0 0.0
    %2920 = vmatprep.subr.mxu0 0.0
    %2921 = vmatpush1.msra.mxu0 0.0
    %2922 = vmatprep.subr.mxu0 0.0
    %2923 = vmatpush1.msra.mxu0 0.0
    %2924 = vmatprep.subr.mxu0 0.0
    %2925 = vmatpush1.msra.mxu0 0.0
    %2926 = vmatprep.subr.mxu0 0.0
    %2927 = vmatpush1.msra.mxu0 0.0
    %2928 = vmatprep.subr.mxu0 0.0
    %2929 = vmatpush1.msra.mxu0 0.0
    %2930 = vmatprep.subr.mxu0 0.0
    %2931 = vmatpush1.msra.mxu0 0.0
    %2932 = vmatprep.subr.mxu0 0.0
    %2933 = vmatpush1.msra.mxu0 %v2891
    %2934 = vmatprep.subr.mxu0 0.0
    %2935 = vmatpush1.msra.mxu0 %v2889
    %2936 = vmatprep.subr.mxu0 0.0
    %2937 = vmatpush1.msra.mxu0 %v2887
    %2938 = vmatprep.subr.mxu0 0.0
    %2939 = vmatpush1.msra.mxu0 %v2885
    %2940 = vmatprep.subr.mxu0 0.0
    %2941 = vmatpush2.msra.mxu0 0.0
    %2942 = vmatprep.subr.mxu0 0.0
    %2943 = vmatpush2.msra.mxu0 0.0
    %2944 = vmatprep.subr.mxu0 0.0
    %2945 = vmatpush2.msra.mxu0 0.0
    %2946 = vmatprep.subr.mxu0 0.0
    %2947 = vmatpush2.msra.mxu0 0.0
    %2948 = vmatprep.subr.mxu0 0.0
    %2949 = vmatpush2.msra.mxu0 0.0
    %2950 = vmatprep.subr.mxu0 0.0
    %2951 = vmatpush2.msra.mxu0 0.0
    %2952 = vmatprep.subr.mxu0 0.0
    %2953 = vmatpush2.msra.mxu0 0.0
    %2954 = vmatprep.subr.mxu0 0.0
    %2955 = vmatpush2.msra.mxu0 0.0
    %2956 = vmatprep.subr.mxu0 0.0
    %2957 = vmatpush2.msra.mxu0 0.0
    %2958 = vmatprep.subr.mxu0 0.0
    %2959 = vmatpush2.msra.mxu0 0.0
    %2960 = vmatprep.subr.mxu0 0.0
    %2961 = vmatpush2.msra.mxu0 0.0
    %2962 = vmatprep.subr.mxu0 0.0
    %2963 = vmatpush2.msra.mxu0 0.0
    %2964 = vmatprep.subr.mxu0 0.0
    %2965 = vmatpush2.msra.mxu0 0.0
    %2966 = vmatprep.subr.mxu0 0.0
    %2967 = vmatpush2.msra.mxu0 0.0
    %2968 = vmatprep.subr.mxu0 0.0
    %2969 = vmatpush2.msra.mxu0 0.0
    %2970 = vmatprep.subr.mxu0 0.0
    %2971 = vmatpush2.msra.mxu0 0.0
    %2972 = vmatprep.mubr.f32.mxu0 0.0
    %2973 = vmatmul.mubr.f32.gmra.mxu0 %v2897
    %v2974 = vpop.f32.mrf.mxu0
    %v2975 = vadd.f32 0.0, %v2974
    %v2976 = vpop.f32.mrf.mxu0
    %2977 = vmatprep.mubr.f32.mxu0 0.0
    %2978 = vmatmul.mubr.f32.gmra.mxu0 %v2900
    %v2979 = vpop.f32.mrf.mxu0
    %v2980 = vadd.f32 0.0, %v2979
    %v2981 = vpop.f32.mrf.mxu0
    %2982 = vmatprep.mubr.f32.mxu0 0.0
    %2983 = vmatmul.mubr.f32.gmra.mxu0 %v2903
    %v2984 = vpop.f32.mrf.mxu0
    %v2985 = vadd.f32 0.0, %v2984
    %v2986 = vpop.f32.mrf.mxu0
    %2987 = vmatprep.mubr.f32.mxu0 0.0
    %2988 = vmatmul.mubr.f32.gmra.mxu0 %v2906
    %v2989 = vpop.f32.mrf.mxu0
    %v2990 = vadd.f32 0.0, %v2989
    %v2991 = vpop.f32.mrf.mxu0
    %2992 = vdwg.mxu0
    %2997 = vrot.lane.b32.xlu0 %v2975, 32
    %v2998 = vpop.permute.xlu0 %2997
    %2999 = vrot.lane.b32.xlu0 %v2980, 32
    %v3000 = vpop.permute.xlu0 %2999
    %3001 = vrot.lane.b32.xlu0 %v2985, 32
    %v3002 = vpop.permute.xlu0 %3001
    %3003 = vrot.lane.b32.xlu0 %v2990, 32
    %v3004 = vpop.permute.xlu0 %3003
    %v3009 = vsel %vm438, %v2701, %v2998
    %v3010 = vsel %vm438, %v2706, %v3000
    %v3011 = vsel %vm438, %v2711, %v3002
    %v3012 = vsel %vm438, %v2716, %v3004
    %v3014 = vsel %vm290, %v2461, 0
    %v3017 = vsel %vm290, %v2462, 0
    %v3020 = vsel %vm290, %v2463, 0
    %v3023 = vsel %vm290, %v2464, 0
    %v3026 = vsel %vm290, %v3009, 0
    %v3029 = vsel %vm290, %v3010, 0
    %v3032 = vsel %vm290, %v3011, 0
    %v3035 = vsel %vm290, %v3012, 0
    %3037 = vmatprep.subr.mxu0 0.0
    %3038 = vmatpush1.msra.mxu0 0.0
    %3039 = vmatprep.subr.mxu0 0.0
    %3040 = vmatpush1.msra.mxu0 0.0
    %3041 = vmatprep.subr.mxu0 0.0
    %3042 = vmatpush1.msra.mxu0 0.0
    %3043 = vmatprep.subr.mxu0 0.0
    %3044 = vmatpush1.msra.mxu0 0.0
    %3045 = vmatprep.subr.mxu0 0.0
    %3046 = vmatpush1.msra.mxu0 0.0
    %3047 = vmatprep.subr.mxu0 0.0
    %3048 = vmatpush1.msra.mxu0 0.0
    %3049 = vmatprep.subr.mxu0 0.0
    %3050 = vmatpush1.msra.mxu0 0.0
    %3051 = vmatprep.subr.mxu0 0.0
    %3052 = vmatpush1.msra.mxu0 0.0
    %3053 = vmatprep.subr.mxu0 0.0
    %3054 = vmatpush1.msra.mxu0 %v245
    %3055 = vmatprep.subr.mxu0 0.0
    %3056 = vmatpush1.msra.mxu0 %v244
    %3057 = vmatprep.subr.mxu0 0.0
    %3058 = vmatpush1.msra.mxu0 %v243
    %3059 = vmatprep.subr.mxu0 0.0
    %3060 = vmatpush1.msra.mxu0 %v242
    %3061 = vmatprep.subr.mxu0 0.0
    %3062 = vmatpush1.msra.mxu0 %v241
    %3063 = vmatprep.subr.mxu0 0.0
    %3064 = vmatpush1.msra.mxu0 %v240
    %3065 = vmatprep.subr.mxu0 0.0
    %3066 = vmatpush1.msra.mxu0 %v239
    %3067 = vmatprep.subr.mxu0 0.0
    %3068 = vmatpush1.msra.mxu0 %v238
    %3069 = vmatprep.subr.mxu0 0.0
    %3070 = vmatpush2.msra.mxu0 0.0
    %3071 = vmatprep.subr.mxu0 0.0
    %3072 = vmatpush2.msra.mxu0 0.0
    %3073 = vmatprep.subr.mxu0 0.0
    %3074 = vmatpush2.msra.mxu0 0.0
    %3075 = vmatprep.subr.mxu0 0.0
    %3076 = vmatpush2.msra.mxu0 0.0
    %3077 = vmatprep.subr.mxu0 0.0
    %3078 = vmatpush2.msra.mxu0 0.0
    %3079 = vmatprep.subr.mxu0 0.0
    %3080 = vmatpush2.msra.mxu0 0.0
    %3081 = vmatprep.subr.mxu0 0.0
    %3082 = vmatpush2.msra.mxu0 0.0
    %3083 = vmatprep.subr.mxu0 0.0
    %3084 = vmatpush2.msra.mxu0 0.0
    %3085 = vmatprep.subr.mxu0 0.0
    %3086 = vmatpush2.msra.mxu0 0.0
    %3087 = vmatprep.subr.mxu0 0.0
    %3088 = vmatpush2.msra.mxu0 0.0
    %3089 = vmatprep.subr.mxu0 0.0
    %3090 = vmatpush2.msra.mxu0 0.0
    %3091 = vmatprep.subr.mxu0 0.0
    %3092 = vmatpush2.msra.mxu0 0.0
    %3093 = vmatprep.subr.mxu0 0.0
    %3094 = vmatpush2.msra.mxu0 0.0
    %3095 = vmatprep.subr.mxu0 0.0
    %3096 = vmatpush2.msra.mxu0 0.0
    %3097 = vmatprep.subr.mxu0 0.0
    %3098 = vmatpush2.msra.mxu0 0.0
    %3099 = vmatprep.subr.mxu0 0.0
    %3100 = vmatpush2.msra.mxu0 0.0
    %3101 = vmatprep.mubr.f32.mxu0 0.0
    %3102 = vmatmul.mubr.f32.gmra.mxu0 %v3014
    %v3103 = vpop.f32.mrf.mxu0
    %v3104 = vadd.f32 %v1527, %v3103
    %v3105 = vpop.f32.mrf.mxu0
    %3106 = vmatprep.mubr.f32.mxu0 0.0
    %3107 = vmatmul.mubr.f32.gmra.mxu0 %v3017
    %v3108 = vpop.f32.mrf.mxu0
    %v3109 = vadd.f32 %v1527, %v3108
    %v3110 = vpop.f32.mrf.mxu0
    %3111 = vmatprep.mubr.f32.mxu0 0.0
    %3112 = vmatmul.mubr.f32.gmra.mxu0 %v3020
    %v3113 = vpop.f32.mrf.mxu0
    %v3114 = vadd.f32 %v1527, %v3113
    %v3115 = vpop.f32.mrf.mxu0
    %3116 = vmatprep.mubr.f32.mxu0 0.0
    %3117 = vmatmul.mubr.f32.gmra.mxu0 %v3023
    %v3118 = vpop.f32.mrf.mxu0
    %v3119 = vadd.f32 %v1527, %v3118
    %v3120 = vpop.f32.mrf.mxu0
    %3121 = vmatprep.mubr.f32.mxu0 0.0
    %3122 = vmatmul.mubr.f32.gmra.mxu0 %v3026
    %v3123 = vpop.f32.mrf.mxu0
    %v3124 = vadd.f32 %v1527, %v3123
    %v3125 = vpop.f32.mrf.mxu0
    %3126 = vmatprep.mubr.f32.mxu0 0.0
    %3127 = vmatmul.mubr.f32.gmra.mxu0 %v3029
    %v3128 = vpop.f32.mrf.mxu0
    %v3129 = vadd.f32 %v1527, %v3128
    %v3130 = vpop.f32.mrf.mxu0
    %3131 = vmatprep.mubr.f32.mxu0 0.0
    %3132 = vmatmul.mubr.f32.gmra.mxu0 %v3032
    %v3133 = vpop.f32.mrf.mxu0
    %v3134 = vadd.f32 %v1527, %v3133
    %v3135 = vpop.f32.mrf.mxu0
    %3136 = vmatprep.mubr.f32.mxu0 0.0
    %3137 = vmatmul.mubr.f32.gmra.mxu0 %v3035
    %v3138 = vpop.f32.mrf.mxu0
    %v3139 = vadd.f32 %v1527, %v3138
    %v3140 = vpop.f32.mrf.mxu0
    %3141 = vdwg.mxu0
    %3142 = vmatprep.subr.mxu0 0.0
    %3143 = vmatpush1.msra.mxu0 %v262
    %3144 = vmatprep.subr.mxu0 0.0
    %3145 = vmatpush1.msra.mxu0 %v261
    %3146 = vmatprep.subr.mxu0 0.0
    %3147 = vmatpush1.msra.mxu0 %v260
    %3148 = vmatprep.subr.mxu0 0.0
    %3149 = vmatpush1.msra.mxu0 %v259
    %3150 = vmatprep.subr.mxu0 0.0
    %3151 = vmatpush1.msra.mxu0 %v258
    %3152 = vmatprep.subr.mxu0 0.0
    %3153 = vmatpush1.msra.mxu0 %v257
    %3154 = vmatprep.subr.mxu0 0.0
    %3155 = vmatpush1.msra.mxu0 %v256
    %3156 = vmatprep.subr.mxu0 0.0
    %3157 = vmatpush1.msra.mxu0 %v255
    %3158 = vmatprep.subr.mxu0 0.0
    %3159 = vmatpush1.msra.mxu0 %v254
    %3160 = vmatprep.subr.mxu0 0.0
    %3161 = vmatpush1.msra.mxu0 %v253
    %3162 = vmatprep.subr.mxu0 0.0
    %3163 = vmatpush1.msra.mxu0 %v252
    %3164 = vmatprep.subr.mxu0 0.0
    %3165 = vmatpush1.msra.mxu0 %v251
    %3166 = vmatprep.subr.mxu0 0.0
    %3167 = vmatpush1.msra.mxu0 %v250
    %3168 = vmatprep.subr.mxu0 0.0
    %3169 = vmatpush1.msra.mxu0 %v249
    %3170 = vmatprep.subr.mxu0 0.0
    %3171 = vmatpush1.msra.mxu0 %v248
    %3172 = vmatprep.subr.mxu0 0.0
    %3173 = vmatpush1.msra.mxu0 %v247
    %3174 = vmatprep.subr.mxu0 0.0
    %3175 = vmatpush2.msra.mxu0 0.0
    %3176 = vmatprep.subr.mxu0 0.0
    %3177 = vmatpush2.msra.mxu0 0.0
    %3178 = vmatprep.subr.mxu0 0.0
    %3179 = vmatpush2.msra.mxu0 0.0
    %3180 = vmatprep.subr.mxu0 0.0
    %3181 = vmatpush2.msra.mxu0 0.0
    %3182 = vmatprep.subr.mxu0 0.0
    %3183 = vmatpush2.msra.mxu0 0.0
    %3184 = vmatprep.subr.mxu0 0.0
    %3185 = vmatpush2.msra.mxu0 0.0
    %3186 = vmatprep.subr.mxu0 0.0
    %3187 = vmatpush2.msra.mxu0 0.0
    %3188 = vmatprep.subr.mxu0 0.0
    %3189 = vmatpush2.msra.mxu0 0.0
    %3190 = vmatprep.subr.mxu0 0.0
    %3191 = vmatpush2.msra.mxu0 0.0
    %3192 = vmatprep.subr.mxu0 0.0
    %3193 = vmatpush2.msra.mxu0 0.0
    %3194 = vmatprep.subr.mxu0 0.0
    %3195 = vmatpush2.msra.mxu0 0.0
    %3196 = vmatprep.subr.mxu0 0.0
    %3197 = vmatpush2.msra.mxu0 0.0
    %3198 = vmatprep.subr.mxu0 0.0
    %3199 = vmatpush2.msra.mxu0 0.0
    %3200 = vmatprep.subr.mxu0 0.0
    %3201 = vmatpush2.msra.mxu0 0.0
    %3202 = vmatprep.subr.mxu0 0.0
    %3203 = vmatpush2.msra.mxu0 0.0
    %3204 = vmatprep.subr.mxu0 0.0
    %3205 = vmatpush2.msra.mxu0 0.0
    %3206 = vmatprep.mubr.f32.mxu0 0.0
    %3207 = vmatmul.mubr.f32.gmra.mxu0 %v3104
    %v3208 = vpop.f32.mrf.mxu0
    %v3209 = vpop.f32.mrf.mxu0
    %3210 = vmatprep.mubr.f32.mxu0 0.0
    %3211 = vmatmul.mubr.f32.gmra.mxu0 %v3109
    %v3212 = vpop.f32.mrf.mxu0
    %v3213 = vadd.f32 %v1662, %v3212
    %v3214 = vpop.f32.mrf.mxu0
    %3215 = vmatprep.mubr.f32.mxu0 0.0
    %3216 = vmatmul.mubr.f32.gmra.mxu0 %v3114
    %v3217 = vpop.f32.mrf.mxu0
    %v3218 = vpop.f32.mrf.mxu0
    %3219 = vmatprep.mubr.f32.mxu0 0.0
    %3220 = vmatmul.mubr.f32.gmra.mxu0 %v3119
    %v3221 = vpop.f32.mrf.mxu0
    %v3222 = vpop.f32.mrf.mxu0
    %3223 = vmatprep.mubr.f32.mxu0 0.0
    %3224 = vmatmul.mubr.f32.gmra.mxu0 %v3124
    %v3225 = vpop.f32.mrf.mxu0
    %v3226 = vpop.f32.mrf.mxu0
    %3227 = vmatprep.mubr.f32.mxu0 0.0
    %3228 = vmatmul.mubr.f32.gmra.mxu0 %v3129
    %v3229 = vpop.f32.mrf.mxu0
    %v3230 = vadd.f32 %v1662, %v3229
    %v3231 = vpop.f32.mrf.mxu0
    %3232 = vmatprep.mubr.f32.mxu0 0.0
    %3233 = vmatmul.mubr.f32.gmra.mxu0 %v3134
    %v3234 = vpop.f32.mrf.mxu0
    %v3235 = vpop.f32.mrf.mxu0
    %3236 = vmatprep.mubr.f32.mxu0 0.0
    %3237 = vmatmul.mubr.f32.gmra.mxu0 %v3139
    %v3238 = vpop.f32.mrf.mxu0
    %v3239 = vpop.f32.mrf.mxu0
    %3240 = vdwg.mxu0
    %v3242 = vrot.slane %v3213, 4
    %v3245 = vrot.slane %v3230, 3
    %v3247 = vsel %vm271, %v3242, %v3245
    %v3248 = vlaneseq
    %v3249 = vshrl.u32 %v3248, 7
    %v3250 = vsub.s32 2, %v3249
    %v3251 = vrot.slane %v264, %v3250
    %v3252 = vmul.f32 %v3251, %v3247
    %v3253 = vadd.f32 %v1781, %v3252
    %v3254 = vld [vmem:[%s11] sm:$0xff]
    %v3255 = vld [vmem:[%s11 + $0x8] sm:$0xff]
    %v3256 = vld [vmem:[%s11 + $0x10] sm:$0xff]
    %v3257 = vld [vmem:[%s11 + $0x18] sm:$0xff]
    %v3258 = vld [vmem:[%s11 + $0x20] sm:$0xff]
    %v3259 = vld [vmem:[%s11 + $0x28] sm:$0xff]
    %v3260 = vld [vmem:[%s11 + $0x30] sm:$0xff]
    %v3261 = vld [vmem:[%s11 + $0x38] sm:$0xff]
    %v3262 = vld [vmem:[%s11 + $0x40] sm:$0xff]
    %v3263 = vld [vmem:[%s11 + $0x48] sm:$0xff]
    %v3264 = vld [vmem:[%s11 + $0x50] sm:$0xff]
    %v3265 = vld [vmem:[%s11 + $0x58] sm:$0xff]
    %v3266 = vld [vmem:[%s11 + $0x60] sm:$0xff]
    %v3267 = vld [vmem:[%s11 + $0x68] sm:$0xff]
    %v3268 = vld [vmem:[%s11 + $0x70] sm:$0xff]
    %v3269 = vld [vmem:[%s11 + $0x78] sm:$0xff]
    %v3270 = vld [vmem:[%s12] sm:$0x3]
    %v3272 = vlaneseq
    %v3273 = vshrl.u32 %v3272, 7
    %v3274 = vsub.s32 0, %v3273
    %v3275 = vrot.slane %v3270, %v3274
    %v3276 = vlaneseq
    %v3277 = vshrl.u32 %v3276, 7
    %v3278 = vsub.s32 1, %v3277
    %v3279 = vrot.slane %v3270, %v3278
    %v3283 = vsel %vm290, %v3253, 0
    %3285 = vmatprep.subr.mxu0 0.0
    %3286 = vmatpush1.msra.mxu0 0.0
    %3287 = vmatprep.subr.mxu0 0.0
    %3288 = vmatpush1.msra.mxu0 0.0
    %3289 = vmatprep.subr.mxu0 0.0
    %3290 = vmatpush1.msra.mxu0 0.0
    %3291 = vmatprep.subr.mxu0 0.0
    %3292 = vmatpush1.msra.mxu0 0.0
    %3293 = vmatprep.subr.mxu0 0.0
    %3294 = vmatpush1.msra.mxu0 0.0
    %3295 = vmatprep.subr.mxu0 0.0
    %3296 = vmatpush1.msra.mxu0 0.0
    %3297 = vmatprep.subr.mxu0 0.0
    %3298 = vmatpush1.msra.mxu0 0.0
    %3299 = vmatprep.subr.mxu0 0.0
    %3300 = vmatpush1.msra.mxu0 0.0
    %3301 = vmatprep.subr.mxu0 %v3269
    %3302 = vmatpush1.msra.mxu0 %v3268
    %3303 = vmatprep.subr.mxu0 %v3267
    %3304 = vmatpush1.msra.mxu0 %v3266
    %3305 = vmatprep.subr.mxu0 %v3265
    %3306 = vmatpush1.msra.mxu0 %v3264
    %3307 = vmatprep.subr.mxu0 %v3263
    %3308 = vmatpush1.msra.mxu0 %v3262
    %3309 = vmatprep.subr.mxu0 %v3261
    %3310 = vmatpush1.msra.mxu0 %v3260
    %3311 = vmatprep.subr.mxu0 %v3259
    %3312 = vmatpush1.msra.mxu0 %v3258
    %3313 = vmatprep.subr.mxu0 %v3257
    %3314 = vmatpush1.msra.mxu0 %v3256
    %3315 = vmatprep.subr.mxu0 %v3255
    %3316 = vmatpush1.msra.mxu0 %v3254
    %3317 = vmatprep.subr.mxu0 0.0
    %3318 = vmatpush2.msra.mxu0 0.0
    %3319 = vmatprep.subr.mxu0 0.0
    %3320 = vmatpush2.msra.mxu0 0.0
    %3321 = vmatprep.subr.mxu0 0.0
    %3322 = vmatpush2.msra.mxu0 0.0
    %3323 = vmatprep.subr.mxu0 0.0
    %3324 = vmatpush2.msra.mxu0 0.0
    %3325 = vmatprep.subr.mxu0 0.0
    %3326 = vmatpush2.msra.mxu0 0.0
    %3327 = vmatprep.subr.mxu0 0.0
    %3328 = vmatpush2.msra.mxu0 0.0
    %3329 = vmatprep.subr.mxu0 0.0
    %3330 = vmatpush2.msra.mxu0 0.0
    %3331 = vmatprep.subr.mxu0 0.0
    %3332 = vmatpush2.msra.mxu0 0.0
    %3333 = vmatprep.subr.mxu0 0.0
    %3334 = vmatpush2.msra.mxu0 0.0
    %3335 = vmatprep.subr.mxu0 0.0
    %3336 = vmatpush2.msra.mxu0 0.0
    %3337 = vmatprep.subr.mxu0 0.0
    %3338 = vmatpush2.msra.mxu0 0.0
    %3339 = vmatprep.subr.mxu0 0.0
    %3340 = vmatpush2.msra.mxu0 0.0
    %3341 = vmatprep.subr.mxu0 0.0
    %3342 = vmatpush2.msra.mxu0 0.0
    %3343 = vmatprep.subr.mxu0 0.0
    %3344 = vmatpush2.msra.mxu0 0.0
    %3345 = vmatprep.subr.mxu0 0.0
    %3346 = vmatpush2.msra.mxu0 0.0
    %3347 = vmatprep.subr.mxu0 0.0
    %3348 = vmatpush2.msra.mxu0 0.0
    %3349 = vmatprep.mubr.f32.mxu0 0.0
    %3350 = vmatmul.mubr.f32.gmra.mxu0 %v3283
    %v3351 = vpop.f32.mrf.mxu0
    %v3352 = vadd.f32 %v3275, %v3351
    %v3353 = vpop.f32.mrf.mxu0
    %v3354 = vadd.f32 %v3279, %v3353
    %3355 = vdwg.mxu0
    %v3356 = vld [vmem:[%s13] sm:$0x3]
    %v3358 = vlaneseq
    %v3359 = vshrl.u32 %v3358, 7
    %v3360 = vsub.s32 0, %v3359
    %v3361 = vrot.slane %v3356, %v3360
    %v3362 = vlaneseq
    %v3363 = vshrl.u32 %v3362, 7
    %v3364 = vsub.s32 1, %v3363
    %v3365 = vrot.slane %v3356, %v3364
    %v3368 = vmul.f32 %v3352, %v3361
    %v3369 = vmul.f32 %v3354, %v3365
    %v3370 = vld [vmem:[%s14] sm:$0x3]
    %v3372 = vlaneseq
    %v3373 = vshrl.u32 %v3372, 7
    %v3374 = vsub.s32 0, %v3373
    %v3375 = vrot.slane %v3370, %v3374
    %v3376 = vlaneseq
    %v3377 = vshrl.u32 %v3376, 7
    %v3378 = vsub.s32 1, %v3377
    %v3379 = vrot.slane %v3370, %v3378
    %v3382 = vadd.f32 %v3368, %v3375
    %v3383 = vadd.f32 %v3369, %v3379
    %v3384 = vmax.f32 %v3382, 0.0
    %v3385 = vmax.f32 %v3383, 0.0
    %v3386 = vld [vmem:[%s15] sm:$0xff]
    %v3387 = vld [vmem:[%s15 + $0x8] sm:$0xff]
    %v3388 = vld [vmem:[%s15 + $0x10] sm:$0xff]
    %v3389 = vld [vmem:[%s15 + $0x18] sm:$0xff]
    %v3390 = vld [vmem:[%s15 + $0x20] sm:$0xff]
    %v3391 = vld [vmem:[%s15 + $0x28] sm:$0xff]
    %v3392 = vld [vmem:[%s15 + $0x30] sm:$0xff]
    %v3393 = vld [vmem:[%s15 + $0x38] sm:$0xff]
    %v3394 = vld [vmem:[%s15 + $0x40] sm:$0xff]
    %v3395 = vld [vmem:[%s15 + $0x48] sm:$0xff]
    %v3396 = vld [vmem:[%s15 + $0x50] sm:$0xff]
    %v3397 = vld [vmem:[%s15 + $0x58] sm:$0xff]
    %v3398 = vld [vmem:[%s15 + $0x60] sm:$0xff]
    %v3399 = vld [vmem:[%s15 + $0x68] sm:$0xff]
    %v3400 = vld [vmem:[%s15 + $0x70] sm:$0xff]
    %v3401 = vld [vmem:[%s15 + $0x78] sm:$0xff]
    %v3402 = vld [vmem:[%s15 + $0x80] sm:$0xff]
    %v3403 = vld [vmem:[%s15 + $0x88] sm:$0xff]
    %v3404 = vld [vmem:[%s15 + $0x90] sm:$0xff]
    %v3405 = vld [vmem:[%s15 + $0x98] sm:$0xff]
    %v3406 = vld [vmem:[%s15 + $0xa0] sm:$0xff]
    %v3407 = vld [vmem:[%s15 + $0xa8] sm:$0xff]
    %v3408 = vld [vmem:[%s15 + $0xb0] sm:$0xff]
    %v3409 = vld [vmem:[%s15 + $0xb8] sm:$0xff]
    %v3410 = vld [vmem:[%s16] sm:$0x1]
    %v3412 = vlaneseq
    %v3413 = vshrl.u32 %v3412, 7
    %v3414 = vsub.s32 0, %v3413
    %v3415 = vrot.slane %v3410, %v3414
    %v3418 = vsel %vm290, %v3385, 0
    %3420 = vmatprep.subr.mxu0 0.0
    %3421 = vmatpush1.msra.mxu0 %v3401
    %3422 = vmatprep.subr.mxu0 0.0
    %3423 = vmatpush1.msra.mxu0 %v3400
    %3424 = vmatprep.subr.mxu0 0.0
    %3425 = vmatpush1.msra.mxu0 %v3399
    %3426 = vmatprep.subr.mxu0 0.0
    %3427 = vmatpush1.msra.mxu0 %v3398
    %3428 = vmatprep.subr.mxu0 0.0
    %3429 = vmatpush1.msra.mxu0 %v3397
    %3430 = vmatprep.subr.mxu0 0.0
    %3431 = vmatpush1.msra.mxu0 %v3396
    %3432 = vmatprep.subr.mxu0 0.0
    %3433 = vmatpush1.msra.mxu0 %v3395
    %3434 = vmatprep.subr.mxu0 0.0
    %3435 = vmatpush1.msra.mxu0 %v3394
    %3436 = vmatprep.subr.mxu0 0.0
    %3437 = vmatpush1.msra.mxu0 %v3393
    %3438 = vmatprep.subr.mxu0 0.0
    %3439 = vmatpush1.msra.mxu0 %v3392
    %3440 = vmatprep.subr.mxu0 0.0
    %3441 = vmatpush1.msra.mxu0 %v3391
    %3442 = vmatprep.subr.mxu0 0.0
    %3443 = vmatpush1.msra.mxu0 %v3390
    %3444 = vmatprep.subr.mxu0 0.0
    %3445 = vmatpush1.msra.mxu0 %v3389
    %3446 = vmatprep.subr.mxu0 0.0
    %3447 = vmatpush1.msra.mxu0 %v3388
    %3448 = vmatprep.subr.mxu0 0.0
    %3449 = vmatpush1.msra.mxu0 %v3387
    %3450 = vmatprep.subr.mxu0 0.0
    %3451 = vmatpush1.msra.mxu0 %v3386
    %3452 = vmatprep.subr.mxu0 0.0
    %3453 = vmatpush2.msra.mxu0 0.0
    %3454 = vmatprep.subr.mxu0 0.0
    %3455 = vmatpush2.msra.mxu0 0.0
    %3456 = vmatprep.subr.mxu0 0.0
    %3457 = vmatpush2.msra.mxu0 0.0
    %3458 = vmatprep.subr.mxu0 0.0
    %3459 = vmatpush2.msra.mxu0 0.0
    %3460 = vmatprep.subr.mxu0 0.0
    %3461 = vmatpush2.msra.mxu0 0.0
    %3462 = vmatprep.subr.mxu0 0.0
    %3463 = vmatpush2.msra.mxu0 0.0
    %3464 = vmatprep.subr.mxu0 0.0
    %3465 = vmatpush2.msra.mxu0 0.0
    %3466 = vmatprep.subr.mxu0 0.0
    %3467 = vmatpush2.msra.mxu0 0.0
    %3468 = vmatprep.subr.mxu0 0.0
    %3469 = vmatpush2.msra.mxu0 %v3409
    %3470 = vmatprep.subr.mxu0 0.0
    %3471 = vmatpush2.msra.mxu0 %v3408
    %3472 = vmatprep.subr.mxu0 0.0
    %3473 = vmatpush2.msra.mxu0 %v3407
    %3474 = vmatprep.subr.mxu0 0.0
    %3475 = vmatpush2.msra.mxu0 %v3406
    %3476 = vmatprep.subr.mxu0 0.0
    %3477 = vmatpush2.msra.mxu0 %v3405
    %3478 = vmatprep.subr.mxu0 0.0
    %3479 = vmatpush2.msra.mxu0 %v3404
    %3480 = vmatprep.subr.mxu0 0.0
    %3481 = vmatpush2.msra.mxu0 %v3403
    %3482 = vmatprep.subr.mxu0 0.0
    %3483 = vmatpush2.msra.mxu0 %v3402
    %3484 = vmatprep.mubr.f32.mxu0 %v3418
    %3485 = vmatmul.mubr.f32.gmra.mxu0 %v3384
    %v3486 = vpop.f32.mrf.mxu0
    %v3487 = vadd.f32 %v3415, %v3486
    %v3488 = vpop.f32.mrf.mxu0
    %3489 = vdwg.mxu0
    %vm3490 = vcmask 74752
    %3491 = vst.msk [vmem:[#allocation2] sm:$0x3] %vm3490, %v3487
    // Predicated region
    $region70: #{sqsformer_forward.1} parent=1 // pred_check
      _
    $region71: #{sqsformer_forward.1} parent=1 // pred_check_branch
      %3493 = sbr.rel (0) target = $region73
    $region72: #{sqsformer_forward.1} parent=1 // pred_region
      %s3495 = ssub.s32 32, 32
      %3496 = vsyncadd [#allocation3], %s3495
      %s3498 = sshll.u32 [#allocation2], 4
      %s3499 = int_to_ptr.vmem [resolvable:$true] %s3498
      %3501 = dma.vmem_to_hbm [thread:$0]  %s3499, 32, %s17, [#allocation3]
    $region73: #{sqsformer_forward.1} parent=1 // pred_fallthru
      _
    // Predicated region
    $region74: #{sqsformer_forward.1} parent=1 // pred_check
      _
    $region75: #{sqsformer_forward.1} parent=1 // pred_check_branch
      %3503 = sbr.rel (0) target = $region77
    $region76: #{sqsformer_forward.1} parent=1 // pred_region
      %3504 = dma.done [#allocation3], 32
    $region77: #{sqsformer_forward.1} parent=1 // pred_fallthru
      _
    %3505 = vsyncpa [#allocation3], 1

</llo_original>
